<compile_context>
chip_gen: v7x
topology: tpu7x:2x2x1
jax: 0.10.0
libtpu: 0.0.40
codegen_flags: <defaults>
</compile_context>

<pallas_src>
import math

import numpy as np
import jax
import jax.numpy as jnp
from jax import lax
from jax.experimental import pallas as pl
from jax.experimental.pallas import tpu as pltpu


# --------------------------------- helpers ---------------------------------- #
def _round_up(x, m):
    return (x + m - 1) // m * m


def _cdiv(a, b):
    return (a + b - 1) // b


# -------------------- host-side constants (NumPy, float64) ------------------- #
def hann_window_np(n):
    k = np.arange(n, dtype=np.float64)
    return 0.5 - 0.5 * np.cos(2.0 * np.pi * k / n)          # periodic=True


def hamming_window_np(n):
    k = np.arange(n, dtype=np.float64)
    return 0.54 - 0.46 * np.cos(2.0 * np.pi * k / n)        # periodic=True


def _make_basis_np(n_fft, win_length, K, left, window, norm_scale, n_pad):
    """Windowed, normalized one-sided DFT basis, float64 on the host.

    Returns float32 [K, 2*n_pad] = (win*cos | -win*sin).  Angles are reduced
    modulo n_fft (exact integer mod) before the 2*pi/n_fft scale, so large
    n*f products do not lose precision.
    """
    n_freq = n_fft // 2 + 1
    w = np.zeros((K,), np.float64)
    w[:win_length] = window
    w *= float(norm_scale)
    n_pos = (left + np.arange(K))[:, None]                  # [K, 1] int
    f = np.arange(n_pad)[None, :]                           # [1, n_pad] int
    ang = 2.0 * np.pi * ((n_pos * f) % n_fft).astype(np.float64) / n_fft
    fmask = (np.arange(n_pad) < n_freq)[None, :]
    cos_m = np.where(fmask, np.cos(ang), 0.0) * w[:, None]
    sin_m = np.where(fmask, -np.sin(ang), 0.0) * w[:, None]
    return np.concatenate([cos_m, sin_m], axis=1).astype(np.float32)


# ------------------------------- JAX-side glue ------------------------------- #
def _frame_signal(xp, *, K, hop, left, n_frames):
    """Frame [B, T] -> [B*n_frames, K] with static hop-strided slices (no gather)."""
    B = xp.shape[0]
    x = xp[:, left:]
    kh = _cdiv(K, hop)
    need = (n_frames - 1 + kh) * hop
    if x.shape[1] < need:
        x = jnp.pad(x, ((0, 0), (0, need - x.shape[1])))
    parts = [x[:, j * hop:(j + n_frames) * hop].reshape(B, n_frames, hop)
             for j in range(kh)]
    frames = jnp.concatenate(parts, axis=-1)[:, :, :K]
    return frames.reshape(B * n_frames, K)


def _spec_cfg(**kw):
    return dict(kw)


def _prepare_spec(x, cfg):
    """Pad + frame the signal, build the host basis constant for one spectrogram."""
    n_fft, win, hop = cfg["n_fft"], cfg["win_length"], cfg["hop_length"]
    xp = x.astype(jnp.float32)
    if cfg["pad"] > 0:
        xp = jnp.pad(xp, ((0, 0), (cfg["pad"], cfg["pad"])), mode="constant")
    if cfg["center"]:
        mode = "reflect" if cfg["pad_mode"] == "reflect" else "constant"
        xp = jnp.pad(xp, ((0, 0), (n_fft // 2, n_fft // 2)), mode=mode)

    B, T = xp.shape
    n_frames = 1 + (T - n_fft) // hop
    left = (n_fft - win) // 2                   # torch centers short windows
    K = min(n_fft - left, _round_up(win, 8))    # prune zero-window region

    frames = _frame_signal(xp, K=K, hop=hop, left=left, n_frames=n_frames)

    n_freq = n_fft // 2 + 1                     # always compute one-sided bins
    n_pad = _round_up(n_freq, 128)              # lane-dense output width
    basis = jnp.asarray(                        # trace-time NumPy -> constant
        _make_basis_np(n_fft, win, K, left, cfg["window"], cfg["norm_scale"], n_pad))

    return dict(cfg=cfg, frames=frames, basis=basis, B=B, n_frames=n_frames,
                M=B * n_frames, K=K, n_freq=n_freq, n_pad=n_pad)


# ------------------------------ Pallas kernel -------------------------------- #
def _make_fused_kernel(metas):
    """Kernel computing several spectrograms (sharing one M-tile grid) per step.

    Ref order: [frames_0, basis_0, frames_1, basis_1, ...] then outputs
    (1 ref for power specs, 2 refs (re, im) for complex specs).
    """
    n_in = 2 * len(metas)

    def kernel(*refs):
        in_refs, out_refs = refs[:n_in], refs[n_in:]
        oi = 0
        for si, (npad, power) in enumerate(metas):
            frames = in_refs[2 * si][...]                     # [TM, K]
            basis_ref = in_refs[2 * si + 1]                   # [K, 2*npad]
            # Two Npad-wide MXU passes (cos | sin): avoids the [TM, 2*Npad]
            # slab + slicing, halving live vector state in the epilogue.
            # Kept f32 x f32 (no bf16 cast) so power=2 accuracy matches torch.
            re = jnp.dot(frames, basis_ref[:, :npad],
                         preferred_element_type=jnp.float32)
            im = jnp.dot(frames, basis_ref[:, npad:],
                         preferred_element_type=jnp.float32)
            if power is None:                                 # complex output
                out_refs[oi][...] = re
                out_refs[oi + 1][...] = im
                oi += 2
            else:
                mag2 = re * re + im * im
                out_refs[oi][...] = jnp.sqrt(mag2) if power == 1.0 else mag2
                oi += 1

    return kernel


def fused_spectrograms(x, cfgs):
    """Compute all spectrograms in `cfgs` of signal `x` with ONE pallas_call."""
    preps = [_prepare_spec(x, c) for c in cfgs]

    # Shared M-tile grid: >= 2 steps so v7x's two TensorCores both get work,
    # TM capped at 512 so large inputs keep good MXU shapes within VMEM.
    M_max = max(p["M"] for p in preps)
    G = max(2, _cdiv(M_max, 512))

    in_arrays, in_specs, out_specs, out_shapes, metas = [], [], [], [], []
    for p in preps:
        TM = _round_up(_cdiv(p["M"], G), 8)
        M_pad = TM * G
        p["M_pad"] = M_pad
        frames = p["frames"]
        if M_pad != p["M"]:
            frames = jnp.pad(frames, ((0, M_pad - p["M"]), (0, 0)))
        K, n_pad = p["K"], p["n_pad"]
        in_arrays += [frames, p["basis"]]
        in_specs += [
            pl.BlockSpec((TM, K), lambda i: (i, 0)),          # frames tile
            pl.BlockSpec((K, 2 * n_pad), lambda i: (0, 0)),   # resident basis
        ]
        power = p["cfg"]["power"]
        metas.append((n_pad, None if power is None else float(power)))
        for _ in range(2 if power is None else 1):
            out_specs.append(pl.BlockSpec((TM, n_pad), lambda i: (i, 0)))
            out_shapes.append(jax.ShapeDtypeStruct((M_pad, n_pad), jnp.float32))

    outs = pl.pallas_call(
        _make_fused_kernel(metas),
        grid=(G,),
        in_specs=in_specs,
        out_specs=out_specs,
        out_shape=out_shapes,
        compiler_params=pltpu.CompilerParams(dimension_semantics=("parallel",)),
    )(*in_arrays)

    # ---- post-process: strip padding, complex/mirror, (batch, freq, time) ----
    results, oi = [], 0
    for p in preps:
        cfg, M, n_freq, n_fft = p["cfg"], p["M"], p["n_freq"], p["cfg"]["n_fft"]
        if cfg["power"] is None:
            re = outs[oi][:M, :n_freq]
            im = outs[oi + 1][:M, :n_freq]
            oi += 2
            if not cfg["onesided"]:       # conjugate symmetry for real input
                re = jnp.concatenate([re, re[:, n_fft // 2 - 1:0:-1]], axis=1)
                im = jnp.concatenate([im, -im[:, n_fft // 2 - 1:0:-1]], axis=1)
            res = lax.complex(re, im)
        else:
            res = outs[oi][:M, :n_freq]
            oi += 1
            if not cfg["onesided"]:
                # |X[n_fft - f]|^p == |X[f]|^p for real input: mirror in JAX,
                # kernel only computes the one-sided half (halves MXU work).
                res = jnp.concatenate([res, res[:, n_fft // 2 - 1:0:-1]], axis=1)
        res = res.reshape(p["B"], p["n_frames"], res.shape[-1])
        results.append(jnp.transpose(res, (0, 2, 1)))
    return results


# ------------------------------- model forward ------------------------------- #
def model_forward(x, y):
    w44 = hann_window_np(44)
    # s0: n_fft=64, hann(44), hop=16, center=True(reflect), normalized='window', power=1
    cfg0 = _spec_cfg(n_fft=64, win_length=44, hop_length=16, pad=0, center=True,
                     pad_mode="reflect", onesided=True, window=w44,
                     norm_scale=1.0 / math.sqrt(float(np.sum(w44 * w44))), power=1.0)
    # s1 (torchaudio >= 0.11): n_fft=128, hann(128), hop=3, center=False, power=None
    cfg1 = _spec_cfg(n_fft=128, win_length=128, hop_length=3, pad=0, center=False,
                     pad_mode="reflect", onesided=True, window=hann_window_np(128),
                     norm_scale=1.0, power=None)
    # s2: n_fft=512, hamming(256), hop=128, center=True(constant),
    #     normalized='frame_length', power=2
    cfg2 = _spec_cfg(n_fft=512, win_length=256, hop_length=128, pad=0, center=True,
                     pad_mode="constant", onesided=True, window=hamming_window_np(256),
                     norm_scale=1.0 / math.sqrt(256.0), power=2.0)
    # s3: n_fft=512, hamming(512), hop=128, pad=32, center=True(reflect),
    #     onesided=False, power=2  (computed one-sided + mirrored)
    cfg3 = _spec_cfg(n_fft=512, win_length=512, hop_length=128, pad=32, center=True,
                     pad_mode="reflect", onesided=False, window=hamming_window_np(512),
                     norm_scale=1.0, power=2.0)

    out0, out1 = fused_spectrograms(x, [cfg0, cfg1])   # one pallas_call
    out2, out3 = fused_spectrograms(y, [cfg2, cfg3])   # one pallas_call
    return out0, out1, out2, out3


if __name__ == "__main__":
    key = jax.random.PRNGKey(0)
    kx, ky = jax.random.split(key)
    x = jax.random.normal(kx, (2, 160), dtype=jnp.float32)   # small waveform for s0/s1
    y = jax.random.normal(ky, (2, 300), dtype=jnp.float32)   # small waveform for s2/s3

    fwd = jax.jit(model_forward)
    outs = jax.block_until_ready(fwd(x, y))

    # sanity: expected shapes / dtypes
    assert outs[0].shape == (2, 33, 11) and outs[0].dtype == jnp.float32
    assert outs[1].shape == (2, 65, 11) and outs[1].dtype == jnp.complex64
    assert outs[2].shape == (2, 257, 3) and outs[2].dtype == jnp.float32
    assert outs[3].shape == (2, 512, 3) and outs[3].dtype == jnp.float32
    print("KERNEL_OK")
</pallas_src>

<mosaic_0001>
module attributes {stable_mosaic.version = 11 : i64} {
  func.func @kernel(%arg0: i32, %arg1: memref<16x48xf32, #tpu.memory_space<vmem>>, %arg2: memref<48x256xf32, #tpu.memory_space<vmem>>, %arg3: memref<16x128xf32, #tpu.memory_space<vmem>>, %arg4: memref<128x256xf32, #tpu.memory_space<vmem>>, %arg5: memref<16x128xf32, #tpu.memory_space<vmem>>, %arg6: memref<16x128xf32, #tpu.memory_space<vmem>>, %arg7: memref<16x128xf32, #tpu.memory_space<vmem>>) attributes {dimension_semantics = [#tpu.dimension_semantics<parallel>], iteration_bounds = array<i64: 2>, scalar_prefetch = 0 : i64, scratch_operands = 0 : i64, tpu.core_type = #tpu.core_type<tc>, window_params = [{transform_indices = @transform_0, window_bounds = array<i64: 16, 48>}, {pipeline_mode = #tpu.pipeline_mode<synchronous>, transform_indices = @transform_1, window_bounds = array<i64: 48, 256>}, {transform_indices = @transform_2, window_bounds = array<i64: 16, 128>}, {pipeline_mode = #tpu.pipeline_mode<synchronous>, transform_indices = @transform_3, window_bounds = array<i64: 128, 256>}, {transform_indices = @transform_4, window_bounds = array<i64: 16, 128>}, {transform_indices = @transform_5, window_bounds = array<i64: 16, 128>}, {transform_indices = @transform_6, window_bounds = array<i64: 16, 128>}]} {
    %c0 = arith.constant 0 : index
    %c0_0 = arith.constant 0 : index
    %0 = vector.load %arg1[%c0, %c0_0] : memref<16x48xf32, #tpu.memory_space<vmem>>, vector<16x48xf32>
    %c0_1 = arith.constant 0 : index
    %c0_2 = arith.constant 0 : index
    %1 = vector.load %arg2[%c0_1, %c0_2] : memref<48x256xf32, #tpu.memory_space<vmem>>, vector<48x128xf32>
    %cst = arith.constant dense<0.000000e+00> : vector<16x128xf32>
    %2 = tpu.matmul %0, %1, %cst {dimension_numbers = #tpu.dot_dimension_numbers<[1], [0], [0], [1], [0, 0, 1, 1], [], []>} : vector<16x48xf32>, vector<48x128xf32>, vector<16x128xf32> -> vector<16x128xf32>
    %c0_3 = arith.constant 0 : index
    %c128 = arith.constant 128 : index
    %3 = vector.load %arg2[%c0_3, %c128] : memref<48x256xf32, #tpu.memory_space<vmem>>, vector<48x128xf32>
    %cst_4 = arith.constant dense<0.000000e+00> : vector<16x128xf32>
    %4 = tpu.matmul %0, %3, %cst_4 {dimension_numbers = #tpu.dot_dimension_numbers<[1], [0], [0], [1], [0, 0, 1, 1], [], []>} : vector<16x48xf32>, vector<48x128xf32>, vector<16x128xf32> -> vector<16x128xf32>
    %5 = arith.mulf %2, %2 : vector<16x128xf32>
    %6 = arith.mulf %4, %4 : vector<16x128xf32>
    %7 = arith.addf %5, %6 : vector<16x128xf32>
    %8 = math.sqrt %7 : vector<16x128xf32>
    %c0_5 = arith.constant 0 : index
    %c0_6 = arith.constant 0 : index
    %9 = vector.load %arg5[%c0_5, %c0_6] : memref<16x128xf32, #tpu.memory_space<vmem>>, vector<16x128xf32>
    tpu.vector_store %arg5[%c0_5, %c0_6], %8 {strides = array<i32>} : memref<16x128xf32, #tpu.memory_space<vmem>>, vector<16x128xf32>,
    %c0_7 = arith.constant 0 : index
    %c0_8 = arith.constant 0 : index
    %10 = vector.load %arg3[%c0_7, %c0_8] : memref<16x128xf32, #tpu.memory_space<vmem>>, vector<16x128xf32>
    %c0_9 = arith.constant 0 : index
    %c0_10 = arith.constant 0 : index
    %11 = vector.load %arg4[%c0_9, %c0_10] : memref<128x256xf32, #tpu.memory_space<vmem>>, vector<128x128xf32>
    %cst_11 = arith.constant dense<0.000000e+00> : vector<16x128xf32>
    %12 = tpu.matmul %10, %11, %cst_11 {dimension_numbers = #tpu.dot_dimension_numbers<[1], [0], [0], [1], [0, 0, 1, 1], [], []>} : vector<16x128xf32>, vector<128x128xf32>, vector<16x128xf32> -> vector<16x128xf32>
    %c0_12 = arith.constant 0 : index
    %c128_13 = arith.constant 128 : index
    %13 = vector.load %arg4[%c0_12, %c128_13] : memref<128x256xf32, #tpu.memory_space<vmem>>, vector<128x128xf32>
    %cst_14 = arith.constant dense<0.000000e+00> : vector<16x128xf32>
    %14 = tpu.matmul %10, %13, %cst_14 {dimension_numbers = #tpu.dot_dimension_numbers<[1], [0], [0], [1], [0, 0, 1, 1], [], []>} : vector<16x128xf32>, vector<128x128xf32>, vector<16x128xf32> -> vector<16x128xf32>
    %c0_15 = arith.constant 0 : index
    %c0_16 = arith.constant 0 : index
    %15 = vector.load %arg6[%c0_15, %c0_16] : memref<16x128xf32, #tpu.memory_space<vmem>>, vector<16x128xf32>
    tpu.vector_store %arg6[%c0_15, %c0_16], %12 {strides = array<i32>} : memref<16x128xf32, #tpu.memory_space<vmem>>, vector<16x128xf32>,
    %c0_17 = arith.constant 0 : index
    %c0_18 = arith.constant 0 : index
    %16 = vector.load %arg7[%c0_17, %c0_18] : memref<16x128xf32, #tpu.memory_space<vmem>>, vector<16x128xf32>
    tpu.vector_store %arg7[%c0_17, %c0_18], %14 {strides = array<i32>} : memref<16x128xf32, #tpu.memory_space<vmem>>, vector<16x128xf32>,
    return
  }
  func.func @transform_0(%arg0: i32) -> (i32, i32) {
    %c0_i32 = arith.constant 0 : i32
    %c0_i32_0 = arith.constant 0 : i32
    return %arg0, %c0_i32 : i32, i32
  }
  func.func @transform_1(%arg0: i32) -> (i32, i32) {
    %c0_i32 = arith.constant 0 : i32
    %c0_i32_0 = arith.constant 0 : i32
    %c0_i32_1 = arith.constant 0 : i32
    return %c0_i32, %c0_i32_0 : i32, i32
  }
  func.func @transform_2(%arg0: i32) -> (i32, i32) {
    %c0_i32 = arith.constant 0 : i32
    %c0_i32_0 = arith.constant 0 : i32
    return %arg0, %c0_i32 : i32, i32
  }
  func.func @transform_3(%arg0: i32) -> (i32, i32) {
    %c0_i32 = arith.constant 0 : i32
    %c0_i32_0 = arith.constant 0 : i32
    %c0_i32_1 = arith.constant 0 : i32
    return %c0_i32, %c0_i32_0 : i32, i32
  }
  func.func @transform_4(%arg0: i32) -> (i32, i32) {
    %c0_i32 = arith.constant 0 : i32
    %c0_i32_0 = arith.constant 0 : i32
    return %arg0, %c0_i32 : i32, i32
  }
  func.func @transform_5(%arg0: i32) -> (i32, i32) {
    %c0_i32 = arith.constant 0 : i32
    %c0_i32_0 = arith.constant 0 : i32
    return %arg0, %c0_i32 : i32, i32
  }
  func.func @transform_6(%arg0: i32) -> (i32, i32) {
    %c0_i32 = arith.constant 0 : i32
    %c0_i32_0 = arith.constant 0 : i32
    return %arg0, %c0_i32 : i32, i32
  }
}

module attributes {stable_mosaic.version = 11 : i64} {
  func.func @kernel(%arg0: i32, %arg1: memref<8x256xf32, #tpu.memory_space<vmem>>, %arg2: memref<256x768xf32, #tpu.memory_space<vmem>>, %arg3: memref<8x512xf32, #tpu.memory_space<vmem>>, %arg4: memref<512x768xf32, #tpu.memory_space<vmem>>, %arg5: memref<8x384xf32, #tpu.memory_space<vmem>>, %arg6: memref<8x384xf32, #tpu.memory_space<vmem>>) attributes {dimension_semantics = [#tpu.dimension_semantics<parallel>], iteration_bounds = array<i64: 2>, scalar_prefetch = 0 : i64, scratch_operands = 0 : i64, tpu.core_type = #tpu.core_type<tc>, window_params = [{transform_indices = @transform_0, window_bounds = array<i64: 8, 256>}, {pipeline_mode = #tpu.pipeline_mode<synchronous>, transform_indices = @transform_1, window_bounds = array<i64: 256, 768>}, {transform_indices = @transform_2, window_bounds = array<i64: 8, 512>}, {pipeline_mode = #tpu.pipeline_mode<synchronous>, transform_indices = @transform_3, window_bounds = array<i64: 512, 768>}, {transform_indices = @transform_4, window_bounds = array<i64: 8, 384>}, {transform_indices = @transform_5, window_bounds = array<i64: 8, 384>}]} {
    %c0 = arith.constant 0 : index
    %c0_0 = arith.constant 0 : index
    %0 = vector.load %arg1[%c0, %c0_0] : memref<8x256xf32, #tpu.memory_space<vmem>>, vector<8x256xf32>
    %c0_1 = arith.constant 0 : index
    %c0_2 = arith.constant 0 : index
    %1 = vector.load %arg2[%c0_1, %c0_2] : memref<256x768xf32, #tpu.memory_space<vmem>>, vector<256x384xf32>
    %cst = arith.constant dense<0.000000e+00> : vector<8x384xf32>
    %2 = tpu.matmul %0, %1, %cst {dimension_numbers = #tpu.dot_dimension_numbers<[1], [0], [0], [1], [0, 0, 1, 1], [], []>} : vector<8x256xf32>, vector<256x384xf32>, vector<8x384xf32> -> vector<8x384xf32>
    %c0_3 = arith.constant 0 : index
    %c384 = arith.constant 384 : index
    %3 = vector.load %arg2[%c0_3, %c384] : memref<256x768xf32, #tpu.memory_space<vmem>>, vector<256x384xf32>
    %cst_4 = arith.constant dense<0.000000e+00> : vector<8x384xf32>
    %4 = tpu.matmul %0, %3, %cst_4 {dimension_numbers = #tpu.dot_dimension_numbers<[1], [0], [0], [1], [0, 0, 1, 1], [], []>} : vector<8x256xf32>, vector<256x384xf32>, vector<8x384xf32> -> vector<8x384xf32>
    %5 = arith.mulf %2, %2 : vector<8x384xf32>
    %6 = arith.mulf %4, %4 : vector<8x384xf32>
    %7 = arith.addf %5, %6 : vector<8x384xf32>
    %c0_5 = arith.constant 0 : index
    %c0_6 = arith.constant 0 : index
    %8 = vector.load %arg5[%c0_5, %c0_6] : memref<8x384xf32, #tpu.memory_space<vmem>>, vector<8x384xf32>
    tpu.vector_store %arg5[%c0_5, %c0_6], %7 {strides = array<i32>} : memref<8x384xf32, #tpu.memory_space<vmem>>, vector<8x384xf32>,
    %c0_7 = arith.constant 0 : index
    %c0_8 = arith.constant 0 : index
    %9 = vector.load %arg3[%c0_7, %c0_8] : memref<8x512xf32, #tpu.memory_space<vmem>>, vector<8x512xf32>
    %c0_9 = arith.constant 0 : index
    %c0_10 = arith.constant 0 : index
    %10 = vector.load %arg4[%c0_9, %c0_10] : memref<512x768xf32, #tpu.memory_space<vmem>>, vector<512x384xf32>
    %cst_11 = arith.constant dense<0.000000e+00> : vector<8x384xf32>
    %11 = tpu.matmul %9, %10, %cst_11 {dimension_numbers = #tpu.dot_dimension_numbers<[1], [0], [0], [1], [0, 0, 1, 1], [], []>} : vector<8x512xf32>, vector<512x384xf32>, vector<8x384xf32> -> vector<8x384xf32>
    %c0_12 = arith.constant 0 : index
    %c384_13 = arith.constant 384 : index
    %12 = vector.load %arg4[%c0_12, %c384_13] : memref<512x768xf32, #tpu.memory_space<vmem>>, vector<512x384xf32>
    %cst_14 = arith.constant dense<0.000000e+00> : vector<8x384xf32>
    %13 = tpu.matmul %9, %12, %cst_14 {dimension_numbers = #tpu.dot_dimension_numbers<[1], [0], [0], [1], [0, 0, 1, 1], [], []>} : vector<8x512xf32>, vector<512x384xf32>, vector<8x384xf32> -> vector<8x384xf32>
    %14 = arith.mulf %11, %11 : vector<8x384xf32>
    %15 = arith.mulf %13, %13 : vector<8x384xf32>
    %16 = arith.addf %14, %15 : vector<8x384xf32>
    %c0_15 = arith.constant 0 : index
    %c0_16 = arith.constant 0 : index
    %17 = vector.load %arg6[%c0_15, %c0_16] : memref<8x384xf32, #tpu.memory_space<vmem>>, vector<8x384xf32>
    tpu.vector_store %arg6[%c0_15, %c0_16], %16 {strides = array<i32>} : memref<8x384xf32, #tpu.memory_space<vmem>>, vector<8x384xf32>,
    return
  }
  func.func @transform_0(%arg0: i32) -> (i32, i32) {
    %c0_i32 = arith.constant 0 : i32
    %c0_i32_0 = arith.constant 0 : i32
    return %arg0, %c0_i32 : i32, i32
  }
  func.func @transform_1(%arg0: i32) -> (i32, i32) {
    %c0_i32 = arith.constant 0 : i32
    %c0_i32_0 = arith.constant 0 : i32
    %c0_i32_1 = arith.constant 0 : i32
    return %c0_i32, %c0_i32_0 : i32, i32
  }
  func.func @transform_2(%arg0: i32) -> (i32, i32) {
    %c0_i32 = arith.constant 0 : i32
    %c0_i32_0 = arith.constant 0 : i32
    return %arg0, %c0_i32 : i32, i32
  }
  func.func @transform_3(%arg0: i32) -> (i32, i32) {
    %c0_i32 = arith.constant 0 : i32
    %c0_i32_0 = arith.constant 0 : i32
    %c0_i32_1 = arith.constant 0 : i32
    return %c0_i32, %c0_i32_0 : i32, i32
  }
  func.func @transform_4(%arg0: i32) -> (i32, i32) {
    %c0_i32 = arith.constant 0 : i32
    %c0_i32_0 = arith.constant 0 : i32
    return %arg0, %c0_i32 : i32, i32
  }
  func.func @transform_5(%arg0: i32) -> (i32, i32) {
    %c0_i32 = arith.constant 0 : i32
    %c0_i32_0 = arith.constant 0 : i32
    return %arg0, %c0_i32 : i32, i32
  }
}

</mosaic_0001>

<llo_original>
// kernel: custom-call
$region0: #{custom-call}
  %s0 = inlined_call_operand.vmem [shape: f32[2,65,11], index: 0, kind: input, shape index: {}]
  %s1 = inlined_call_operand.vmem [shape: f32[2,65,11], index: 1, kind: input, shape index: {}]
  %s2 = inlined_call_operand.vmem [shape: c64[2,65,11], index: 2, kind: output, shape index: {}]
  %s4 = scalar_lea.vmem %s2, 32
  %v5 = vld [vmem:[%s0] sm:$0xff]
  %6 = vst [vmem:[%s2] sm:$0xff] %v5
  %s7 = scalar_lea.vmem %s2, 8
  %s8 = scalar_lea.vmem %s0, 8
  %v9 = vld [vmem:[%s8] sm:$0xff]
  %10 = vst [vmem:[%s7] sm:$0xff] %v9
  %s11 = scalar_lea.vmem %s2, 16
  %s12 = scalar_lea.vmem %s0, 16
  %v13 = vld [vmem:[%s12] sm:$0xff]
  %14 = vst [vmem:[%s11] sm:$0xff] %v13
  %s15 = scalar_lea.vmem %s2, 24
  %s16 = scalar_lea.vmem %s0, 24
  %v17 = vld [vmem:[%s16] sm:$0xff]
  %18 = vst [vmem:[%s15] sm:$0xff] %v17
  %v19 = vld [vmem:[%s1] sm:$0xff]
  %20 = vst [vmem:[%s4] sm:$0xff] %v19
  %s21 = scalar_lea.vmem %s4, 8
  %s22 = scalar_lea.vmem %s1, 8
  %v23 = vld [vmem:[%s22] sm:$0xff]
  %24 = vst [vmem:[%s21] sm:$0xff] %v23
  %s25 = scalar_lea.vmem %s4, 16
  %s26 = scalar_lea.vmem %s1, 16
  %v27 = vld [vmem:[%s26] sm:$0xff]
  %28 = vst [vmem:[%s25] sm:$0xff] %v27
  %s29 = scalar_lea.vmem %s4, 24
  %s30 = scalar_lea.vmem %s1, 24
  %v31 = vld [vmem:[%s30] sm:$0xff]
  %32 = vst [vmem:[%s29] sm:$0xff] %v31

// kernel: reverse
$region0: #{reverse}
  %s0 = inlined_call_operand.vmem [shape: f32[6,256], index: 0, kind: input, shape index: {}]
  %s1 = inlined_call_operand.vmem [shape: f32[6,256], index: 1, kind: output, shape index: {}]
  %v2 = vlaneseq
  %v3 = vsub.s32 127, %v2
  %4 = vset.pattern.permute.xlu0 %v3
  $region1: #{reverse} parent=0
    #allocation0 [shape = 'u8[8192]{0}', space=vmem, size = 0x2000, scoped, tag = 'operand span for operand 0']
    #allocation1 [shape = 'u8[8192]{0}', space=vmem, size = 0x2000, scoped, tag = 'operand span for operand 1']
    loop: start=0, step=1, limit=4
    $region2: #{reverse} parent=1 // loop_pre_header
      _
    $region3: #{reverse} parent=1 // loop_header
      %s6 = sphi 0, %s10
      %p7 = scmp.ge.s32.totalorder %s6, 4
      %s13 = sphi 0, %s25
      %s14 = sphi 0, %s21
      %s15 = sphi 0, %s13
      %s16 = sphi 0, %s14
      %s17 = sphi 0, %s15
      %s18 = sphi 0, %s16
    $region4: #{reverse} parent=1 // loop_header_branch
      %9 = sbr.rel (%p7) target = $region8
    $region5: #{reverse} parent=1 // loop_body
      %s11 = ssub.s32 %s6, 1
      %s12 = ssub.s32 %s6, 2
      %s19 = sadd.s32 1, %s14
      %p20 = scmp.ge.s32.totalorder %s19, 2
      %s21 = scalar_select %p20, 0, %s19
      %s22 = sadd.s32 1, %s13
      %s23 = scalar_select %p20, %s22, %s13
      %p24 = scmp.ge.s32.totalorder %s23, 1
      %s25 = scalar_select %p24, 0, %s23
      %p26 = scmp.le.s32.totalorder 1, %s6
      %p27 = scmp.lt.s32.totalorder %s6, 3
      %p28 = pnand %p26, %p27
      %p29 = pneg %p28
      // Predicated region
      $region9: #{reverse} parent=5 // pred_check
        _
      $region10: #{reverse} parent=5 // pred_check_branch
        %31 = sbr.rel (%p28) target = $region12
      $region11: #{reverse} parent=5 // pred_region
        %s32 = ssub.s32 %s6, 1
      $region12: #{reverse} parent=5 // pred_fallthru
        _
      %p33 = scmp.lt.s32.totalorder %s6, 2
      // Predicated region
      $region13: #{reverse} parent=5 // pred_check
        %p34 = pneg %p33
      $region14: #{reverse} parent=5 // pred_check_branch
        %36 = sbr.rel (%p34) target = $region16
      $region15: #{reverse} parent=5 // pred_region
        %s37 = sand.u32 %s6, 1
        %s38 = sand.u32 %s6, 1
        %s39 = smul.addr %s38, 8
        %s40 = scalar_lea.vmem [#allocation0], %s39
        %s41 = ssub.s32 1, %s14
        %s42 = smul.addr %s13, 2
        %s43 = sadd.s32 %s41, %s42
        %s44 = smul.addr %s43, 8
        %s45 = scalar_lea.vmem %s0, %s44
        // Predicated region
        $region17: #{reverse} parent=15 // pred_check
          _
        $region18: #{reverse} parent=15 // pred_check_branch
          %47 = sbr.rel (0) target = $region20
        $region19: #{reverse} parent=15 // pred_region
          // Predicated region
          $region21: #{reverse} parent=19 // pred_check
            _
          $region22: #{reverse} parent=19 // pred_check_branch
            %49 = sbr.rel (0) target = $region24
          $region23: #{reverse} parent=19 // pred_region
            // Predicated region
            $region36: #{reverse} parent=23 // pred_check
              _
            $region37: #{reverse} parent=23 // pred_check_branch
              %64 = sbr.rel (0) target = $region39
            $region38: #{reverse} parent=23 // pred_region
              loop: start=0, step=1, limit=1
              $region40: #{reverse} parent=38 // loop_pre_header
                _
              $region41: #{reverse} parent=38 // loop_header
                %s66 = sphi 0, %s70
                %p67 = scmp.ge.s32.totalorder %s66, 1
                %s71 = sphi %s45, %s45
                %s72 = sphi %s40, %s40
              $region42: #{reverse} parent=38 // loop_header_branch
                %69 = sbr.rel (%p67) target = $region46
              $region43: #{reverse} parent=38 // loop_body
                %v73 = vld [vmem:[%s71] sm:$0xff]
                %74 = vst [vmem:[%s72] sm:$0xff] %v73
              $region44: #{reverse} parent=38 // loop_footer
                %s70 = sadd.s32 1, %s66
              $region45: #{reverse} parent=38 // loop_footer_branch
                %65 = sbr.rel target = $region41
              $region46: #{reverse} parent=38 // loop_exit
                _
            $region39: #{reverse} parent=23 // pred_fallthru
              _
            // Predicated region
            $region47: #{reverse} parent=23 // pred_check
              _
            $region48: #{reverse} parent=23 // pred_check_branch
              %76 = sbr.rel target = $region50
            $region49: #{reverse} parent=23 // pred_region
              _
            $region50: #{reverse} parent=23 // pred_fallthru
              _
          $region24: #{reverse} parent=19 // pred_fallthru
            _
          // Predicated region
          $region25: #{reverse} parent=19 // pred_check
            _
          $region26: #{reverse} parent=19 // pred_check_branch
            %51 = sbr.rel target = $region28
          $region27: #{reverse} parent=19 // pred_region
            loop: start=0, step=1, limit=1
            $region29: #{reverse} parent=27 // loop_pre_header
              _
            $region30: #{reverse} parent=27 // loop_header
              %s54 = sphi 0, %s58
              %p55 = scmp.ge.s32.totalorder %s54, 1
              %s59 = sphi %s45, %s45
              %s60 = sphi %s40, %s40
            $region31: #{reverse} parent=27 // loop_header_branch
              %57 = sbr.rel (%p55) target = $region35
            $region32: #{reverse} parent=27 // loop_body
              %v61 = vld [vmem:[%s59] sm:$0xff]
              %62 = vst [vmem:[%s60] sm:$0xff] %v61
            $region33: #{reverse} parent=27 // loop_footer
              %s58 = sadd.s32 1, %s54
            $region34: #{reverse} parent=27 // loop_footer_branch
              %53 = sbr.rel target = $region30
            $region35: #{reverse} parent=27 // loop_exit
              _
          $region28: #{reverse} parent=19 // pred_fallthru
            _
        $region20: #{reverse} parent=15 // pred_fallthru
          _
        %77 = vnop
      $region16: #{reverse} parent=5 // pred_fallthru
        _
      %p78 = scmp.le.s32.totalorder 1, %s6
      %p79 = scmp.lt.s32.totalorder %s6, 3
      %p80 = pnand %p78, %p79
      %p81 = pneg %p80
      // Predicated region
      $region51: #{reverse} parent=5 // pred_check
        _
      $region52: #{reverse} parent=5 // pred_check_branch
        %83 = sbr.rel (%p80) target = $region54
      $region53: #{reverse} parent=5 // pred_region
        %s84 = ssub.s32 %s6, 1
        %s85 = sand.u32 %s11, 1
        %s86 = sand.u32 %s11, 1
        %s87 = smul.addr %s86, 8
        %s88 = scalar_lea.vmem [#allocation0], %s87
        %s89 = sand.u32 %s11, 1
        %s90 = sand.u32 %s11, 1
        %s91 = smul.addr %s90, 8
        %s92 = scalar_lea.vmem [#allocation0], %s91
        %s93 = sand.u32 %s11, 1
        %s94 = sand.u32 %s11, 1
        %s95 = smul.addr %s94, 8
        %s96 = scalar_lea.vmem [#allocation1], %s95
        %s97 = ssub.s32 1, %s16
        %v98 = vld [vmem:[%s88] sm:$0xff]
        %99 = vperm.xlu0 %4, %v98
        %v100 = vpop.permute.xlu0 %99
        %101 = vst [vmem:[%s96] sm:$0xff] %v100
        %s102 = sand.u32 %s11, 1
        %s103 = sand.u32 %s11, 1
        %s104 = smul.addr %s103, 8
        %s105 = scalar_lea.vmem [#allocation1], %s104
        %s106 = smul.addr %s15, 2
        %s107 = sadd.s32 %s16, %s106
        %s108 = smul.addr %s107, 8
        %s109 = scalar_lea.vmem %s1, %s108
        // Predicated region
        $region55: #{reverse} parent=53 // pred_check
          _
        $region56: #{reverse} parent=53 // pred_check_branch
          %111 = sbr.rel (0) target = $region58
        $region57: #{reverse} parent=53 // pred_region
          // Predicated region
          $region59: #{reverse} parent=57 // pred_check
            _
          $region60: #{reverse} parent=57 // pred_check_branch
            %113 = sbr.rel (0) target = $region62
          $region61: #{reverse} parent=57 // pred_region
            // Predicated region
            $region74: #{reverse} parent=61 // pred_check
              _
            $region75: #{reverse} parent=61 // pred_check_branch
              %128 = sbr.rel (0) target = $region77
            $region76: #{reverse} parent=61 // pred_region
              loop: start=0, step=1, limit=1
              $region78: #{reverse} parent=76 // loop_pre_header
                _
              $region79: #{reverse} parent=76 // loop_header
                %s130 = sphi 0, %s134
                %p131 = scmp.ge.s32.totalorder %s130, 1
                %s135 = sphi %s105, %s105
                %s136 = sphi %s109, %s109
              $region80: #{reverse} parent=76 // loop_header_branch
                %133 = sbr.rel (%p131) target = $region84
              $region81: #{reverse} parent=76 // loop_body
                %v137 = vld [vmem:[%s135] sm:$0xff]
                %138 = vst [vmem:[%s136] sm:$0xff] %v137
              $region82: #{reverse} parent=76 // loop_footer
                %s134 = sadd.s32 1, %s130
              $region83: #{reverse} parent=76 // loop_footer_branch
                %129 = sbr.rel target = $region79
              $region84: #{reverse} parent=76 // loop_exit
                _
            $region77: #{reverse} parent=61 // pred_fallthru
              _
            // Predicated region
            $region85: #{reverse} parent=61 // pred_check
              _
            $region86: #{reverse} parent=61 // pred_check_branch
              %140 = sbr.rel target = $region88
            $region87: #{reverse} parent=61 // pred_region
              _
            $region88: #{reverse} parent=61 // pred_fallthru
              _
          $region62: #{reverse} parent=57 // pred_fallthru
            _
          // Predicated region
          $region63: #{reverse} parent=57 // pred_check
            _
          $region64: #{reverse} parent=57 // pred_check_branch
            %115 = sbr.rel target = $region66
          $region65: #{reverse} parent=57 // pred_region
            loop: start=0, step=1, limit=1
            $region67: #{reverse} parent=65 // loop_pre_header
              _
            $region68: #{reverse} parent=65 // loop_header
              %s118 = sphi 0, %s122
              %p119 = scmp.ge.s32.totalorder %s118, 1
              %s123 = sphi %s105, %s105
              %s124 = sphi %s109, %s109
            $region69: #{reverse} parent=65 // loop_header_branch
              %121 = sbr.rel (%p119) target = $region73
            $region70: #{reverse} parent=65 // loop_body
              %v125 = vld [vmem:[%s123] sm:$0xff]
              %126 = vst [vmem:[%s124] sm:$0xff] %v125
            $region71: #{reverse} parent=65 // loop_footer
              %s122 = sadd.s32 1, %s118
            $region72: #{reverse} parent=65 // loop_footer_branch
              %117 = sbr.rel target = $region68
            $region73: #{reverse} parent=65 // loop_exit
              _
          $region66: #{reverse} parent=57 // pred_fallthru
            _
        $region58: #{reverse} parent=53 // pred_fallthru
          _
        %141 = vnop
      $region54: #{reverse} parent=5 // pred_fallthru
        _
      %p142 = scmp.le.s32.totalorder 2, %s6
      // Predicated region
      $region89: #{reverse} parent=5 // pred_check
        %p143 = pneg %p142
      $region90: #{reverse} parent=5 // pred_check_branch
        %145 = sbr.rel (%p143) target = $region92
      $region91: #{reverse} parent=5 // pred_region
        %s146 = ssub.s32 %s6, 2
        %s147 = sand.u32 %s12, 1
        %s148 = sand.u32 %s12, 1
        %s149 = smul.addr %s148, 8
        %s150 = scalar_lea.vmem [#allocation1], %s149
      $region92: #{reverse} parent=5 // pred_fallthru
        _
    $region6: #{reverse} parent=1 // loop_footer
      %s10 = sadd.s32 1, %s6
    $region7: #{reverse} parent=1 // loop_footer_branch
      %5 = sbr.rel target = $region3
    $region8: #{reverse} parent=1 // loop_exit
      _

// kernel: model_forward.2
$region0: #{model_forward.2}
  #allocation0 [shape = 'u32[]', space=smem, size = 0x4, offset = 0x4, fixed_abs, tag = 'smem constant byte address 0x4 - core index']
  #allocation1 [shape = 'u32[144,128]{1,0:T(1,128)}', space=vmem, size = 0x12000, scoped, tag = 'internal scratch']
  %s0 = inlined_call_operand.vmem [shape: f32[32,48], index: 0, kind: input, shape index: {}]
  %s1 = inlined_call_operand.hbm [shape: f32[48,256], index: 1, kind: input, shape index: {}]
  %s2 = inlined_call_operand.vmem [shape: f32[32,128], index: 2, kind: input, shape index: {}]
  %s3 = inlined_call_operand.vmem [shape: f32[128,256], index: 3, kind: input, shape index: {}]
  %s4 = inlined_call_operand.vmem [shape: f32[32,128], index: 4, kind: output, shape index: {0}]
  %s5 = inlined_call_operand.vmem [shape: f32[32,128], index: 5, kind: output, shape index: {1}]
  %s6 = inlined_call_operand.vmem [shape: f32[32,128], index: 6, kind: output, shape index: {2}]
  %7 = xla_tuple %s4, %s5, %s6
  %s8 = sld [smem:[#allocation0]]
  $region69: #{model_forward.2} parent=0
    _
  %s10 = ssub.s32 1, %s8
  %s11 = scalar_select 0, %s10, %s8
  $region1: #{model_forward.2} parent=0
    #allocation2 [shape = 'u8[49152]{0}', space=vmem, size = 0xc000, scoped, tag = 'input window, operand 1, single buffered']
    #allocation3 [shape = 's32[2]{0}', space=sflag, size = 0x8, scoped, tag = 'scoped memory for model_forward.2']
    %12 = vsyncpa [#allocation3], 0
    loop: start=0, step=1, limit=4
    $region2: #{model_forward.2} parent=1 // loop_pre_header
      _
    $region3: #{model_forward.2} parent=1 // loop_header
      %s14 = sphi 0, %s18
      %p15 = scmp.ge.s32.totalorder %s14, 4
      %s24 = sphi 0, %s26
      %s27 = sphi 0, %s24
      %s28 = sphi 0, %s27
      %s44 = sphi 0, %s28
      %s48 = sphi 0, %s48
      %s50 = sphi 0, %s48
      %s51 = sphi 0, %s50
      %s65 = sphi 0, %s51
      %s71 = sphi 0, %s73
      %s74 = sphi 0, %s71
      %s75 = sphi 0, %s74
      %s91 = sphi 0, %s75
      %s95 = sphi 0, %s95
      %s97 = sphi 0, %s95
      %s98 = sphi 0, %s97
      %s112 = sphi 0, %s98
      %s118 = sphi 0, %s120
      %s121 = sphi 0, %s118
      %s122 = sphi 0, %s121
      %s138 = sphi 0, %s122
      %s144 = sphi 0, %s146
      %s147 = sphi 0, %s144
      %s148 = sphi 0, %s147
      %s164 = sphi 0, %s148
      %s170 = sphi 0, %s172
      %s173 = sphi 0, %s170
      %s174 = sphi 0, %s173
      %s190 = sphi 0, %s174
    $region4: #{model_forward.2} parent=1 // loop_header_branch
      %17 = sbr.rel (%p15) target = $region8
    $region5: #{model_forward.2} parent=1 // loop_body
      %s19 = ssub.s32 %s14, 1
      %s20 = ssub.s32 %s14, 2
      %s21 = sadd.s32 %s14, 1
      %s22 = ssub.s32 %s14, %s21
      %p23 = scmp.eq.s32.totalorder %s22, 0
      %s25 = sadd.s32 %s24, 1
      %s26 = scalar_select %p23, %s24, %s25
      %p29 = pneg %p23
      %p30 = scmp.eq.s32.totalorder %s14, 1
      %p31 = por %p29, %p30
      %p32 = scmp.ne.s32.totalorder %s24, %s27
      %p33 = scmp.eq.s32.totalorder %s14, 0
      %p34 = por %p32, %p33
      %p35 = scmp.ne.s32.totalorder %s24, %s27
      %p36 = scmp.eq.s32.totalorder %s19, 1
      %p37 = por %p35, %p36
      %p38 = scmp.ne.s32.totalorder %s27, %s28
      %p39 = scmp.eq.s32.totalorder %s19, 0
      %p40 = por %p38, %p39
      %p41 = scmp.ne.s32.totalorder %s27, %s28
      %p42 = scmp.eq.s32.totalorder %s20, 1
      %p43 = por %p41, %p42
      %p45 = scmp.ne.s32.totalorder %s28, %s44
      %p46 = scmp.eq.s32.totalorder %s20, 0
      %p47 = por %p45, %p46
      %s49 = sadd.s32 %s48, 1
      %p52 = scmp.eq.s32.totalorder %s14, 1
      %p53 = scmp.ne.s32.totalorder %s48, %s50
      %p54 = scmp.eq.s32.totalorder %s14, 0
      %p55 = por %p53, %p54
      %p56 = scmp.ne.s32.totalorder %s48, %s50
      %p57 = scmp.eq.s32.totalorder %s19, 1
      %p58 = por %p56, %p57
      %p59 = scmp.ne.s32.totalorder %s50, %s51
      %p60 = scmp.eq.s32.totalorder %s19, 0
      %p61 = por %p59, %p60
      %p62 = scmp.ne.s32.totalorder %s50, %s51
      %p63 = scmp.eq.s32.totalorder %s20, 1
      %p64 = por %p62, %p63
      %p66 = scmp.ne.s32.totalorder %s51, %s65
      %p67 = scmp.eq.s32.totalorder %s20, 0
      %p68 = por %p66, %p67
      %s69 = ssub.s32 %s14, %s21
      %p70 = scmp.eq.s32.totalorder %s69, 0
      %s72 = sadd.s32 %s71, 1
      %s73 = scalar_select %p70, %s71, %s72
      %p76 = pneg %p70
      %p77 = scmp.eq.s32.totalorder %s14, 1
      %p78 = por %p76, %p77
      %p79 = scmp.ne.s32.totalorder %s71, %s74
      %p80 = scmp.eq.s32.totalorder %s14, 0
      %p81 = por %p79, %p80
      %p82 = scmp.ne.s32.totalorder %s71, %s74
      %p83 = scmp.eq.s32.totalorder %s19, 1
      %p84 = por %p82, %p83
      %p85 = scmp.ne.s32.totalorder %s74, %s75
      %p86 = scmp.eq.s32.totalorder %s19, 0
      %p87 = por %p85, %p86
      %p88 = scmp.ne.s32.totalorder %s74, %s75
      %p89 = scmp.eq.s32.totalorder %s20, 1
      %p90 = por %p88, %p89
      %p92 = scmp.ne.s32.totalorder %s75, %s91
      %p93 = scmp.eq.s32.totalorder %s20, 0
      %p94 = por %p92, %p93
      %s96 = sadd.s32 %s95, 1
      %p99 = scmp.eq.s32.totalorder %s14, 1
      %p100 = scmp.ne.s32.totalorder %s95, %s97
      %p101 = scmp.eq.s32.totalorder %s14, 0
      %p102 = por %p100, %p101
      %p103 = scmp.ne.s32.totalorder %s95, %s97
      %p104 = scmp.eq.s32.totalorder %s19, 1
      %p105 = por %p103, %p104
      %p106 = scmp.ne.s32.totalorder %s97, %s98
      %p107 = scmp.eq.s32.totalorder %s19, 0
      %p108 = por %p106, %p107
      %p109 = scmp.ne.s32.totalorder %s97, %s98
      %p110 = scmp.eq.s32.totalorder %s20, 1
      %p111 = por %p109, %p110
      %p113 = scmp.ne.s32.totalorder %s98, %s112
      %p114 = scmp.eq.s32.totalorder %s20, 0
      %p115 = por %p113, %p114
      %s116 = ssub.s32 %s14, %s21
      %p117 = scmp.eq.s32.totalorder %s116, 0
      %s119 = sadd.s32 %s118, 1
      %s120 = scalar_select %p117, %s118, %s119
      %p123 = pneg %p117
      %p124 = scmp.eq.s32.totalorder %s14, 1
      %p125 = por %p123, %p124
      %p126 = scmp.ne.s32.totalorder %s118, %s121
      %p127 = scmp.eq.s32.totalorder %s14, 0
      %p128 = por %p126, %p127
      %p129 = scmp.ne.s32.totalorder %s118, %s121
      %p130 = scmp.eq.s32.totalorder %s19, 1
      %p131 = por %p129, %p130
      %p132 = scmp.ne.s32.totalorder %s121, %s122
      %p133 = scmp.eq.s32.totalorder %s19, 0
      %p134 = por %p132, %p133
      %p135 = scmp.ne.s32.totalorder %s121, %s122
      %p136 = scmp.eq.s32.totalorder %s20, 1
      %p137 = por %p135, %p136
      %p139 = scmp.ne.s32.totalorder %s122, %s138
      %p140 = scmp.eq.s32.totalorder %s20, 0
      %p141 = por %p139, %p140
      %s142 = ssub.s32 %s14, %s21
      %p143 = scmp.eq.s32.totalorder %s142, 0
      %s145 = sadd.s32 %s144, 1
      %s146 = scalar_select %p143, %s144, %s145
      %p149 = pneg %p143
      %p150 = scmp.eq.s32.totalorder %s14, 1
      %p151 = por %p149, %p150
      %p152 = scmp.ne.s32.totalorder %s144, %s147
      %p153 = scmp.eq.s32.totalorder %s14, 0
      %p154 = por %p152, %p153
      %p155 = scmp.ne.s32.totalorder %s144, %s147
      %p156 = scmp.eq.s32.totalorder %s19, 1
      %p157 = por %p155, %p156
      %p158 = scmp.ne.s32.totalorder %s147, %s148
      %p159 = scmp.eq.s32.totalorder %s19, 0
      %p160 = por %p158, %p159
      %p161 = scmp.ne.s32.totalorder %s147, %s148
      %p162 = scmp.eq.s32.totalorder %s20, 1
      %p163 = por %p161, %p162
      %p165 = scmp.ne.s32.totalorder %s148, %s164
      %p166 = scmp.eq.s32.totalorder %s20, 0
      %p167 = por %p165, %p166
      %s168 = ssub.s32 %s14, %s21
      %p169 = scmp.eq.s32.totalorder %s168, 0
      %s171 = sadd.s32 %s170, 1
      %s172 = scalar_select %p169, %s170, %s171
      %p175 = pneg %p169
      %p176 = scmp.eq.s32.totalorder %s14, 1
      %p177 = por %p175, %p176
      %p178 = scmp.ne.s32.totalorder %s170, %s173
      %p179 = scmp.eq.s32.totalorder %s14, 0
      %p180 = por %p178, %p179
      %p181 = scmp.ne.s32.totalorder %s170, %s173
      %p182 = scmp.eq.s32.totalorder %s19, 1
      %p183 = por %p181, %p182
      %p184 = scmp.ne.s32.totalorder %s173, %s174
      %p185 = scmp.eq.s32.totalorder %s19, 0
      %p186 = por %p184, %p185
      %p187 = scmp.ne.s32.totalorder %s173, %s174
      %p188 = scmp.eq.s32.totalorder %s20, 1
      %p189 = por %p187, %p188
      %p191 = scmp.ne.s32.totalorder %s174, %s190
      %p192 = scmp.eq.s32.totalorder %s20, 0
      %p193 = por %p191, %p192
      %p194 = scmp.le.s32.totalorder 1, %s14
      %p195 = scmp.lt.s32.totalorder %s14, 3
      %p196 = pnand %p194, %p195
      %p197 = pneg %p196
      // Predicated region
      $region9: #{model_forward.2} parent=5 // pred_check
        _
      $region10: #{model_forward.2} parent=5 // pred_check_branch
        %199 = sbr.rel (%p196) target = $region12
      $region11: #{model_forward.2} parent=5 // pred_region
        %s200 = ssub.s32 %s14, 1
        // Predicated region
        $region13: #{model_forward.2} parent=11 // pred_check
          %p201 = pneg %p61
        $region14: #{model_forward.2} parent=11 // pred_check_branch
          %203 = sbr.rel (%p201) target = $region16
        $region15: #{model_forward.2} parent=11 // pred_region
          %s205 = ssub.s32 1536, 1536
          %206 = vsyncadd [#allocation3], %s205
          %s207 = sshll.u32 [#allocation2], 4
          %s208 = int_to_ptr.vmem [resolvable:$true] %s207
          %213 = dma.hbm_to_vmem [thread:$0]  %s1, 1536, %s208, [#allocation3], 256, 256, 16
        $region16: #{model_forward.2} parent=11 // pred_fallthru
          _
        // Predicated region
        $region17: #{model_forward.2} parent=11 // pred_check
          %p214 = pneg %p108
        $region18: #{model_forward.2} parent=11 // pred_check_branch
          %216 = sbr.rel (%p214) target = $region20
        $region19: #{model_forward.2} parent=11 // pred_region
          _
        $region20: #{model_forward.2} parent=11 // pred_fallthru
          _
      $region12: #{model_forward.2} parent=5 // pred_fallthru
        _
      %p217 = scmp.lt.s32.totalorder %s14, 2
      // Predicated region
      $region21: #{model_forward.2} parent=5 // pred_check
        %p218 = pneg %p217
      $region22: #{model_forward.2} parent=5 // pred_check_branch
        %220 = sbr.rel (%p218) target = $region24
      $region23: #{model_forward.2} parent=5 // pred_region
        // Predicated region
        $region25: #{model_forward.2} parent=23 // pred_check
          %p221 = pneg %p34
        $region26: #{model_forward.2} parent=23 // pred_check_branch
          %223 = sbr.rel (%p221) target = $region28
        $region27: #{model_forward.2} parent=23 // pred_region
          %s224 = smul.u32 2, %s14
          %p225 = scmp.lt.s32.totalorder %s224, 3
          %s226 = scalar_select %p225, %s224, 3
          %s227 = smul.addr %s226, 8
          %s228 = scalar_lea.vmem %s0, %s227
          %s229 = smul.u32 2, %s14
        $region28: #{model_forward.2} parent=23 // pred_fallthru
          _
        // Predicated region
        $region29: #{model_forward.2} parent=23 // pred_check
          %p230 = pneg %p81
        $region30: #{model_forward.2} parent=23 // pred_check_branch
          %232 = sbr.rel (%p230) target = $region32
        $region31: #{model_forward.2} parent=23 // pred_region
          %s233 = smul.u32 2, %s14
          %p234 = scmp.lt.s32.totalorder %s233, 3
          %s235 = scalar_select %p234, %s233, 3
          %s236 = smul.addr %s235, 8
          %s237 = scalar_lea.vmem %s2, %s236
          %s238 = smul.u32 2, %s14
        $region32: #{model_forward.2} parent=23 // pred_fallthru
          _
      $region24: #{model_forward.2} parent=5 // pred_fallthru
        _
      %p239 = scmp.le.s32.totalorder 1, %s14
      %p240 = scmp.lt.s32.totalorder %s14, 3
      %p241 = pnand %p239, %p240
      %p242 = pneg %p241
      // Predicated region
      $region33: #{model_forward.2} parent=5 // pred_check
        _
      $region34: #{model_forward.2} parent=5 // pred_check_branch
        %244 = sbr.rel (%p241) target = $region36
      $region35: #{model_forward.2} parent=5 // pred_region
        %s245 = ssub.s32 %s14, 1
        // Predicated region
        $region37: #{model_forward.2} parent=35 // pred_check
          %p246 = pneg %p61
        $region38: #{model_forward.2} parent=35 // pred_check_branch
          %248 = sbr.rel (%p246) target = $region40
        $region39: #{model_forward.2} parent=35 // pred_region
          %249 = dma.done [#allocation3], 1536
        $region40: #{model_forward.2} parent=35 // pred_fallthru
          _
        %s250 = smul.u32 2, %s19
        %p251 = scmp.lt.s32.totalorder %s250, 3
        %s252 = scalar_select %p251, %s250, 3
        %s253 = smul.addr %s252, 8
        %s254 = scalar_lea.vmem %s0, %s253
        %p255 = pneg %p40
        %p256 = pneg %p37
        %p257 = pneg %p61
        %p258 = pneg %p58
        %s259 = smul.u32 2, %s19
        %p260 = scmp.lt.s32.totalorder %s259, 3
        %s261 = scalar_select %p260, %s259, 3
        %s262 = smul.addr %s261, 8
        %s263 = scalar_lea.vmem %s2, %s262
        %p264 = pneg %p87
        %p265 = pneg %p84
        %p266 = pneg %p108
        %p267 = pneg %p105
        %p268 = pneg %p134
        %p269 = pneg %p131
        %s270 = smul.u32 2, %s19
        %p271 = scmp.lt.s32.totalorder %s270, 3
        %s272 = scalar_select %p271, %s270, 3
        %s273 = smul.addr %s272, 8
        %s274 = scalar_lea.vmem %s4, %s273
        %p275 = pneg %p160
        %p276 = pneg %p157
        %s277 = smul.u32 2, %s19
        %p278 = scmp.lt.s32.totalorder %s277, 3
        %s279 = scalar_select %p278, %s277, 3
        %s280 = smul.addr %s279, 8
        %s281 = scalar_lea.vmem %s5, %s280
        %p282 = pneg %p186
        %p283 = pneg %p183
        %s284 = smul.u32 2, %s19
        %p285 = scmp.lt.s32.totalorder %s284, 3
        %s286 = scalar_select %p285, %s284, 3
        %s287 = smul.addr %s286, 8
        %s288 = scalar_lea.vmem %s6, %s287
        %s289 = smul.u32 2, %s19
        %p290 = scmp.lt.s32.totalorder %s289, 3
        %s291 = scalar_select %p290, %s289, 3
        %s292 = smul.addr %s291, 8
        %s293 = scalar_lea.vmem %s0, %s292
        %s294 = smul.u32 2, %s19
        %s295 = smul.u32 2, %s19
        %p296 = scmp.lt.s32.totalorder %s295, 3
        %s297 = scalar_select %p296, %s295, 3
        %s298 = smul.addr %s297, 8
        %s299 = scalar_lea.vmem %s2, %s298
        %s300 = smul.u32 2, %s19
        %s301 = smul.u32 2, %s19
        %p302 = scmp.lt.s32.totalorder %s301, 3
        %s303 = scalar_select %p302, %s301, 3
        %s304 = smul.addr %s303, 8
        %s305 = scalar_lea.vmem %s4, %s304
        %s306 = smul.u32 2, %s19
        %s307 = smul.u32 2, %s19
        %p308 = scmp.lt.s32.totalorder %s307, 3
        %s309 = scalar_select %p308, %s307, 3
        %s310 = smul.addr %s309, 8
        %s311 = scalar_lea.vmem %s5, %s310
        %s312 = smul.u32 2, %s19
        %s313 = smul.u32 2, %s19
        %p314 = scmp.lt.s32.totalorder %s313, 3
        %s315 = scalar_select %p314, %s313, 3
        %s316 = smul.addr %s315, 8
        %s317 = scalar_lea.vmem %s6, %s316
        %s318 = smul.u32 2, %s19
        %v319 = vld [vmem:[%s293] sm:$0xff]
        %v320 = vld [vmem:[%s293 + $0x8] sm:$0xff]
        %v321 = vld [vmem:[#allocation2] sm:$0xff]
        %v322 = vld [vmem:[#allocation2 + $0x10] sm:$0xff]
        %v323 = vld [vmem:[#allocation2 + $0x20] sm:$0xff]
        %v324 = vld [vmem:[#allocation2 + $0x30] sm:$0xff]
        %v325 = vld [vmem:[#allocation2 + $0x40] sm:$0xff]
        %v326 = vld [vmem:[#allocation2 + $0x50] sm:$0xff]
        %vm327 = vcmask 392192
        %v329 = vsel %vm327, %v319, 0
        %v332 = vsel %vm327, %v320, 0
        %334 = vmatprep.subr.mxu0 0.0
        %335 = vmatpush1.msra.mxu0 %v321
        %336 = vmatprep.subr.mxu0 0.0
        %337 = vmatpush1.msra.mxu0 %v322
        %338 = vmatprep.subr.mxu0 0.0
        %339 = vmatpush1.msra.mxu0 %v323
        %340 = vmatprep.subr.mxu0 0.0
        %341 = vmatpush1.msra.mxu0 %v324
        %342 = vmatprep.subr.mxu0 0.0
        %343 = vmatpush1.msra.mxu0 %v325
        %344 = vmatprep.subr.mxu0 0.0
        %345 = vmatpush1.msra.mxu0 %v326
        %346 = vmatprep.subr.mxu0 0.0
        %347 = vmatpush1.msra.mxu0 0.0
        %348 = vmatprep.subr.mxu0 0.0
        %349 = vmatpush1.msra.mxu0 0.0
        %350 = vmatprep.subr.mxu0 0.0
        %351 = vmatpush1.msra.mxu0 0.0
        %352 = vmatprep.subr.mxu0 0.0
        %353 = vmatpush1.msra.mxu0 0.0
        %354 = vmatprep.subr.mxu0 0.0
        %355 = vmatpush1.msra.mxu0 0.0
        %356 = vmatprep.subr.mxu0 0.0
        %357 = vmatpush1.msra.mxu0 0.0
        %358 = vmatprep.subr.mxu0 0.0
        %359 = vmatpush1.msra.mxu0 0.0
        %360 = vmatprep.subr.mxu0 0.0
        %361 = vmatpush1.msra.mxu0 0.0
        %362 = vmatprep.subr.mxu0 0.0
        %363 = vmatpush1.msra.mxu0 0.0
        %364 = vmatprep.subr.mxu0 0.0
        %365 = vmatpush1.msra.mxu0 0.0
        %366 = vmatprep.subr.mxu0 0.0
        %367 = vmatpush1.msra.mxu0 0.0
        %368 = vmatprep.subr.mxu0 0.0
        %369 = vmatpush1.msra.mxu0 0.0
        %370 = vmatprep.subr.mxu0 0.0
        %371 = vmatpush1.msra.mxu0 0.0
        %372 = vmatprep.subr.mxu0 0.0
        %373 = vmatpush1.msra.mxu0 0.0
        %374 = vmatprep.subr.mxu0 0.0
        %375 = vmatpush1.msra.mxu0 0.0
        %376 = vmatprep.subr.mxu0 0.0
        %377 = vmatpush1.msra.mxu0 0.0
        %378 = vmatprep.subr.mxu0 0.0
        %379 = vmatpush1.msra.mxu0 0.0
        %380 = vmatprep.subr.mxu0 0.0
        %381 = vmatpush1.msra.mxu0 0.0
        %382 = vmatprep.subr.mxu0 0.0
        %383 = vmatpush1.msra.mxu0 0.0
        %384 = vmatprep.subr.mxu0 0.0
        %385 = vmatpush1.msra.mxu0 0.0
        %386 = vmatprep.subr.mxu0 0.0
        %387 = vmatpush1.msra.mxu0 0.0
        %388 = vmatprep.subr.mxu0 0.0
        %389 = vmatpush1.msra.mxu0 0.0
        %390 = vmatprep.subr.mxu0 0.0
        %391 = vmatpush1.msra.mxu0 0.0
        %392 = vmatprep.subr.mxu0 0.0
        %393 = vmatpush1.msra.mxu0 0.0
        %394 = vmatprep.subr.mxu0 0.0
        %395 = vmatpush1.msra.mxu0 0.0
        %396 = vmatprep.subr.mxu0 0.0
        %397 = vmatpush1.msra.mxu0 0.0
        %398 = vmatprep.mubr.f32.mxu0 0.0
        %399 = vmatmul.mubr.f32.gmra.mrb[0].mxu0 %v329
        %v400 = vpop.f32.mrb[0].mxu0
        %v401 = vadd.f32 0.0, %v400
        %v402 = vpop.f32.mrb[0].mxu0
        %403 = vmatprep.mubr.f32.mxu0 0.0
        %404 = vmatmul.mubr.f32.gmra.mrb[0].mxu0 %v332
        %v405 = vpop.f32.mrb[0].mxu0
        %v406 = vadd.f32 0.0, %v405
        %v407 = vpop.f32.mrb[0].mxu0
        %408 = vdwg.mxu0
        %v409 = vld [vmem:[#allocation2 + $0x8] sm:$0xff]
        %v410 = vld [vmem:[#allocation2 + $0x18] sm:$0xff]
        %v411 = vld [vmem:[#allocation2 + $0x28] sm:$0xff]
        %v412 = vld [vmem:[#allocation2 + $0x38] sm:$0xff]
        %v413 = vld [vmem:[#allocation2 + $0x48] sm:$0xff]
        %v414 = vld [vmem:[#allocation2 + $0x58] sm:$0xff]
        %415 = vmatprep.subr.mxu0 0.0
        %416 = vmatpush1.msra.mxu0 %v409
        %417 = vmatprep.subr.mxu0 0.0
        %418 = vmatpush1.msra.mxu0 %v410
        %419 = vmatprep.subr.mxu0 0.0
        %420 = vmatpush1.msra.mxu0 %v411
        %421 = vmatprep.subr.mxu0 0.0
        %422 = vmatpush1.msra.mxu0 %v412
        %423 = vmatprep.subr.mxu0 0.0
        %424 = vmatpush1.msra.mxu0 %v413
        %425 = vmatprep.subr.mxu0 0.0
        %426 = vmatpush1.msra.mxu0 %v414
        %427 = vmatprep.subr.mxu0 0.0
        %428 = vmatpush1.msra.mxu0 0.0
        %429 = vmatprep.subr.mxu0 0.0
        %430 = vmatpush1.msra.mxu0 0.0
        %431 = vmatprep.subr.mxu0 0.0
        %432 = vmatpush1.msra.mxu0 0.0
        %433 = vmatprep.subr.mxu0 0.0
        %434 = vmatpush1.msra.mxu0 0.0
        %435 = vmatprep.subr.mxu0 0.0
        %436 = vmatpush1.msra.mxu0 0.0
        %437 = vmatprep.subr.mxu0 0.0
        %438 = vmatpush1.msra.mxu0 0.0
        %439 = vmatprep.subr.mxu0 0.0
        %440 = vmatpush1.msra.mxu0 0.0
        %441 = vmatprep.subr.mxu0 0.0
        %442 = vmatpush1.msra.mxu0 0.0
        %443 = vmatprep.subr.mxu0 0.0
        %444 = vmatpush1.msra.mxu0 0.0
        %445 = vmatprep.subr.mxu0 0.0
        %446 = vmatpush1.msra.mxu0 0.0
        %447 = vmatprep.subr.mxu0 0.0
        %448 = vmatpush1.msra.mxu0 0.0
        %449 = vmatprep.subr.mxu0 0.0
        %450 = vmatpush1.msra.mxu0 0.0
        %451 = vmatprep.subr.mxu0 0.0
        %452 = vmatpush1.msra.mxu0 0.0
        %453 = vmatprep.subr.mxu0 0.0
        %454 = vmatpush1.msra.mxu0 0.0
        %455 = vmatprep.subr.mxu0 0.0
        %456 = vmatpush1.msra.mxu0 0.0
        %457 = vmatprep.subr.mxu0 0.0
        %458 = vmatpush1.msra.mxu0 0.0
        %459 = vmatprep.subr.mxu0 0.0
        %460 = vmatpush1.msra.mxu0 0.0
        %461 = vmatprep.subr.mxu0 0.0
        %462 = vmatpush1.msra.mxu0 0.0
        %463 = vmatprep.subr.mxu0 0.0
        %464 = vmatpush1.msra.mxu0 0.0
        %465 = vmatprep.subr.mxu0 0.0
        %466 = vmatpush1.msra.mxu0 0.0
        %467 = vmatprep.subr.mxu0 0.0
        %468 = vmatpush1.msra.mxu0 0.0
        %469 = vmatprep.subr.mxu0 0.0
        %470 = vmatpush1.msra.mxu0 0.0
        %471 = vmatprep.subr.mxu0 0.0
        %472 = vmatpush1.msra.mxu0 0.0
        %473 = vmatprep.subr.mxu0 0.0
        %474 = vmatpush1.msra.mxu0 0.0
        %475 = vmatprep.subr.mxu0 0.0
        %476 = vmatpush1.msra.mxu0 0.0
        %477 = vmatprep.subr.mxu0 0.0
        %478 = vmatpush1.msra.mxu0 0.0
        %479 = vmatprep.mubr.f32.mxu0 0.0
        %480 = vmatmul.mubr.f32.gmra.mrb[0].mxu0 %v329
        %v481 = vpop.f32.mrb[0].mxu0
        %v482 = vadd.f32 0.0, %v481
        %v483 = vpop.f32.mrb[0].mxu0
        %484 = vmatprep.mubr.f32.mxu0 0.0
        %485 = vmatmul.mubr.f32.gmra.mrb[0].mxu0 %v332
        %v486 = vpop.f32.mrb[0].mxu0
        %v487 = vadd.f32 0.0, %v486
        %v488 = vpop.f32.mrb[0].mxu0
        %489 = vdwg.mxu0
        %v490 = vmul.f32 %v401, %v401
        %v491 = vmul.f32 %v406, %v406
        %v492 = vmul.f32 %v482, %v482
        %v493 = vmul.f32 %v487, %v487
        %v494 = vadd.f32 %v490, %v492
        %v495 = vadd.f32 %v491, %v493
        %v496 = vrsqrt.pop %v494
        %v497 = vmul.f32 %v494, %v496
        %vm498 = vcmp.eq.f32.partialorder %v494, inf
        %v499 = vsel %vm498, %v494, %v497
        %vm500 = vcmp.eq.f32.partialorder %v494, 0.0
        %v501 = vand.u32 %v494, 2147483648
        %v502 = vsel %vm500, %v501, %v499
        %v503 = vrsqrt.pop %v495
        %v504 = vmul.f32 %v495, %v503
        %vm505 = vcmp.eq.f32.partialorder %v495, inf
        %v506 = vsel %vm505, %v495, %v504
        %vm507 = vcmp.eq.f32.partialorder %v495, 0.0
        %v508 = vand.u32 %v495, 2147483648
        %v509 = vsel %vm507, %v508, %v506
        %510 = vst [vmem:[%s305] sm:$0xff] %v502
        %511 = vst [vmem:[%s305 + $0x8] sm:$0xff] %v509
        %v512 = vld [vmem:[%s299] sm:$0xff]
        %v513 = vld [vmem:[%s299 + $0x8] sm:$0xff]
        %v514 = vld [vmem:[%s3] sm:$0xff]
        %v515 = vld [vmem:[%s3 + $0x10] sm:$0xff]
        %v516 = vld [vmem:[%s3 + $0x20] sm:$0xff]
        %v517 = vld [vmem:[%s3 + $0x30] sm:$0xff]
        %v518 = vld [vmem:[%s3 + $0x40] sm:$0xff]
        %v519 = vld [vmem:[%s3 + $0x50] sm:$0xff]
        %v520 = vld [vmem:[%s3 + $0x60] sm:$0xff]
        %v521 = vld [vmem:[%s3 + $0x70] sm:$0xff]
        %v522 = vld [vmem:[%s3 + $0x80] sm:$0xff]
        %v523 = vld [vmem:[%s3 + $0x90] sm:$0xff]
        %v524 = vld [vmem:[%s3 + $0xa0] sm:$0xff]
        %v525 = vld [vmem:[%s3 + $0xb0] sm:$0xff]
        %v526 = vld [vmem:[%s3 + $0xc0] sm:$0xff]
        %v527 = vld [vmem:[%s3 + $0xd0] sm:$0xff]
        %v528 = vld [vmem:[%s3 + $0xe0] sm:$0xff]
        %v529 = vld [vmem:[%s3 + $0xf0] sm:$0xff]
        %530 = vmatprep.subr.mxu0 0.0
        %531 = vmatpush1.msra.mxu0 %v514
        %532 = vmatprep.subr.mxu0 0.0
        %533 = vmatpush1.msra.mxu0 %v515
        %534 = vmatprep.subr.mxu0 0.0
        %535 = vmatpush1.msra.mxu0 %v516
        %536 = vmatprep.subr.mxu0 0.0
        %537 = vmatpush1.msra.mxu0 %v517
        %538 = vmatprep.subr.mxu0 0.0
        %539 = vmatpush1.msra.mxu0 %v518
        %540 = vmatprep.subr.mxu0 0.0
        %541 = vmatpush1.msra.mxu0 %v519
        %542 = vmatprep.subr.mxu0 0.0
        %543 = vmatpush1.msra.mxu0 %v520
        %544 = vmatprep.subr.mxu0 0.0
        %545 = vmatpush1.msra.mxu0 %v521
        %546 = vmatprep.subr.mxu0 0.0
        %547 = vmatpush1.msra.mxu0 %v522
        %548 = vmatprep.subr.mxu0 0.0
        %549 = vmatpush1.msra.mxu0 %v523
        %550 = vmatprep.subr.mxu0 0.0
        %551 = vmatpush1.msra.mxu0 %v524
        %552 = vmatprep.subr.mxu0 0.0
        %553 = vmatpush1.msra.mxu0 %v525
        %554 = vmatprep.subr.mxu0 0.0
        %555 = vmatpush1.msra.mxu0 %v526
        %556 = vmatprep.subr.mxu0 0.0
        %557 = vmatpush1.msra.mxu0 %v527
        %558 = vmatprep.subr.mxu0 0.0
        %559 = vmatpush1.msra.mxu0 %v528
        %560 = vmatprep.subr.mxu0 0.0
        %561 = vmatpush1.msra.mxu0 %v529
        %562 = vmatprep.subr.mxu0 0.0
        %563 = vmatpush1.msra.mxu0 0.0
        %564 = vmatprep.subr.mxu0 0.0
        %565 = vmatpush1.msra.mxu0 0.0
        %566 = vmatprep.subr.mxu0 0.0
        %567 = vmatpush1.msra.mxu0 0.0
        %568 = vmatprep.subr.mxu0 0.0
        %569 = vmatpush1.msra.mxu0 0.0
        %570 = vmatprep.subr.mxu0 0.0
        %571 = vmatpush1.msra.mxu0 0.0
        %572 = vmatprep.subr.mxu0 0.0
        %573 = vmatpush1.msra.mxu0 0.0
        %574 = vmatprep.subr.mxu0 0.0
        %575 = vmatpush1.msra.mxu0 0.0
        %576 = vmatprep.subr.mxu0 0.0
        %577 = vmatpush1.msra.mxu0 0.0
        %578 = vmatprep.subr.mxu0 0.0
        %579 = vmatpush1.msra.mxu0 0.0
        %580 = vmatprep.subr.mxu0 0.0
        %581 = vmatpush1.msra.mxu0 0.0
        %582 = vmatprep.subr.mxu0 0.0
        %583 = vmatpush1.msra.mxu0 0.0
        %584 = vmatprep.subr.mxu0 0.0
        %585 = vmatpush1.msra.mxu0 0.0
        %586 = vmatprep.subr.mxu0 0.0
        %587 = vmatpush1.msra.mxu0 0.0
        %588 = vmatprep.subr.mxu0 0.0
        %589 = vmatpush1.msra.mxu0 0.0
        %590 = vmatprep.subr.mxu0 0.0
        %591 = vmatpush1.msra.mxu0 0.0
        %592 = vmatprep.subr.mxu0 0.0
        %593 = vmatpush1.msra.mxu0 0.0
        %594 = vmatprep.mubr.f32.mxu0 0.0
        %595 = vmatmul.mubr.f32.gmra.mrb[0].mxu0 %v512
        %v596 = vpop.f32.mrb[0].mxu0
        %v597 = vadd.f32 0.0, %v596
        %v598 = vpop.f32.mrb[0].mxu0
        %599 = vmatprep.mubr.f32.mxu0 0.0
        %600 = vmatmul.mubr.f32.gmra.mrb[0].mxu0 %v513
        %v601 = vpop.f32.mrb[0].mxu0
        %v602 = vadd.f32 0.0, %v601
        %v603 = vpop.f32.mrb[0].mxu0
        %604 = vdwg.mxu0
        %v605 = vld [vmem:[%s3 + $0x8] sm:$0xff]
        %v606 = vld [vmem:[%s3 + $0x18] sm:$0xff]
        %v607 = vld [vmem:[%s3 + $0x28] sm:$0xff]
        %v608 = vld [vmem:[%s3 + $0x38] sm:$0xff]
        %v609 = vld [vmem:[%s3 + $0x48] sm:$0xff]
        %v610 = vld [vmem:[%s3 + $0x58] sm:$0xff]
        %v611 = vld [vmem:[%s3 + $0x68] sm:$0xff]
        %v612 = vld [vmem:[%s3 + $0x78] sm:$0xff]
        %v613 = vld [vmem:[%s3 + $0x88] sm:$0xff]
        %v614 = vld [vmem:[%s3 + $0x98] sm:$0xff]
        %v615 = vld [vmem:[%s3 + $0xa8] sm:$0xff]
        %v616 = vld [vmem:[%s3 + $0xb8] sm:$0xff]
        %v617 = vld [vmem:[%s3 + $0xc8] sm:$0xff]
        %v618 = vld [vmem:[%s3 + $0xd8] sm:$0xff]
        %v619 = vld [vmem:[%s3 + $0xe8] sm:$0xff]
        %v620 = vld [vmem:[%s3 + $0xf8] sm:$0xff]
        %621 = vmatprep.subr.mxu0 0.0
        %622 = vmatpush1.msra.mxu0 %v605
        %623 = vmatprep.subr.mxu0 0.0
        %624 = vmatpush1.msra.mxu0 %v606
        %625 = vmatprep.subr.mxu0 0.0
        %626 = vmatpush1.msra.mxu0 %v607
        %627 = vmatprep.subr.mxu0 0.0
        %628 = vmatpush1.msra.mxu0 %v608
        %629 = vmatprep.subr.mxu0 0.0
        %630 = vmatpush1.msra.mxu0 %v609
        %631 = vmatprep.subr.mxu0 0.0
        %632 = vmatpush1.msra.mxu0 %v610
        %633 = vmatprep.subr.mxu0 0.0
        %634 = vmatpush1.msra.mxu0 %v611
        %635 = vmatprep.subr.mxu0 0.0
        %636 = vmatpush1.msra.mxu0 %v612
        %637 = vmatprep.subr.mxu0 0.0
        %638 = vmatpush1.msra.mxu0 %v613
        %639 = vmatprep.subr.mxu0 0.0
        %640 = vmatpush1.msra.mxu0 %v614
        %641 = vmatprep.subr.mxu0 0.0
        %642 = vmatpush1.msra.mxu0 %v615
        %643 = vmatprep.subr.mxu0 0.0
        %644 = vmatpush1.msra.mxu0 %v616
        %645 = vmatprep.subr.mxu0 0.0
        %646 = vmatpush1.msra.mxu0 %v617
        %647 = vmatprep.subr.mxu0 0.0
        %648 = vmatpush1.msra.mxu0 %v618
        %649 = vmatprep.subr.mxu0 0.0
        %650 = vmatpush1.msra.mxu0 %v619
        %651 = vmatprep.subr.mxu0 0.0
        %652 = vmatpush1.msra.mxu0 %v620
        %653 = vmatprep.subr.mxu0 0.0
        %654 = vmatpush1.msra.mxu0 0.0
        %655 = vmatprep.subr.mxu0 0.0
        %656 = vmatpush1.msra.mxu0 0.0
        %657 = vmatprep.subr.mxu0 0.0
        %658 = vmatpush1.msra.mxu0 0.0
        %659 = vmatprep.subr.mxu0 0.0
        %660 = vmatpush1.msra.mxu0 0.0
        %661 = vmatprep.subr.mxu0 0.0
        %662 = vmatpush1.msra.mxu0 0.0
        %663 = vmatprep.subr.mxu0 0.0
        %664 = vmatpush1.msra.mxu0 0.0
        %665 = vmatprep.subr.mxu0 0.0
        %666 = vmatpush1.msra.mxu0 0.0
        %667 = vmatprep.subr.mxu0 0.0
        %668 = vmatpush1.msra.mxu0 0.0
        %669 = vmatprep.subr.mxu0 0.0
        %670 = vmatpush1.msra.mxu0 0.0
        %671 = vmatprep.subr.mxu0 0.0
        %672 = vmatpush1.msra.mxu0 0.0
        %673 = vmatprep.subr.mxu0 0.0
        %674 = vmatpush1.msra.mxu0 0.0
        %675 = vmatprep.subr.mxu0 0.0
        %676 = vmatpush1.msra.mxu0 0.0
        %677 = vmatprep.subr.mxu0 0.0
        %678 = vmatpush1.msra.mxu0 0.0
        %679 = vmatprep.subr.mxu0 0.0
        %680 = vmatpush1.msra.mxu0 0.0
        %681 = vmatprep.subr.mxu0 0.0
        %682 = vmatpush1.msra.mxu0 0.0
        %683 = vmatprep.subr.mxu0 0.0
        %684 = vmatpush1.msra.mxu0 0.0
        %685 = vmatprep.mubr.f32.mxu0 0.0
        %686 = vmatmul.mubr.f32.gmra.mrb[0].mxu0 %v512
        %v687 = vpop.f32.mrb[0].mxu0
        %v688 = vadd.f32 0.0, %v687
        %v689 = vpop.f32.mrb[0].mxu0
        %690 = vmatprep.mubr.f32.mxu0 0.0
        %691 = vmatmul.mubr.f32.gmra.mrb[0].mxu0 %v513
        %v692 = vpop.f32.mrb[0].mxu0
        %v693 = vadd.f32 0.0, %v692
        %v694 = vpop.f32.mrb[0].mxu0
        %695 = vdwg.mxu0
        %696 = vst [vmem:[%s311] sm:$0xff] %v597
        %697 = vst [vmem:[%s311 + $0x8] sm:$0xff] %v602
        %698 = vst [vmem:[%s317] sm:$0xff] %v688
        %699 = vst [vmem:[%s317 + $0x8] sm:$0xff] %v693
        %s700 = smul.u32 2, %s19
        %p701 = scmp.lt.s32.totalorder %s700, 3
        %s702 = scalar_select %p701, %s700, 3
        %s703 = smul.addr %s702, 8
        %s704 = scalar_lea.vmem %s4, %s703
        %s705 = smul.u32 2, %s19
        %p706 = scmp.lt.s32.totalorder %s705, 3
        %s707 = scalar_select %p706, %s705, 3
        %s708 = smul.addr %s707, 8
        %s709 = scalar_lea.vmem %s5, %s708
        %s710 = smul.u32 2, %s19
        %p711 = scmp.lt.s32.totalorder %s710, 3
        %s712 = scalar_select %p711, %s710, 3
        %s713 = smul.addr %s712, 8
        %s714 = scalar_lea.vmem %s6, %s713
        // Predicated region
        $region41: #{model_forward.2} parent=35 // pred_check
          %p715 = pneg %p131
        $region42: #{model_forward.2} parent=35 // pred_check_branch
          %717 = sbr.rel (%p715) target = $region44
        $region43: #{model_forward.2} parent=35 // pred_region
          %s718 = smul.u32 2, %s19
        $region44: #{model_forward.2} parent=35 // pred_fallthru
          _
        // Predicated region
        $region45: #{model_forward.2} parent=35 // pred_check
          %p719 = pneg %p157
        $region46: #{model_forward.2} parent=35 // pred_check_branch
          %721 = sbr.rel (%p719) target = $region48
        $region47: #{model_forward.2} parent=35 // pred_region
          %s722 = smul.u32 2, %s19
        $region48: #{model_forward.2} parent=35 // pred_fallthru
          _
        // Predicated region
        $region49: #{model_forward.2} parent=35 // pred_check
          %p723 = pneg %p183
        $region50: #{model_forward.2} parent=35 // pred_check_branch
          %725 = sbr.rel (%p723) target = $region52
        $region51: #{model_forward.2} parent=35 // pred_region
          %s726 = smul.u32 2, %s19
        $region52: #{model_forward.2} parent=35 // pred_fallthru
          _
      $region36: #{model_forward.2} parent=5 // pred_fallthru
        _
      %p727 = scmp.le.s32.totalorder 2, %s14
      // Predicated region
      $region53: #{model_forward.2} parent=5 // pred_check
        %p728 = pneg %p727
      $region54: #{model_forward.2} parent=5 // pred_check_branch
        %730 = sbr.rel (%p728) target = $region56
      $region55: #{model_forward.2} parent=5 // pred_region
        %s731 = ssub.s32 %s14, 2
        // Predicated region
        $region57: #{model_forward.2} parent=55 // pred_check
          %p732 = pneg %p137
        $region58: #{model_forward.2} parent=55 // pred_check_branch
          %734 = sbr.rel (%p732) target = $region60
        $region59: #{model_forward.2} parent=55 // pred_region
          %s735 = smul.u32 2, %s20
          %p736 = scmp.lt.s32.totalorder %s735, 3
          %s737 = scalar_select %p736, %s735, 3
          %s738 = smul.addr %s737, 8
          %s739 = scalar_lea.vmem %s4, %s738
        $region60: #{model_forward.2} parent=55 // pred_fallthru
          _
        // Predicated region
        $region61: #{model_forward.2} parent=55 // pred_check
          %p740 = pneg %p163
        $region62: #{model_forward.2} parent=55 // pred_check_branch
          %742 = sbr.rel (%p740) target = $region64
        $region63: #{model_forward.2} parent=55 // pred_region
          %s743 = smul.u32 2, %s20
          %p744 = scmp.lt.s32.totalorder %s743, 3
          %s745 = scalar_select %p744, %s743, 3
          %s746 = smul.addr %s745, 8
          %s747 = scalar_lea.vmem %s5, %s746
        $region64: #{model_forward.2} parent=55 // pred_fallthru
          _
        // Predicated region
        $region65: #{model_forward.2} parent=55 // pred_check
          %p748 = pneg %p189
        $region66: #{model_forward.2} parent=55 // pred_check_branch
          %750 = sbr.rel (%p748) target = $region68
        $region67: #{model_forward.2} parent=55 // pred_region
          %s751 = smul.u32 2, %s20
          %p752 = scmp.lt.s32.totalorder %s751, 3
          %s753 = scalar_select %p752, %s751, 3
          %s754 = smul.addr %s753, 8
          %s755 = scalar_lea.vmem %s6, %s754
        $region68: #{model_forward.2} parent=55 // pred_fallthru
          _
      $region56: #{model_forward.2} parent=5 // pred_fallthru
        _
    $region6: #{model_forward.2} parent=1 // loop_footer
      %s18 = sadd.s32 1, %s14
    $region7: #{model_forward.2} parent=1 // loop_footer_branch
      %13 = sbr.rel target = $region3
    $region8: #{model_forward.2} parent=1 // loop_exit
      _
    %756 = vsyncpa [#allocation3], 1
    %s757 = scalar_lea.sflag [#allocation3], 1
    %758 = vsyncpa %s757, 1

// kernel: model_forward.3
$region0: #{model_forward.3}
  #allocation0 [shape = 'u32[]', space=smem, size = 0x4, offset = 0x4, fixed_abs, tag = 'smem constant byte address 0x4 - core index']
  #allocation1 [shape = 'u32[144,128]{1,0:T(1,128)}', space=vmem, size = 0x12000, scoped, tag = 'internal scratch']
  %s0 = inlined_call_operand.vmem [shape: f32[16,256], index: 0, kind: input, shape index: {}]
  %s1 = inlined_call_operand.vmem [shape: f32[256,768], index: 1, kind: input, shape index: {}]
  %s2 = inlined_call_operand.vmem [shape: f32[16,512], index: 2, kind: input, shape index: {}]
  %s3 = inlined_call_operand.vmem [shape: f32[512,768], index: 3, kind: input, shape index: {}]
  %s4 = inlined_call_operand.vmem [shape: f32[16,384], index: 4, kind: output, shape index: {0}]
  %s5 = inlined_call_operand.vmem [shape: f32[16,384], index: 5, kind: output, shape index: {1}]
  %6 = xla_tuple %s4, %s5
  %s7 = sld [smem:[#allocation0]]
  $region57: #{model_forward.3} parent=0
    _
  %s9 = ssub.s32 1, %s7
  %s10 = scalar_select 0, %s9, %s7
  loop: start=0, step=1, limit=4
  $region2: #{model_forward.3} parent=0 // loop_pre_header
    _
  $region3: #{model_forward.3} parent=0 // loop_header
    %s12 = sphi 0, %s16
    %p13 = scmp.ge.s32.totalorder %s12, 4
    %s22 = sphi 0, %s24
    %s25 = sphi 0, %s22
    %s26 = sphi 0, %s25
    %s42 = sphi 0, %s26
    %s46 = sphi 0, %s46
    %s48 = sphi 0, %s46
    %s49 = sphi 0, %s48
    %s63 = sphi 0, %s49
    %s69 = sphi 0, %s71
    %s72 = sphi 0, %s69
    %s73 = sphi 0, %s72
    %s89 = sphi 0, %s73
    %s93 = sphi 0, %s93
    %s95 = sphi 0, %s93
    %s96 = sphi 0, %s95
    %s110 = sphi 0, %s96
    %s116 = sphi 0, %s118
    %s119 = sphi 0, %s116
    %s120 = sphi 0, %s119
    %s136 = sphi 0, %s120
    %s142 = sphi 0, %s144
    %s145 = sphi 0, %s142
    %s146 = sphi 0, %s145
    %s162 = sphi 0, %s146
  $region4: #{model_forward.3} parent=0 // loop_header_branch
    %15 = sbr.rel (%p13) target = $region8
  $region5: #{model_forward.3} parent=0 // loop_body
    %s17 = ssub.s32 %s12, 1
    %s18 = ssub.s32 %s12, 2
    %s19 = sadd.s32 %s12, 1
    %s20 = ssub.s32 %s12, %s19
    %p21 = scmp.eq.s32.totalorder %s20, 0
    %s23 = sadd.s32 %s22, 1
    %s24 = scalar_select %p21, %s22, %s23
    %p27 = pneg %p21
    %p28 = scmp.eq.s32.totalorder %s12, 1
    %p29 = por %p27, %p28
    %p30 = scmp.ne.s32.totalorder %s22, %s25
    %p31 = scmp.eq.s32.totalorder %s12, 0
    %p32 = por %p30, %p31
    %p33 = scmp.ne.s32.totalorder %s22, %s25
    %p34 = scmp.eq.s32.totalorder %s17, 1
    %p35 = por %p33, %p34
    %p36 = scmp.ne.s32.totalorder %s25, %s26
    %p37 = scmp.eq.s32.totalorder %s17, 0
    %p38 = por %p36, %p37
    %p39 = scmp.ne.s32.totalorder %s25, %s26
    %p40 = scmp.eq.s32.totalorder %s18, 1
    %p41 = por %p39, %p40
    %p43 = scmp.ne.s32.totalorder %s26, %s42
    %p44 = scmp.eq.s32.totalorder %s18, 0
    %p45 = por %p43, %p44
    %s47 = sadd.s32 %s46, 1
    %p50 = scmp.eq.s32.totalorder %s12, 1
    %p51 = scmp.ne.s32.totalorder %s46, %s48
    %p52 = scmp.eq.s32.totalorder %s12, 0
    %p53 = por %p51, %p52
    %p54 = scmp.ne.s32.totalorder %s46, %s48
    %p55 = scmp.eq.s32.totalorder %s17, 1
    %p56 = por %p54, %p55
    %p57 = scmp.ne.s32.totalorder %s48, %s49
    %p58 = scmp.eq.s32.totalorder %s17, 0
    %p59 = por %p57, %p58
    %p60 = scmp.ne.s32.totalorder %s48, %s49
    %p61 = scmp.eq.s32.totalorder %s18, 1
    %p62 = por %p60, %p61
    %p64 = scmp.ne.s32.totalorder %s49, %s63
    %p65 = scmp.eq.s32.totalorder %s18, 0
    %p66 = por %p64, %p65
    %s67 = ssub.s32 %s12, %s19
    %p68 = scmp.eq.s32.totalorder %s67, 0
    %s70 = sadd.s32 %s69, 1
    %s71 = scalar_select %p68, %s69, %s70
    %p74 = pneg %p68
    %p75 = scmp.eq.s32.totalorder %s12, 1
    %p76 = por %p74, %p75
    %p77 = scmp.ne.s32.totalorder %s69, %s72
    %p78 = scmp.eq.s32.totalorder %s12, 0
    %p79 = por %p77, %p78
    %p80 = scmp.ne.s32.totalorder %s69, %s72
    %p81 = scmp.eq.s32.totalorder %s17, 1
    %p82 = por %p80, %p81
    %p83 = scmp.ne.s32.totalorder %s72, %s73
    %p84 = scmp.eq.s32.totalorder %s17, 0
    %p85 = por %p83, %p84
    %p86 = scmp.ne.s32.totalorder %s72, %s73
    %p87 = scmp.eq.s32.totalorder %s18, 1
    %p88 = por %p86, %p87
    %p90 = scmp.ne.s32.totalorder %s73, %s89
    %p91 = scmp.eq.s32.totalorder %s18, 0
    %p92 = por %p90, %p91
    %s94 = sadd.s32 %s93, 1
    %p97 = scmp.eq.s32.totalorder %s12, 1
    %p98 = scmp.ne.s32.totalorder %s93, %s95
    %p99 = scmp.eq.s32.totalorder %s12, 0
    %p100 = por %p98, %p99
    %p101 = scmp.ne.s32.totalorder %s93, %s95
    %p102 = scmp.eq.s32.totalorder %s17, 1
    %p103 = por %p101, %p102
    %p104 = scmp.ne.s32.totalorder %s95, %s96
    %p105 = scmp.eq.s32.totalorder %s17, 0
    %p106 = por %p104, %p105
    %p107 = scmp.ne.s32.totalorder %s95, %s96
    %p108 = scmp.eq.s32.totalorder %s18, 1
    %p109 = por %p107, %p108
    %p111 = scmp.ne.s32.totalorder %s96, %s110
    %p112 = scmp.eq.s32.totalorder %s18, 0
    %p113 = por %p111, %p112
    %s114 = ssub.s32 %s12, %s19
    %p115 = scmp.eq.s32.totalorder %s114, 0
    %s117 = sadd.s32 %s116, 1
    %s118 = scalar_select %p115, %s116, %s117
    %p121 = pneg %p115
    %p122 = scmp.eq.s32.totalorder %s12, 1
    %p123 = por %p121, %p122
    %p124 = scmp.ne.s32.totalorder %s116, %s119
    %p125 = scmp.eq.s32.totalorder %s12, 0
    %p126 = por %p124, %p125
    %p127 = scmp.ne.s32.totalorder %s116, %s119
    %p128 = scmp.eq.s32.totalorder %s17, 1
    %p129 = por %p127, %p128
    %p130 = scmp.ne.s32.totalorder %s119, %s120
    %p131 = scmp.eq.s32.totalorder %s17, 0
    %p132 = por %p130, %p131
    %p133 = scmp.ne.s32.totalorder %s119, %s120
    %p134 = scmp.eq.s32.totalorder %s18, 1
    %p135 = por %p133, %p134
    %p137 = scmp.ne.s32.totalorder %s120, %s136
    %p138 = scmp.eq.s32.totalorder %s18, 0
    %p139 = por %p137, %p138
    %s140 = ssub.s32 %s12, %s19
    %p141 = scmp.eq.s32.totalorder %s140, 0
    %s143 = sadd.s32 %s142, 1
    %s144 = scalar_select %p141, %s142, %s143
    %p147 = pneg %p141
    %p148 = scmp.eq.s32.totalorder %s12, 1
    %p149 = por %p147, %p148
    %p150 = scmp.ne.s32.totalorder %s142, %s145
    %p151 = scmp.eq.s32.totalorder %s12, 0
    %p152 = por %p150, %p151
    %p153 = scmp.ne.s32.totalorder %s142, %s145
    %p154 = scmp.eq.s32.totalorder %s17, 1
    %p155 = por %p153, %p154
    %p156 = scmp.ne.s32.totalorder %s145, %s146
    %p157 = scmp.eq.s32.totalorder %s17, 0
    %p158 = por %p156, %p157
    %p159 = scmp.ne.s32.totalorder %s145, %s146
    %p160 = scmp.eq.s32.totalorder %s18, 1
    %p161 = por %p159, %p160
    %p163 = scmp.ne.s32.totalorder %s146, %s162
    %p164 = scmp.eq.s32.totalorder %s18, 0
    %p165 = por %p163, %p164
    %p166 = scmp.le.s32.totalorder 1, %s12
    %p167 = scmp.lt.s32.totalorder %s12, 3
    %p168 = pnand %p166, %p167
    %p169 = pneg %p168
    // Predicated region
    $region9: #{model_forward.3} parent=5 // pred_check
      _
    $region10: #{model_forward.3} parent=5 // pred_check_branch
      %171 = sbr.rel (%p168) target = $region12
    $region11: #{model_forward.3} parent=5 // pred_region
      %s172 = ssub.s32 %s12, 1
      // Predicated region
      $region13: #{model_forward.3} parent=11 // pred_check
        %p173 = pneg %p59
      $region14: #{model_forward.3} parent=11 // pred_check_branch
        %175 = sbr.rel (%p173) target = $region16
      $region15: #{model_forward.3} parent=11 // pred_region
        _
      $region16: #{model_forward.3} parent=11 // pred_fallthru
        _
      // Predicated region
      $region17: #{model_forward.3} parent=11 // pred_check
        %p176 = pneg %p106
      $region18: #{model_forward.3} parent=11 // pred_check_branch
        %178 = sbr.rel (%p176) target = $region20
      $region19: #{model_forward.3} parent=11 // pred_region
        _
      $region20: #{model_forward.3} parent=11 // pred_fallthru
        _
    $region12: #{model_forward.3} parent=5 // pred_fallthru
      _
    %p179 = scmp.lt.s32.totalorder %s12, 2
    // Predicated region
    $region21: #{model_forward.3} parent=5 // pred_check
      %p180 = pneg %p179
    $region22: #{model_forward.3} parent=5 // pred_check_branch
      %182 = sbr.rel (%p180) target = $region24
    $region23: #{model_forward.3} parent=5 // pred_region
      // Predicated region
      $region25: #{model_forward.3} parent=23 // pred_check
        %p183 = pneg %p32
      $region26: #{model_forward.3} parent=23 // pred_check_branch
        %185 = sbr.rel (%p183) target = $region28
      $region27: #{model_forward.3} parent=23 // pred_region
        %p186 = scmp.lt.s32.totalorder %s12, 1
        %s187 = scalar_select %p186, %s12, 1
        %s188 = smul.addr %s187, 2
        %s189 = smul.addr %s188, 8
        %s190 = scalar_lea.vmem %s0, %s189
      $region28: #{model_forward.3} parent=23 // pred_fallthru
        _
      // Predicated region
      $region29: #{model_forward.3} parent=23 // pred_check
        %p191 = pneg %p79
      $region30: #{model_forward.3} parent=23 // pred_check_branch
        %193 = sbr.rel (%p191) target = $region32
      $region31: #{model_forward.3} parent=23 // pred_region
        %p194 = scmp.lt.s32.totalorder %s12, 1
        %s195 = scalar_select %p194, %s12, 1
        %s196 = smul.addr %s195, 4
        %s197 = smul.addr %s196, 8
        %s198 = scalar_lea.vmem %s2, %s197
      $region32: #{model_forward.3} parent=23 // pred_fallthru
        _
    $region24: #{model_forward.3} parent=5 // pred_fallthru
      _
    %p199 = scmp.le.s32.totalorder 1, %s12
    %p200 = scmp.lt.s32.totalorder %s12, 3
    %p201 = pnand %p199, %p200
    %p202 = pneg %p201
    // Predicated region
    $region33: #{model_forward.3} parent=5 // pred_check
      _
    $region34: #{model_forward.3} parent=5 // pred_check_branch
      %204 = sbr.rel (%p201) target = $region36
    $region35: #{model_forward.3} parent=5 // pred_region
      %s205 = ssub.s32 %s12, 1
      %p206 = scmp.lt.s32.totalorder %s17, 1
      %s207 = scalar_select %p206, %s17, 1
      %s208 = smul.addr %s207, 2
      %s209 = smul.addr %s208, 8
      %s210 = scalar_lea.vmem %s0, %s209
      %p211 = pneg %p38
      %p212 = pneg %p35
      %p213 = pneg %p59
      %p214 = pneg %p56
      %p215 = scmp.lt.s32.totalorder %s17, 1
      %s216 = scalar_select %p215, %s17, 1
      %s217 = smul.addr %s216, 4
      %s218 = smul.addr %s217, 8
      %s219 = scalar_lea.vmem %s2, %s218
      %p220 = pneg %p85
      %p221 = pneg %p82
      %p222 = pneg %p106
      %p223 = pneg %p103
      %p224 = pneg %p132
      %p225 = pneg %p129
      %p226 = scmp.lt.s32.totalorder %s17, 1
      %s227 = scalar_select %p226, %s17, 1
      %s228 = smul.addr %s227, 3
      %s229 = smul.addr %s228, 8
      %s230 = scalar_lea.vmem %s4, %s229
      %p231 = pneg %p158
      %p232 = pneg %p155
      %p233 = scmp.lt.s32.totalorder %s17, 1
      %s234 = scalar_select %p233, %s17, 1
      %s235 = smul.addr %s234, 3
      %s236 = smul.addr %s235, 8
      %s237 = scalar_lea.vmem %s5, %s236
      %p238 = scmp.lt.s32.totalorder %s17, 1
      %s239 = scalar_select %p238, %s17, 1
      %s240 = smul.addr %s239, 2
      %s241 = smul.addr %s240, 8
      %s242 = scalar_lea.vmem %s0, %s241
      %p243 = scmp.lt.s32.totalorder %s17, 1
      %s244 = scalar_select %p243, %s17, 1
      %s245 = smul.addr %s244, 4
      %s246 = smul.addr %s245, 8
      %s247 = scalar_lea.vmem %s2, %s246
      %p248 = scmp.lt.s32.totalorder %s17, 1
      %s249 = scalar_select %p248, %s17, 1
      %s250 = smul.addr %s249, 3
      %s251 = smul.addr %s250, 8
      %s252 = scalar_lea.vmem %s4, %s251
      %p253 = scmp.lt.s32.totalorder %s17, 1
      %s254 = scalar_select %p253, %s17, 1
      %s255 = smul.addr %s254, 3
      %s256 = smul.addr %s255, 8
      %s257 = scalar_lea.vmem %s5, %s256
      %v258 = vld [vmem:[%s242] sm:$0xff]
      %v259 = vld [vmem:[%s242 + $0x8] sm:$0xff]
      %v260 = vld [vmem:[%s1] sm:$0xff]
      %v261 = vld [vmem:[%s1 + $0x8] sm:$0xff]
      %v262 = vld [vmem:[%s1 + $0x10] sm:$0xff]
      %v263 = vld [vmem:[%s1 + $0x30] sm:$0xff]
      %v264 = vld [vmem:[%s1 + $0x38] sm:$0xff]
      %v265 = vld [vmem:[%s1 + $0x40] sm:$0xff]
      %v266 = vld [vmem:[%s1 + $0x60] sm:$0xff]
      %v267 = vld [vmem:[%s1 + $0x68] sm:$0xff]
      %v268 = vld [vmem:[%s1 + $0x70] sm:$0xff]
      %v269 = vld [vmem:[%s1 + $0x90] sm:$0xff]
      %v270 = vld [vmem:[%s1 + $0x98] sm:$0xff]
      %v271 = vld [vmem:[%s1 + $0xa0] sm:$0xff]
      %v272 = vld [vmem:[%s1 + $0xc0] sm:$0xff]
      %v273 = vld [vmem:[%s1 + $0xc8] sm:$0xff]
      %v274 = vld [vmem:[%s1 + $0xd0] sm:$0xff]
      %v275 = vld [vmem:[%s1 + $0xf0] sm:$0xff]
      %v276 = vld [vmem:[%s1 + $0xf8] sm:$0xff]
      %v277 = vld [vmem:[%s1 + $0x100] sm:$0xff]
      %v278 = vld [vmem:[%s1 + $0x120] sm:$0xff]
      %v279 = vld [vmem:[%s1 + $0x128] sm:$0xff]
      %v280 = vld [vmem:[%s1 + $0x130] sm:$0xff]
      %v281 = vld [vmem:[%s1 + $0x150] sm:$0xff]
      %v282 = vld [vmem:[%s1 + $0x158] sm:$0xff]
      %v283 = vld [vmem:[%s1 + $0x160] sm:$0xff]
      %v284 = vld [vmem:[%s1 + $0x180] sm:$0xff]
      %v285 = vld [vmem:[%s1 + $0x188] sm:$0xff]
      %v286 = vld [vmem:[%s1 + $0x190] sm:$0xff]
      %v287 = vld [vmem:[%s1 + $0x1b0] sm:$0xff]
      %v288 = vld [vmem:[%s1 + $0x1b8] sm:$0xff]
      %v289 = vld [vmem:[%s1 + $0x1c0] sm:$0xff]
      %v290 = vld [vmem:[%s1 + $0x1e0] sm:$0xff]
      %v291 = vld [vmem:[%s1 + $0x1e8] sm:$0xff]
      %v292 = vld [vmem:[%s1 + $0x1f0] sm:$0xff]
      %v293 = vld [vmem:[%s1 + $0x210] sm:$0xff]
      %v294 = vld [vmem:[%s1 + $0x218] sm:$0xff]
      %v295 = vld [vmem:[%s1 + $0x220] sm:$0xff]
      %v296 = vld [vmem:[%s1 + $0x240] sm:$0xff]
      %v297 = vld [vmem:[%s1 + $0x248] sm:$0xff]
      %v298 = vld [vmem:[%s1 + $0x250] sm:$0xff]
      %v299 = vld [vmem:[%s1 + $0x270] sm:$0xff]
      %v300 = vld [vmem:[%s1 + $0x278] sm:$0xff]
      %v301 = vld [vmem:[%s1 + $0x280] sm:$0xff]
      %v302 = vld [vmem:[%s1 + $0x2a0] sm:$0xff]
      %v303 = vld [vmem:[%s1 + $0x2a8] sm:$0xff]
      %v304 = vld [vmem:[%s1 + $0x2b0] sm:$0xff]
      %v305 = vld [vmem:[%s1 + $0x2d0] sm:$0xff]
      %v306 = vld [vmem:[%s1 + $0x2d8] sm:$0xff]
      %v307 = vld [vmem:[%s1 + $0x2e0] sm:$0xff]
      %v308 = vld [vmem:[%s1 + $0x300] sm:$0xff]
      %v309 = vld [vmem:[%s1 + $0x308] sm:$0xff]
      %v310 = vld [vmem:[%s1 + $0x310] sm:$0xff]
      %v311 = vld [vmem:[%s1 + $0x330] sm:$0xff]
      %v312 = vld [vmem:[%s1 + $0x338] sm:$0xff]
      %v313 = vld [vmem:[%s1 + $0x340] sm:$0xff]
      %v314 = vld [vmem:[%s1 + $0x360] sm:$0xff]
      %v315 = vld [vmem:[%s1 + $0x368] sm:$0xff]
      %v316 = vld [vmem:[%s1 + $0x370] sm:$0xff]
      %v317 = vld [vmem:[%s1 + $0x390] sm:$0xff]
      %v318 = vld [vmem:[%s1 + $0x398] sm:$0xff]
      %v319 = vld [vmem:[%s1 + $0x3a0] sm:$0xff]
      %v320 = vld [vmem:[%s1 + $0x3c0] sm:$0xff]
      %v321 = vld [vmem:[%s1 + $0x3c8] sm:$0xff]
      %v322 = vld [vmem:[%s1 + $0x3d0] sm:$0xff]
      %v323 = vld [vmem:[%s1 + $0x3f0] sm:$0xff]
      %v324 = vld [vmem:[%s1 + $0x3f8] sm:$0xff]
      %v325 = vld [vmem:[%s1 + $0x400] sm:$0xff]
      %v326 = vld [vmem:[%s1 + $0x420] sm:$0xff]
      %v327 = vld [vmem:[%s1 + $0x428] sm:$0xff]
      %v328 = vld [vmem:[%s1 + $0x430] sm:$0xff]
      %v329 = vld [vmem:[%s1 + $0x450] sm:$0xff]
      %v330 = vld [vmem:[%s1 + $0x458] sm:$0xff]
      %v331 = vld [vmem:[%s1 + $0x460] sm:$0xff]
      %v332 = vld [vmem:[%s1 + $0x480] sm:$0xff]
      %v333 = vld [vmem:[%s1 + $0x488] sm:$0xff]
      %v334 = vld [vmem:[%s1 + $0x490] sm:$0xff]
      %v335 = vld [vmem:[%s1 + $0x4b0] sm:$0xff]
      %v336 = vld [vmem:[%s1 + $0x4b8] sm:$0xff]
      %v337 = vld [vmem:[%s1 + $0x4c0] sm:$0xff]
      %v338 = vld [vmem:[%s1 + $0x4e0] sm:$0xff]
      %v339 = vld [vmem:[%s1 + $0x4e8] sm:$0xff]
      %v340 = vld [vmem:[%s1 + $0x4f0] sm:$0xff]
      %v341 = vld [vmem:[%s1 + $0x510] sm:$0xff]
      %v342 = vld [vmem:[%s1 + $0x518] sm:$0xff]
      %v343 = vld [vmem:[%s1 + $0x520] sm:$0xff]
      %v344 = vld [vmem:[%s1 + $0x540] sm:$0xff]
      %v345 = vld [vmem:[%s1 + $0x548] sm:$0xff]
      %v346 = vld [vmem:[%s1 + $0x550] sm:$0xff]
      %v347 = vld [vmem:[%s1 + $0x570] sm:$0xff]
      %v348 = vld [vmem:[%s1 + $0x578] sm:$0xff]
      %v349 = vld [vmem:[%s1 + $0x580] sm:$0xff]
      %v350 = vld [vmem:[%s1 + $0x5a0] sm:$0xff]
      %v351 = vld [vmem:[%s1 + $0x5a8] sm:$0xff]
      %v352 = vld [vmem:[%s1 + $0x5b0] sm:$0xff]
      %v353 = vld [vmem:[%s1 + $0x5d0] sm:$0xff]
      %v354 = vld [vmem:[%s1 + $0x5d8] sm:$0xff]
      %v355 = vld [vmem:[%s1 + $0x5e0] sm:$0xff]
      %356 = vmatprep.subr.mxu0 %v261
      %357 = vmatpush1.msra.mxu0 %v260
      %358 = vmatprep.subr.mxu0 %v264
      %359 = vmatpush1.msra.mxu0 %v263
      %360 = vmatprep.subr.mxu0 %v267
      %361 = vmatpush1.msra.mxu0 %v266
      %362 = vmatprep.subr.mxu0 %v270
      %363 = vmatpush1.msra.mxu0 %v269
      %364 = vmatprep.subr.mxu0 %v273
      %365 = vmatpush1.msra.mxu0 %v272
      %366 = vmatprep.subr.mxu0 %v276
      %367 = vmatpush1.msra.mxu0 %v275
      %368 = vmatprep.subr.mxu0 %v279
      %369 = vmatpush1.msra.mxu0 %v278
      %370 = vmatprep.subr.mxu0 %v282
      %371 = vmatpush1.msra.mxu0 %v281
      %372 = vmatprep.subr.mxu0 %v285
      %373 = vmatpush1.msra.mxu0 %v284
      %374 = vmatprep.subr.mxu0 %v288
      %375 = vmatpush1.msra.mxu0 %v287
      %376 = vmatprep.subr.mxu0 %v291
      %377 = vmatpush1.msra.mxu0 %v290
      %378 = vmatprep.subr.mxu0 %v294
      %379 = vmatpush1.msra.mxu0 %v293
      %380 = vmatprep.subr.mxu0 %v297
      %381 = vmatpush1.msra.mxu0 %v296
      %382 = vmatprep.subr.mxu0 %v300
      %383 = vmatpush1.msra.mxu0 %v299
      %384 = vmatprep.subr.mxu0 %v303
      %385 = vmatpush1.msra.mxu0 %v302
      %386 = vmatprep.subr.mxu0 %v306
      %387 = vmatpush1.msra.mxu0 %v305
      %388 = vmatprep.subr.mxu0 %v309
      %389 = vmatpush1.msra.mxu0 %v308
      %390 = vmatprep.subr.mxu0 %v312
      %391 = vmatpush1.msra.mxu0 %v311
      %392 = vmatprep.subr.mxu0 %v315
      %393 = vmatpush1.msra.mxu0 %v314
      %394 = vmatprep.subr.mxu0 %v318
      %395 = vmatpush1.msra.mxu0 %v317
      %396 = vmatprep.subr.mxu0 %v321
      %397 = vmatpush1.msra.mxu0 %v320
      %398 = vmatprep.subr.mxu0 %v324
      %399 = vmatpush1.msra.mxu0 %v323
      %400 = vmatprep.subr.mxu0 %v327
      %401 = vmatpush1.msra.mxu0 %v326
      %402 = vmatprep.subr.mxu0 %v330
      %403 = vmatpush1.msra.mxu0 %v329
      %404 = vmatprep.subr.mxu0 %v333
      %405 = vmatpush1.msra.mxu0 %v332
      %406 = vmatprep.subr.mxu0 %v336
      %407 = vmatpush1.msra.mxu0 %v335
      %408 = vmatprep.subr.mxu0 %v339
      %409 = vmatpush1.msra.mxu0 %v338
      %410 = vmatprep.subr.mxu0 %v342
      %411 = vmatpush1.msra.mxu0 %v341
      %412 = vmatprep.subr.mxu0 %v345
      %413 = vmatpush1.msra.mxu0 %v344
      %414 = vmatprep.subr.mxu0 %v348
      %415 = vmatpush1.msra.mxu0 %v347
      %416 = vmatprep.subr.mxu0 %v351
      %417 = vmatpush1.msra.mxu0 %v350
      %418 = vmatprep.subr.mxu0 %v354
      %419 = vmatpush1.msra.mxu0 %v353
      %420 = vmatprep.mubr.f32.mxu0 %v259
      %421 = vmatmul.mubr.f32.gmra.mrb[0].mxu0 %v258
      %v422 = vpop.f32.mrb[0].mxu0
      %v423 = vadd.f32 0.0, %v422
      %v424 = vpop.f32.mrb[0].mxu0
      %v425 = vadd.f32 0.0, %v424
      %426 = vdwg.mxu0
      %427 = vmatprep.subr.mxu0 0.0
      %428 = vmatpush1.msra.mxu0 %v262
      %429 = vmatprep.subr.mxu0 0.0
      %430 = vmatpush1.msra.mxu0 %v265
      %431 = vmatprep.subr.mxu0 0.0
      %432 = vmatpush1.msra.mxu0 %v268
      %433 = vmatprep.subr.mxu0 0.0
      %434 = vmatpush1.msra.mxu0 %v271
      %435 = vmatprep.subr.mxu0 0.0
      %436 = vmatpush1.msra.mxu0 %v274
      %437 = vmatprep.subr.mxu0 0.0
      %438 = vmatpush1.msra.mxu0 %v277
      %439 = vmatprep.subr.mxu0 0.0
      %440 = vmatpush1.msra.mxu0 %v280
      %441 = vmatprep.subr.mxu0 0.0
      %442 = vmatpush1.msra.mxu0 %v283
      %443 = vmatprep.subr.mxu0 0.0
      %444 = vmatpush1.msra.mxu0 %v286
      %445 = vmatprep.subr.mxu0 0.0
      %446 = vmatpush1.msra.mxu0 %v289
      %447 = vmatprep.subr.mxu0 0.0
      %448 = vmatpush1.msra.mxu0 %v292
      %449 = vmatprep.subr.mxu0 0.0
      %450 = vmatpush1.msra.mxu0 %v295
      %451 = vmatprep.subr.mxu0 0.0
      %452 = vmatpush1.msra.mxu0 %v298
      %453 = vmatprep.subr.mxu0 0.0
      %454 = vmatpush1.msra.mxu0 %v301
      %455 = vmatprep.subr.mxu0 0.0
      %456 = vmatpush1.msra.mxu0 %v304
      %457 = vmatprep.subr.mxu0 0.0
      %458 = vmatpush1.msra.mxu0 %v307
      %459 = vmatprep.subr.mxu0 0.0
      %460 = vmatpush1.msra.mxu0 %v310
      %461 = vmatprep.subr.mxu0 0.0
      %462 = vmatpush1.msra.mxu0 %v313
      %463 = vmatprep.subr.mxu0 0.0
      %464 = vmatpush1.msra.mxu0 %v316
      %465 = vmatprep.subr.mxu0 0.0
      %466 = vmatpush1.msra.mxu0 %v319
      %467 = vmatprep.subr.mxu0 0.0
      %468 = vmatpush1.msra.mxu0 %v322
      %469 = vmatprep.subr.mxu0 0.0
      %470 = vmatpush1.msra.mxu0 %v325
      %471 = vmatprep.subr.mxu0 0.0
      %472 = vmatpush1.msra.mxu0 %v328
      %473 = vmatprep.subr.mxu0 0.0
      %474 = vmatpush1.msra.mxu0 %v331
      %475 = vmatprep.subr.mxu0 0.0
      %476 = vmatpush1.msra.mxu0 %v334
      %477 = vmatprep.subr.mxu0 0.0
      %478 = vmatpush1.msra.mxu0 %v337
      %479 = vmatprep.subr.mxu0 0.0
      %480 = vmatpush1.msra.mxu0 %v340
      %481 = vmatprep.subr.mxu0 0.0
      %482 = vmatpush1.msra.mxu0 %v343
      %483 = vmatprep.subr.mxu0 0.0
      %484 = vmatpush1.msra.mxu0 %v346
      %485 = vmatprep.subr.mxu0 0.0
      %486 = vmatpush1.msra.mxu0 %v349
      %487 = vmatprep.subr.mxu0 0.0
      %488 = vmatpush1.msra.mxu0 %v352
      %489 = vmatprep.subr.mxu0 0.0
      %490 = vmatpush1.msra.mxu0 %v355
      %491 = vmatprep.mubr.f32.mxu0 %v259
      %492 = vmatmul.mubr.f32.gmra.mrb[0].mxu0 %v258
      %v493 = vpop.f32.mrb[0].mxu0
      %v494 = vadd.f32 0.0, %v493
      %v495 = vpop.f32.mrb[0].mxu0
      %496 = vdwg.mxu0
      %v497 = vld [vmem:[%s1 + $0x18] sm:$0xff]
      %v498 = vld [vmem:[%s1 + $0x20] sm:$0xff]
      %v499 = vld [vmem:[%s1 + $0x28] sm:$0xff]
      %v500 = vld [vmem:[%s1 + $0x48] sm:$0xff]
      %v501 = vld [vmem:[%s1 + $0x50] sm:$0xff]
      %v502 = vld [vmem:[%s1 + $0x58] sm:$0xff]
      %v503 = vld [vmem:[%s1 + $0x78] sm:$0xff]
      %v504 = vld [vmem:[%s1 + $0x80] sm:$0xff]
      %v505 = vld [vmem:[%s1 + $0x88] sm:$0xff]
      %v506 = vld [vmem:[%s1 + $0xa8] sm:$0xff]
      %v507 = vld [vmem:[%s1 + $0xb0] sm:$0xff]
      %v508 = vld [vmem:[%s1 + $0xb8] sm:$0xff]
      %v509 = vld [vmem:[%s1 + $0xd8] sm:$0xff]
      %v510 = vld [vmem:[%s1 + $0xe0] sm:$0xff]
      %v511 = vld [vmem:[%s1 + $0xe8] sm:$0xff]
      %v512 = vld [vmem:[%s1 + $0x108] sm:$0xff]
      %v513 = vld [vmem:[%s1 + $0x110] sm:$0xff]
      %v514 = vld [vmem:[%s1 + $0x118] sm:$0xff]
      %v515 = vld [vmem:[%s1 + $0x138] sm:$0xff]
      %v516 = vld [vmem:[%s1 + $0x140] sm:$0xff]
      %v517 = vld [vmem:[%s1 + $0x148] sm:$0xff]
      %v518 = vld [vmem:[%s1 + $0x168] sm:$0xff]
      %v519 = vld [vmem:[%s1 + $0x170] sm:$0xff]
      %v520 = vld [vmem:[%s1 + $0x178] sm:$0xff]
      %v521 = vld [vmem:[%s1 + $0x198] sm:$0xff]
      %v522 = vld [vmem:[%s1 + $0x1a0] sm:$0xff]
      %v523 = vld [vmem:[%s1 + $0x1a8] sm:$0xff]
      %v524 = vld [vmem:[%s1 + $0x1c8] sm:$0xff]
      %v525 = vld [vmem:[%s1 + $0x1d0] sm:$0xff]
      %v526 = vld [vmem:[%s1 + $0x1d8] sm:$0xff]
      %v527 = vld [vmem:[%s1 + $0x1f8] sm:$0xff]
      %v528 = vld [vmem:[%s1 + $0x200] sm:$0xff]
      %v529 = vld [vmem:[%s1 + $0x208] sm:$0xff]
      %v530 = vld [vmem:[%s1 + $0x228] sm:$0xff]
      %v531 = vld [vmem:[%s1 + $0x230] sm:$0xff]
      %v532 = vld [vmem:[%s1 + $0x238] sm:$0xff]
      %v533 = vld [vmem:[%s1 + $0x258] sm:$0xff]
      %v534 = vld [vmem:[%s1 + $0x260] sm:$0xff]
      %v535 = vld [vmem:[%s1 + $0x268] sm:$0xff]
      %v536 = vld [vmem:[%s1 + $0x288] sm:$0xff]
      %v537 = vld [vmem:[%s1 + $0x290] sm:$0xff]
      %v538 = vld [vmem:[%s1 + $0x298] sm:$0xff]
      %v539 = vld [vmem:[%s1 + $0x2b8] sm:$0xff]
      %v540 = vld [vmem:[%s1 + $0x2c0] sm:$0xff]
      %v541 = vld [vmem:[%s1 + $0x2c8] sm:$0xff]
      %v542 = vld [vmem:[%s1 + $0x2e8] sm:$0xff]
      %v543 = vld [vmem:[%s1 + $0x2f0] sm:$0xff]
      %v544 = vld [vmem:[%s1 + $0x2f8] sm:$0xff]
      %v545 = vld [vmem:[%s1 + $0x318] sm:$0xff]
      %v546 = vld [vmem:[%s1 + $0x320] sm:$0xff]
      %v547 = vld [vmem:[%s1 + $0x328] sm:$0xff]
      %v548 = vld [vmem:[%s1 + $0x348] sm:$0xff]
      %v549 = vld [vmem:[%s1 + $0x350] sm:$0xff]
      %v550 = vld [vmem:[%s1 + $0x358] sm:$0xff]
      %v551 = vld [vmem:[%s1 + $0x378] sm:$0xff]
      %v552 = vld [vmem:[%s1 + $0x380] sm:$0xff]
      %v553 = vld [vmem:[%s1 + $0x388] sm:$0xff]
      %v554 = vld [vmem:[%s1 + $0x3a8] sm:$0xff]
      %v555 = vld [vmem:[%s1 + $0x3b0] sm:$0xff]
      %v556 = vld [vmem:[%s1 + $0x3b8] sm:$0xff]
      %v557 = vld [vmem:[%s1 + $0x3d8] sm:$0xff]
      %v558 = vld [vmem:[%s1 + $0x3e0] sm:$0xff]
      %v559 = vld [vmem:[%s1 + $0x3e8] sm:$0xff]
      %v560 = vld [vmem:[%s1 + $0x408] sm:$0xff]
      %v561 = vld [vmem:[%s1 + $0x410] sm:$0xff]
      %v562 = vld [vmem:[%s1 + $0x418] sm:$0xff]
      %v563 = vld [vmem:[%s1 + $0x438] sm:$0xff]
      %v564 = vld [vmem:[%s1 + $0x440] sm:$0xff]
      %v565 = vld [vmem:[%s1 + $0x448] sm:$0xff]
      %v566 = vld [vmem:[%s1 + $0x468] sm:$0xff]
      %v567 = vld [vmem:[%s1 + $0x470] sm:$0xff]
      %v568 = vld [vmem:[%s1 + $0x478] sm:$0xff]
      %v569 = vld [vmem:[%s1 + $0x498] sm:$0xff]
      %v570 = vld [vmem:[%s1 + $0x4a0] sm:$0xff]
      %v571 = vld [vmem:[%s1 + $0x4a8] sm:$0xff]
      %v572 = vld [vmem:[%s1 + $0x4c8] sm:$0xff]
      %v573 = vld [vmem:[%s1 + $0x4d0] sm:$0xff]
      %v574 = vld [vmem:[%s1 + $0x4d8] sm:$0xff]
      %v575 = vld [vmem:[%s1 + $0x4f8] sm:$0xff]
      %v576 = vld [vmem:[%s1 + $0x500] sm:$0xff]
      %v577 = vld [vmem:[%s1 + $0x508] sm:$0xff]
      %v578 = vld [vmem:[%s1 + $0x528] sm:$0xff]
      %v579 = vld [vmem:[%s1 + $0x530] sm:$0xff]
      %v580 = vld [vmem:[%s1 + $0x538] sm:$0xff]
      %v581 = vld [vmem:[%s1 + $0x558] sm:$0xff]
      %v582 = vld [vmem:[%s1 + $0x560] sm:$0xff]
      %v583 = vld [vmem:[%s1 + $0x568] sm:$0xff]
      %v584 = vld [vmem:[%s1 + $0x588] sm:$0xff]
      %v585 = vld [vmem:[%s1 + $0x590] sm:$0xff]
      %v586 = vld [vmem:[%s1 + $0x598] sm:$0xff]
      %v587 = vld [vmem:[%s1 + $0x5b8] sm:$0xff]
      %v588 = vld [vmem:[%s1 + $0x5c0] sm:$0xff]
      %v589 = vld [vmem:[%s1 + $0x5c8] sm:$0xff]
      %v590 = vld [vmem:[%s1 + $0x5e8] sm:$0xff]
      %v591 = vld [vmem:[%s1 + $0x5f0] sm:$0xff]
      %v592 = vld [vmem:[%s1 + $0x5f8] sm:$0xff]
      %593 = vmatprep.subr.mxu0 %v498
      %594 = vmatpush1.msra.mxu0 %v497
      %595 = vmatprep.subr.mxu0 %v501
      %596 = vmatpush1.msra.mxu0 %v500
      %597 = vmatprep.subr.mxu0 %v504
      %598 = vmatpush1.msra.mxu0 %v503
      %599 = vmatprep.subr.mxu0 %v507
      %600 = vmatpush1.msra.mxu0 %v506
      %601 = vmatprep.subr.mxu0 %v510
      %602 = vmatpush1.msra.mxu0 %v509
      %603 = vmatprep.subr.mxu0 %v513
      %604 = vmatpush1.msra.mxu0 %v512
      %605 = vmatprep.subr.mxu0 %v516
      %606 = vmatpush1.msra.mxu0 %v515
      %607 = vmatprep.subr.mxu0 %v519
      %608 = vmatpush1.msra.mxu0 %v518
      %609 = vmatprep.subr.mxu0 %v522
      %610 = vmatpush1.msra.mxu0 %v521
      %611 = vmatprep.subr.mxu0 %v525
      %612 = vmatpush1.msra.mxu0 %v524
      %613 = vmatprep.subr.mxu0 %v528
      %614 = vmatpush1.msra.mxu0 %v527
      %615 = vmatprep.subr.mxu0 %v531
      %616 = vmatpush1.msra.mxu0 %v530
      %617 = vmatprep.subr.mxu0 %v534
      %618 = vmatpush1.msra.mxu0 %v533
      %619 = vmatprep.subr.mxu0 %v537
      %620 = vmatpush1.msra.mxu0 %v536
      %621 = vmatprep.subr.mxu0 %v540
      %622 = vmatpush1.msra.mxu0 %v539
      %623 = vmatprep.subr.mxu0 %v543
      %624 = vmatpush1.msra.mxu0 %v542
      %625 = vmatprep.subr.mxu0 %v546
      %626 = vmatpush1.msra.mxu0 %v545
      %627 = vmatprep.subr.mxu0 %v549
      %628 = vmatpush1.msra.mxu0 %v548
      %629 = vmatprep.subr.mxu0 %v552
      %630 = vmatpush1.msra.mxu0 %v551
      %631 = vmatprep.subr.mxu0 %v555
      %632 = vmatpush1.msra.mxu0 %v554
      %633 = vmatprep.subr.mxu0 %v558
      %634 = vmatpush1.msra.mxu0 %v557
      %635 = vmatprep.subr.mxu0 %v561
      %636 = vmatpush1.msra.mxu0 %v560
      %637 = vmatprep.subr.mxu0 %v564
      %638 = vmatpush1.msra.mxu0 %v563
      %639 = vmatprep.subr.mxu0 %v567
      %640 = vmatpush1.msra.mxu0 %v566
      %641 = vmatprep.subr.mxu0 %v570
      %642 = vmatpush1.msra.mxu0 %v569
      %643 = vmatprep.subr.mxu0 %v573
      %644 = vmatpush1.msra.mxu0 %v572
      %645 = vmatprep.subr.mxu0 %v576
      %646 = vmatpush1.msra.mxu0 %v575
      %647 = vmatprep.subr.mxu0 %v579
      %648 = vmatpush1.msra.mxu0 %v578
      %649 = vmatprep.subr.mxu0 %v582
      %650 = vmatpush1.msra.mxu0 %v581
      %651 = vmatprep.subr.mxu0 %v585
      %652 = vmatpush1.msra.mxu0 %v584
      %653 = vmatprep.subr.mxu0 %v588
      %654 = vmatpush1.msra.mxu0 %v587
      %655 = vmatprep.subr.mxu0 %v591
      %656 = vmatpush1.msra.mxu0 %v590
      %657 = vmatprep.mubr.f32.mxu0 %v259
      %658 = vmatmul.mubr.f32.gmra.mrb[0].mxu0 %v258
      %v659 = vpop.f32.mrb[0].mxu0
      %v660 = vadd.f32 0.0, %v659
      %v661 = vpop.f32.mrb[0].mxu0
      %v662 = vadd.f32 0.0, %v661
      %663 = vdwg.mxu0
      %664 = vmatprep.subr.mxu0 0.0
      %665 = vmatpush1.msra.mxu0 %v499
      %666 = vmatprep.subr.mxu0 0.0
      %667 = vmatpush1.msra.mxu0 %v502
      %668 = vmatprep.subr.mxu0 0.0
      %669 = vmatpush1.msra.mxu0 %v505
      %670 = vmatprep.subr.mxu0 0.0
      %671 = vmatpush1.msra.mxu0 %v508
      %672 = vmatprep.subr.mxu0 0.0
      %673 = vmatpush1.msra.mxu0 %v511
      %674 = vmatprep.subr.mxu0 0.0
      %675 = vmatpush1.msra.mxu0 %v514
      %676 = vmatprep.subr.mxu0 0.0
      %677 = vmatpush1.msra.mxu0 %v517
      %678 = vmatprep.subr.mxu0 0.0
      %679 = vmatpush1.msra.mxu0 %v520
      %680 = vmatprep.subr.mxu0 0.0
      %681 = vmatpush1.msra.mxu0 %v523
      %682 = vmatprep.subr.mxu0 0.0
      %683 = vmatpush1.msra.mxu0 %v526
      %684 = vmatprep.subr.mxu0 0.0
      %685 = vmatpush1.msra.mxu0 %v529
      %686 = vmatprep.subr.mxu0 0.0
      %687 = vmatpush1.msra.mxu0 %v532
      %688 = vmatprep.subr.mxu0 0.0
      %689 = vmatpush1.msra.mxu0 %v535
      %690 = vmatprep.subr.mxu0 0.0
      %691 = vmatpush1.msra.mxu0 %v538
      %692 = vmatprep.subr.mxu0 0.0
      %693 = vmatpush1.msra.mxu0 %v541
      %694 = vmatprep.subr.mxu0 0.0
      %695 = vmatpush1.msra.mxu0 %v544
      %696 = vmatprep.subr.mxu0 0.0
      %697 = vmatpush1.msra.mxu0 %v547
      %698 = vmatprep.subr.mxu0 0.0
      %699 = vmatpush1.msra.mxu0 %v550
      %700 = vmatprep.subr.mxu0 0.0
      %701 = vmatpush1.msra.mxu0 %v553
      %702 = vmatprep.subr.mxu0 0.0
      %703 = vmatpush1.msra.mxu0 %v556
      %704 = vmatprep.subr.mxu0 0.0
      %705 = vmatpush1.msra.mxu0 %v559
      %706 = vmatprep.subr.mxu0 0.0
      %707 = vmatpush1.msra.mxu0 %v562
      %708 = vmatprep.subr.mxu0 0.0
      %709 = vmatpush1.msra.mxu0 %v565
      %710 = vmatprep.subr.mxu0 0.0
      %711 = vmatpush1.msra.mxu0 %v568
      %712 = vmatprep.subr.mxu0 0.0
      %713 = vmatpush1.msra.mxu0 %v571
      %714 = vmatprep.subr.mxu0 0.0
      %715 = vmatpush1.msra.mxu0 %v574
      %716 = vmatprep.subr.mxu0 0.0
      %717 = vmatpush1.msra.mxu0 %v577
      %718 = vmatprep.subr.mxu0 0.0
      %719 = vmatpush1.msra.mxu0 %v580
      %720 = vmatprep.subr.mxu0 0.0
      %721 = vmatpush1.msra.mxu0 %v583
      %722 = vmatprep.subr.mxu0 0.0
      %723 = vmatpush1.msra.mxu0 %v586
      %724 = vmatprep.subr.mxu0 0.0
      %725 = vmatpush1.msra.mxu0 %v589
      %726 = vmatprep.subr.mxu0 0.0
      %727 = vmatpush1.msra.mxu0 %v592
      %728 = vmatprep.mubr.f32.mxu0 %v259
      %729 = vmatmul.mubr.f32.gmra.mrb[0].mxu0 %v258
      %v730 = vpop.f32.mrb[0].mxu0
      %v731 = vadd.f32 0.0, %v730
      %v732 = vpop.f32.mrb[0].mxu0
      %733 = vdwg.mxu0
      %v734 = vmul.f32 %v423, %v423
      %v735 = vmul.f32 %v425, %v425
      %v736 = vmul.f32 %v494, %v494
      %v737 = vmul.f32 %v660, %v660
      %v738 = vmul.f32 %v662, %v662
      %v739 = vmul.f32 %v731, %v731
      %v740 = vadd.f32 %v734, %v737
      %v741 = vadd.f32 %v735, %v738
      %v742 = vadd.f32 %v736, %v739
      %743 = vst [vmem:[%s252] sm:$0xff] %v740
      %744 = vst [vmem:[%s252 + $0x8] sm:$0xff] %v741
      %745 = vst [vmem:[%s252 + $0x10] sm:$0xff] %v742
      %v746 = vld [vmem:[%s247] sm:$0xff]
      %v747 = vld [vmem:[%s247 + $0x8] sm:$0xff]
      %v748 = vld [vmem:[%s247 + $0x10] sm:$0xff]
      %v749 = vld [vmem:[%s247 + $0x18] sm:$0xff]
      %v750 = vld [vmem:[%s3] sm:$0xff]
      %v751 = vld [vmem:[%s3 + $0x8] sm:$0xff]
      %v752 = vld [vmem:[%s3 + $0x10] sm:$0xff]
      %v753 = vld [vmem:[%s3 + $0x30] sm:$0xff]
      %v754 = vld [vmem:[%s3 + $0x38] sm:$0xff]
      %v755 = vld [vmem:[%s3 + $0x40] sm:$0xff]
      %v756 = vld [vmem:[%s3 + $0x60] sm:$0xff]
      %v757 = vld [vmem:[%s3 + $0x68] sm:$0xff]
      %v758 = vld [vmem:[%s3 + $0x70] sm:$0xff]
      %v759 = vld [vmem:[%s3 + $0x90] sm:$0xff]
      %v760 = vld [vmem:[%s3 + $0x98] sm:$0xff]
      %v761 = vld [vmem:[%s3 + $0xa0] sm:$0xff]
      %v762 = vld [vmem:[%s3 + $0xc0] sm:$0xff]
      %v763 = vld [vmem:[%s3 + $0xc8] sm:$0xff]
      %v764 = vld [vmem:[%s3 + $0xd0] sm:$0xff]
      %v765 = vld [vmem:[%s3 + $0xf0] sm:$0xff]
      %v766 = vld [vmem:[%s3 + $0xf8] sm:$0xff]
      %v767 = vld [vmem:[%s3 + $0x100] sm:$0xff]
      %v768 = vld [vmem:[%s3 + $0x120] sm:$0xff]
      %v769 = vld [vmem:[%s3 + $0x128] sm:$0xff]
      %v770 = vld [vmem:[%s3 + $0x130] sm:$0xff]
      %v771 = vld [vmem:[%s3 + $0x150] sm:$0xff]
      %v772 = vld [vmem:[%s3 + $0x158] sm:$0xff]
      %v773 = vld [vmem:[%s3 + $0x160] sm:$0xff]
      %v774 = vld [vmem:[%s3 + $0x180] sm:$0xff]
      %v775 = vld [vmem:[%s3 + $0x188] sm:$0xff]
      %v776 = vld [vmem:[%s3 + $0x190] sm:$0xff]
      %v777 = vld [vmem:[%s3 + $0x1b0] sm:$0xff]
      %v778 = vld [vmem:[%s3 + $0x1b8] sm:$0xff]
      %v779 = vld [vmem:[%s3 + $0x1c0] sm:$0xff]
      %v780 = vld [vmem:[%s3 + $0x1e0] sm:$0xff]
      %v781 = vld [vmem:[%s3 + $0x1e8] sm:$0xff]
      %v782 = vld [vmem:[%s3 + $0x1f0] sm:$0xff]
      %v783 = vld [vmem:[%s3 + $0x210] sm:$0xff]
      %v784 = vld [vmem:[%s3 + $0x218] sm:$0xff]
      %v785 = vld [vmem:[%s3 + $0x220] sm:$0xff]
      %v786 = vld [vmem:[%s3 + $0x240] sm:$0xff]
      %v787 = vld [vmem:[%s3 + $0x248] sm:$0xff]
      %v788 = vld [vmem:[%s3 + $0x250] sm:$0xff]
      %v789 = vld [vmem:[%s3 + $0x270] sm:$0xff]
      %v790 = vld [vmem:[%s3 + $0x278] sm:$0xff]
      %v791 = vld [vmem:[%s3 + $0x280] sm:$0xff]
      %v792 = vld [vmem:[%s3 + $0x2a0] sm:$0xff]
      %v793 = vld [vmem:[%s3 + $0x2a8] sm:$0xff]
      %v794 = vld [vmem:[%s3 + $0x2b0] sm:$0xff]
      %v795 = vld [vmem:[%s3 + $0x2d0] sm:$0xff]
      %v796 = vld [vmem:[%s3 + $0x2d8] sm:$0xff]
      %v797 = vld [vmem:[%s3 + $0x2e0] sm:$0xff]
      %v798 = vld [vmem:[%s3 + $0x300] sm:$0xff]
      %v799 = vld [vmem:[%s3 + $0x308] sm:$0xff]
      %v800 = vld [vmem:[%s3 + $0x310] sm:$0xff]
      %v801 = vld [vmem:[%s3 + $0x330] sm:$0xff]
      %v802 = vld [vmem:[%s3 + $0x338] sm:$0xff]
      %v803 = vld [vmem:[%s3 + $0x340] sm:$0xff]
      %v804 = vld [vmem:[%s3 + $0x360] sm:$0xff]
      %v805 = vld [vmem:[%s3 + $0x368] sm:$0xff]
      %v806 = vld [vmem:[%s3 + $0x370] sm:$0xff]
      %v807 = vld [vmem:[%s3 + $0x390] sm:$0xff]
      %v808 = vld [vmem:[%s3 + $0x398] sm:$0xff]
      %v809 = vld [vmem:[%s3 + $0x3a0] sm:$0xff]
      %v810 = vld [vmem:[%s3 + $0x3c0] sm:$0xff]
      %v811 = vld [vmem:[%s3 + $0x3c8] sm:$0xff]
      %v812 = vld [vmem:[%s3 + $0x3d0] sm:$0xff]
      %v813 = vld [vmem:[%s3 + $0x3f0] sm:$0xff]
      %v814 = vld [vmem:[%s3 + $0x3f8] sm:$0xff]
      %v815 = vld [vmem:[%s3 + $0x400] sm:$0xff]
      %v816 = vld [vmem:[%s3 + $0x420] sm:$0xff]
      %v817 = vld [vmem:[%s3 + $0x428] sm:$0xff]
      %v818 = vld [vmem:[%s3 + $0x430] sm:$0xff]
      %v819 = vld [vmem:[%s3 + $0x450] sm:$0xff]
      %v820 = vld [vmem:[%s3 + $0x458] sm:$0xff]
      %v821 = vld [vmem:[%s3 + $0x460] sm:$0xff]
      %v822 = vld [vmem:[%s3 + $0x480] sm:$0xff]
      %v823 = vld [vmem:[%s3 + $0x488] sm:$0xff]
      %v824 = vld [vmem:[%s3 + $0x490] sm:$0xff]
      %v825 = vld [vmem:[%s3 + $0x4b0] sm:$0xff]
      %v826 = vld [vmem:[%s3 + $0x4b8] sm:$0xff]
      %v827 = vld [vmem:[%s3 + $0x4c0] sm:$0xff]
      %v828 = vld [vmem:[%s3 + $0x4e0] sm:$0xff]
      %v829 = vld [vmem:[%s3 + $0x4e8] sm:$0xff]
      %v830 = vld [vmem:[%s3 + $0x4f0] sm:$0xff]
      %v831 = vld [vmem:[%s3 + $0x510] sm:$0xff]
      %v832 = vld [vmem:[%s3 + $0x518] sm:$0xff]
      %v833 = vld [vmem:[%s3 + $0x520] sm:$0xff]
      %v834 = vld [vmem:[%s3 + $0x540] sm:$0xff]
      %v835 = vld [vmem:[%s3 + $0x548] sm:$0xff]
      %v836 = vld [vmem:[%s3 + $0x550] sm:$0xff]
      %v837 = vld [vmem:[%s3 + $0x570] sm:$0xff]
      %v838 = vld [vmem:[%s3 + $0x578] sm:$0xff]
      %v839 = vld [vmem:[%s3 + $0x580] sm:$0xff]
      %v840 = vld [vmem:[%s3 + $0x5a0] sm:$0xff]
      %v841 = vld [vmem:[%s3 + $0x5a8] sm:$0xff]
      %v842 = vld [vmem:[%s3 + $0x5b0] sm:$0xff]
      %v843 = vld [vmem:[%s3 + $0x5d0] sm:$0xff]
      %v844 = vld [vmem:[%s3 + $0x5d8] sm:$0xff]
      %v845 = vld [vmem:[%s3 + $0x5e0] sm:$0xff]
      %v846 = vld [vmem:[%s3 + $0x600] sm:$0xff]
      %v847 = vld [vmem:[%s3 + $0x608] sm:$0xff]
      %v848 = vld [vmem:[%s3 + $0x610] sm:$0xff]
      %v849 = vld [vmem:[%s3 + $0x630] sm:$0xff]
      %v850 = vld [vmem:[%s3 + $0x638] sm:$0xff]
      %v851 = vld [vmem:[%s3 + $0x640] sm:$0xff]
      %v852 = vld [vmem:[%s3 + $0x660] sm:$0xff]
      %v853 = vld [vmem:[%s3 + $0x668] sm:$0xff]
      %v854 = vld [vmem:[%s3 + $0x670] sm:$0xff]
      %v855 = vld [vmem:[%s3 + $0x690] sm:$0xff]
      %v856 = vld [vmem:[%s3 + $0x698] sm:$0xff]
      %v857 = vld [vmem:[%s3 + $0x6a0] sm:$0xff]
      %v858 = vld [vmem:[%s3 + $0x6c0] sm:$0xff]
      %v859 = vld [vmem:[%s3 + $0x6c8] sm:$0xff]
      %v860 = vld [vmem:[%s3 + $0x6d0] sm:$0xff]
      %v861 = vld [vmem:[%s3 + $0x6f0] sm:$0xff]
      %v862 = vld [vmem:[%s3 + $0x6f8] sm:$0xff]
      %v863 = vld [vmem:[%s3 + $0x700] sm:$0xff]
      %v864 = vld [vmem:[%s3 + $0x720] sm:$0xff]
      %v865 = vld [vmem:[%s3 + $0x728] sm:$0xff]
      %v866 = vld [vmem:[%s3 + $0x730] sm:$0xff]
      %v867 = vld [vmem:[%s3 + $0x750] sm:$0xff]
      %v868 = vld [vmem:[%s3 + $0x758] sm:$0xff]
      %v869 = vld [vmem:[%s3 + $0x760] sm:$0xff]
      %v870 = vld [vmem:[%s3 + $0x780] sm:$0xff]
      %v871 = vld [vmem:[%s3 + $0x788] sm:$0xff]
      %v872 = vld [vmem:[%s3 + $0x790] sm:$0xff]
      %v873 = vld [vmem:[%s3 + $0x7b0] sm:$0xff]
      %v874 = vld [vmem:[%s3 + $0x7b8] sm:$0xff]
      %v875 = vld [vmem:[%s3 + $0x7c0] sm:$0xff]
      %v876 = vld [vmem:[%s3 + $0x7e0] sm:$0xff]
      %v877 = vld [vmem:[%s3 + $0x7e8] sm:$0xff]
      %v878 = vld [vmem:[%s3 + $0x7f0] sm:$0xff]
      %v879 = vld [vmem:[%s3 + $0x810] sm:$0xff]
      %v880 = vld [vmem:[%s3 + $0x818] sm:$0xff]
      %v881 = vld [vmem:[%s3 + $0x820] sm:$0xff]
      %v882 = vld [vmem:[%s3 + $0x840] sm:$0xff]
      %v883 = vld [vmem:[%s3 + $0x848] sm:$0xff]
      %v884 = vld [vmem:[%s3 + $0x850] sm:$0xff]
      %v885 = vld [vmem:[%s3 + $0x870] sm:$0xff]
      %v886 = vld [vmem:[%s3 + $0x878] sm:$0xff]
      %v887 = vld [vmem:[%s3 + $0x880] sm:$0xff]
      %v888 = vld [vmem:[%s3 + $0x8a0] sm:$0xff]
      %v889 = vld [vmem:[%s3 + $0x8a8] sm:$0xff]
      %v890 = vld [vmem:[%s3 + $0x8b0] sm:$0xff]
      %v891 = vld [vmem:[%s3 + $0x8d0] sm:$0xff]
      %v892 = vld [vmem:[%s3 + $0x8d8] sm:$0xff]
      %v893 = vld [vmem:[%s3 + $0x8e0] sm:$0xff]
      %v894 = vld [vmem:[%s3 + $0x900] sm:$0xff]
      %v895 = vld [vmem:[%s3 + $0x908] sm:$0xff]
      %v896 = vld [vmem:[%s3 + $0x910] sm:$0xff]
      %v897 = vld [vmem:[%s3 + $0x930] sm:$0xff]
      %v898 = vld [vmem:[%s3 + $0x938] sm:$0xff]
      %v899 = vld [vmem:[%s3 + $0x940] sm:$0xff]
      %v900 = vld [vmem:[%s3 + $0x960] sm:$0xff]
      %v901 = vld [vmem:[%s3 + $0x968] sm:$0xff]
      %v902 = vld [vmem:[%s3 + $0x970] sm:$0xff]
      %v903 = vld [vmem:[%s3 + $0x990] sm:$0xff]
      %v904 = vld [vmem:[%s3 + $0x998] sm:$0xff]
      %v905 = vld [vmem:[%s3 + $0x9a0] sm:$0xff]
      %v906 = vld [vmem:[%s3 + $0x9c0] sm:$0xff]
      %v907 = vld [vmem:[%s3 + $0x9c8] sm:$0xff]
      %v908 = vld [vmem:[%s3 + $0x9d0] sm:$0xff]
      %v909 = vld [vmem:[%s3 + $0x9f0] sm:$0xff]
      %v910 = vld [vmem:[%s3 + $0x9f8] sm:$0xff]
      %v911 = vld [vmem:[%s3 + $0xa00] sm:$0xff]
      %v912 = vld [vmem:[%s3 + $0xa20] sm:$0xff]
      %v913 = vld [vmem:[%s3 + $0xa28] sm:$0xff]
      %v914 = vld [vmem:[%s3 + $0xa30] sm:$0xff]
      %v915 = vld [vmem:[%s3 + $0xa50] sm:$0xff]
      %v916 = vld [vmem:[%s3 + $0xa58] sm:$0xff]
      %v917 = vld [vmem:[%s3 + $0xa60] sm:$0xff]
      %v918 = vld [vmem:[%s3 + $0xa80] sm:$0xff]
      %v919 = vld [vmem:[%s3 + $0xa88] sm:$0xff]
      %v920 = vld [vmem:[%s3 + $0xa90] sm:$0xff]
      %v921 = vld [vmem:[%s3 + $0xab0] sm:$0xff]
      %v922 = vld [vmem:[%s3 + $0xab8] sm:$0xff]
      %v923 = vld [vmem:[%s3 + $0xac0] sm:$0xff]
      %v924 = vld [vmem:[%s3 + $0xae0] sm:$0xff]
      %v925 = vld [vmem:[%s3 + $0xae8] sm:$0xff]
      %v926 = vld [vmem:[%s3 + $0xaf0] sm:$0xff]
      %v927 = vld [vmem:[%s3 + $0xb10] sm:$0xff]
      %v928 = vld [vmem:[%s3 + $0xb18] sm:$0xff]
      %v929 = vld [vmem:[%s3 + $0xb20] sm:$0xff]
      %v930 = vld [vmem:[%s3 + $0xb40] sm:$0xff]
      %v931 = vld [vmem:[%s3 + $0xb48] sm:$0xff]
      %v932 = vld [vmem:[%s3 + $0xb50] sm:$0xff]
      %v933 = vld [vmem:[%s3 + $0xb70] sm:$0xff]
      %v934 = vld [vmem:[%s3 + $0xb78] sm:$0xff]
      %v935 = vld [vmem:[%s3 + $0xb80] sm:$0xff]
      %v936 = vld [vmem:[%s3 + $0xba0] sm:$0xff]
      %v937 = vld [vmem:[%s3 + $0xba8] sm:$0xff]
      %v938 = vld [vmem:[%s3 + $0xbb0] sm:$0xff]
      %v939 = vld [vmem:[%s3 + $0xbd0] sm:$0xff]
      %v940 = vld [vmem:[%s3 + $0xbd8] sm:$0xff]
      %v941 = vld [vmem:[%s3 + $0xbe0] sm:$0xff]
      %942 = vmatprep.subr.mxu0 %v751
      %943 = vmatpush1.msra.mxu0 %v750
      %944 = vmatprep.subr.mxu0 %v754
      %945 = vmatpush1.msra.mxu0 %v753
      %946 = vmatprep.subr.mxu0 %v757
      %947 = vmatpush1.msra.mxu0 %v756
      %948 = vmatprep.subr.mxu0 %v760
      %949 = vmatpush1.msra.mxu0 %v759
      %950 = vmatprep.subr.mxu0 %v763
      %951 = vmatpush1.msra.mxu0 %v762
      %952 = vmatprep.subr.mxu0 %v766
      %953 = vmatpush1.msra.mxu0 %v765
      %954 = vmatprep.subr.mxu0 %v769
      %955 = vmatpush1.msra.mxu0 %v768
      %956 = vmatprep.subr.mxu0 %v772
      %957 = vmatpush1.msra.mxu0 %v771
      %958 = vmatprep.subr.mxu0 %v775
      %959 = vmatpush1.msra.mxu0 %v774
      %960 = vmatprep.subr.mxu0 %v778
      %961 = vmatpush1.msra.mxu0 %v777
      %962 = vmatprep.subr.mxu0 %v781
      %963 = vmatpush1.msra.mxu0 %v780
      %964 = vmatprep.subr.mxu0 %v784
      %965 = vmatpush1.msra.mxu0 %v783
      %966 = vmatprep.subr.mxu0 %v787
      %967 = vmatpush1.msra.mxu0 %v786
      %968 = vmatprep.subr.mxu0 %v790
      %969 = vmatpush1.msra.mxu0 %v789
      %970 = vmatprep.subr.mxu0 %v793
      %971 = vmatpush1.msra.mxu0 %v792
      %972 = vmatprep.subr.mxu0 %v796
      %973 = vmatpush1.msra.mxu0 %v795
      %974 = vmatprep.subr.mxu0 %v799
      %975 = vmatpush1.msra.mxu0 %v798
      %976 = vmatprep.subr.mxu0 %v802
      %977 = vmatpush1.msra.mxu0 %v801
      %978 = vmatprep.subr.mxu0 %v805
      %979 = vmatpush1.msra.mxu0 %v804
      %980 = vmatprep.subr.mxu0 %v808
      %981 = vmatpush1.msra.mxu0 %v807
      %982 = vmatprep.subr.mxu0 %v811
      %983 = vmatpush1.msra.mxu0 %v810
      %984 = vmatprep.subr.mxu0 %v814
      %985 = vmatpush1.msra.mxu0 %v813
      %986 = vmatprep.subr.mxu0 %v817
      %987 = vmatpush1.msra.mxu0 %v816
      %988 = vmatprep.subr.mxu0 %v820
      %989 = vmatpush1.msra.mxu0 %v819
      %990 = vmatprep.subr.mxu0 %v823
      %991 = vmatpush1.msra.mxu0 %v822
      %992 = vmatprep.subr.mxu0 %v826
      %993 = vmatpush1.msra.mxu0 %v825
      %994 = vmatprep.subr.mxu0 %v829
      %995 = vmatpush1.msra.mxu0 %v828
      %996 = vmatprep.subr.mxu0 %v832
      %997 = vmatpush1.msra.mxu0 %v831
      %998 = vmatprep.subr.mxu0 %v835
      %999 = vmatpush1.msra.mxu0 %v834
      %1000 = vmatprep.subr.mxu0 %v838
      %1001 = vmatpush1.msra.mxu0 %v837
      %1002 = vmatprep.subr.mxu0 %v841
      %1003 = vmatpush1.msra.mxu0 %v840
      %1004 = vmatprep.subr.mxu0 %v844
      %1005 = vmatpush1.msra.mxu0 %v843
      %1006 = vmatprep.mubr.f32.mxu0 %v747
      %1007 = vmatmul.mubr.f32.gmra.mrb[0].mxu0 %v746
      %v1008 = vpop.f32.mrb[0].mxu0
      %v1009 = vadd.f32 0.0, %v1008
      %v1010 = vpop.f32.mrb[0].mxu0
      %v1011 = vadd.f32 0.0, %v1010
      %1012 = vdwg.mxu0
      %1013 = vmatprep.subr.mxu0 %v847
      %1014 = vmatpush1.msra.mxu0 %v846
      %1015 = vmatprep.subr.mxu0 %v850
      %1016 = vmatpush1.msra.mxu0 %v849
      %1017 = vmatprep.subr.mxu0 %v853
      %1018 = vmatpush1.msra.mxu0 %v852
      %1019 = vmatprep.subr.mxu0 %v856
      %1020 = vmatpush1.msra.mxu0 %v855
      %1021 = vmatprep.subr.mxu0 %v859
      %1022 = vmatpush1.msra.mxu0 %v858
      %1023 = vmatprep.subr.mxu0 %v862
      %1024 = vmatpush1.msra.mxu0 %v861
      %1025 = vmatprep.subr.mxu0 %v865
      %1026 = vmatpush1.msra.mxu0 %v864
      %1027 = vmatprep.subr.mxu0 %v868
      %1028 = vmatpush1.msra.mxu0 %v867
      %1029 = vmatprep.subr.mxu0 %v871
      %1030 = vmatpush1.msra.mxu0 %v870
      %1031 = vmatprep.subr.mxu0 %v874
      %1032 = vmatpush1.msra.mxu0 %v873
      %1033 = vmatprep.subr.mxu0 %v877
      %1034 = vmatpush1.msra.mxu0 %v876
      %1035 = vmatprep.subr.mxu0 %v880
      %1036 = vmatpush1.msra.mxu0 %v879
      %1037 = vmatprep.subr.mxu0 %v883
      %1038 = vmatpush1.msra.mxu0 %v882
      %1039 = vmatprep.subr.mxu0 %v886
      %1040 = vmatpush1.msra.mxu0 %v885
      %1041 = vmatprep.subr.mxu0 %v889
      %1042 = vmatpush1.msra.mxu0 %v888
      %1043 = vmatprep.subr.mxu0 %v892
      %1044 = vmatpush1.msra.mxu0 %v891
      %1045 = vmatprep.subr.mxu0 %v895
      %1046 = vmatpush1.msra.mxu0 %v894
      %1047 = vmatprep.subr.mxu0 %v898
      %1048 = vmatpush1.msra.mxu0 %v897
      %1049 = vmatprep.subr.mxu0 %v901
      %1050 = vmatpush1.msra.mxu0 %v900
      %1051 = vmatprep.subr.mxu0 %v904
      %1052 = vmatpush1.msra.mxu0 %v903
      %1053 = vmatprep.subr.mxu0 %v907
      %1054 = vmatpush1.msra.mxu0 %v906
      %1055 = vmatprep.subr.mxu0 %v910
      %1056 = vmatpush1.msra.mxu0 %v909
      %1057 = vmatprep.subr.mxu0 %v913
      %1058 = vmatpush1.msra.mxu0 %v912
      %1059 = vmatprep.subr.mxu0 %v916
      %1060 = vmatpush1.msra.mxu0 %v915
      %1061 = vmatprep.subr.mxu0 %v919
      %1062 = vmatpush1.msra.mxu0 %v918
      %1063 = vmatprep.subr.mxu0 %v922
      %1064 = vmatpush1.msra.mxu0 %v921
      %1065 = vmatprep.subr.mxu0 %v925
      %1066 = vmatpush1.msra.mxu0 %v924
      %1067 = vmatprep.subr.mxu0 %v928
      %1068 = vmatpush1.msra.mxu0 %v927
      %1069 = vmatprep.subr.mxu0 %v931
      %1070 = vmatpush1.msra.mxu0 %v930
      %1071 = vmatprep.subr.mxu0 %v934
      %1072 = vmatpush1.msra.mxu0 %v933
      %1073 = vmatprep.subr.mxu0 %v937
      %1074 = vmatpush1.msra.mxu0 %v936
      %1075 = vmatprep.subr.mxu0 %v940
      %1076 = vmatpush1.msra.mxu0 %v939
      %1077 = vmatprep.mubr.f32.mxu0 %v749
      %1078 = vmatmul.mubr.f32.gmra.mrb[0].mxu0 %v748
      %v1079 = vpop.f32.mrb[0].mxu0
      %v1080 = vadd.f32 %v1009, %v1079
      %v1081 = vpop.f32.mrb[0].mxu0
      %v1082 = vadd.f32 %v1011, %v1081
      %1083 = vdwg.mxu0
      %1084 = vmatprep.subr.mxu0 0.0
      %1085 = vmatpush1.msra.mxu0 %v752
      %1086 = vmatprep.subr.mxu0 0.0
      %1087 = vmatpush1.msra.mxu0 %v755
      %1088 = vmatprep.subr.mxu0 0.0
      %1089 = vmatpush1.msra.mxu0 %v758
      %1090 = vmatprep.subr.mxu0 0.0
      %1091 = vmatpush1.msra.mxu0 %v761
      %1092 = vmatprep.subr.mxu0 0.0
      %1093 = vmatpush1.msra.mxu0 %v764
      %1094 = vmatprep.subr.mxu0 0.0
      %1095 = vmatpush1.msra.mxu0 %v767
      %1096 = vmatprep.subr.mxu0 0.0
      %1097 = vmatpush1.msra.mxu0 %v770
      %1098 = vmatprep.subr.mxu0 0.0
      %1099 = vmatpush1.msra.mxu0 %v773
      %1100 = vmatprep.subr.mxu0 0.0
      %1101 = vmatpush1.msra.mxu0 %v776
      %1102 = vmatprep.subr.mxu0 0.0
      %1103 = vmatpush1.msra.mxu0 %v779
      %1104 = vmatprep.subr.mxu0 0.0
      %1105 = vmatpush1.msra.mxu0 %v782
      %1106 = vmatprep.subr.mxu0 0.0
      %1107 = vmatpush1.msra.mxu0 %v785
      %1108 = vmatprep.subr.mxu0 0.0
      %1109 = vmatpush1.msra.mxu0 %v788
      %1110 = vmatprep.subr.mxu0 0.0
      %1111 = vmatpush1.msra.mxu0 %v791
      %1112 = vmatprep.subr.mxu0 0.0
      %1113 = vmatpush1.msra.mxu0 %v794
      %1114 = vmatprep.subr.mxu0 0.0
      %1115 = vmatpush1.msra.mxu0 %v797
      %1116 = vmatprep.subr.mxu0 0.0
      %1117 = vmatpush1.msra.mxu0 %v800
      %1118 = vmatprep.subr.mxu0 0.0
      %1119 = vmatpush1.msra.mxu0 %v803
      %1120 = vmatprep.subr.mxu0 0.0
      %1121 = vmatpush1.msra.mxu0 %v806
      %1122 = vmatprep.subr.mxu0 0.0
      %1123 = vmatpush1.msra.mxu0 %v809
      %1124 = vmatprep.subr.mxu0 0.0
      %1125 = vmatpush1.msra.mxu0 %v812
      %1126 = vmatprep.subr.mxu0 0.0
      %1127 = vmatpush1.msra.mxu0 %v815
      %1128 = vmatprep.subr.mxu0 0.0
      %1129 = vmatpush1.msra.mxu0 %v818
      %1130 = vmatprep.subr.mxu0 0.0
      %1131 = vmatpush1.msra.mxu0 %v821
      %1132 = vmatprep.subr.mxu0 0.0
      %1133 = vmatpush1.msra.mxu0 %v824
      %1134 = vmatprep.subr.mxu0 0.0
      %1135 = vmatpush1.msra.mxu0 %v827
      %1136 = vmatprep.subr.mxu0 0.0
      %1137 = vmatpush1.msra.mxu0 %v830
      %1138 = vmatprep.subr.mxu0 0.0
      %1139 = vmatpush1.msra.mxu0 %v833
      %1140 = vmatprep.subr.mxu0 0.0
      %1141 = vmatpush1.msra.mxu0 %v836
      %1142 = vmatprep.subr.mxu0 0.0
      %1143 = vmatpush1.msra.mxu0 %v839
      %1144 = vmatprep.subr.mxu0 0.0
      %1145 = vmatpush1.msra.mxu0 %v842
      %1146 = vmatprep.subr.mxu0 0.0
      %1147 = vmatpush1.msra.mxu0 %v845
      %1148 = vmatprep.mubr.f32.mxu0 %v747
      %1149 = vmatmul.mubr.f32.gmra.mrb[0].mxu0 %v746
      %v1150 = vpop.f32.mrb[0].mxu0
      %v1151 = vadd.f32 0.0, %v1150
      %v1152 = vpop.f32.mrb[0].mxu0
      %1153 = vdwg.mxu0
      %1154 = vmatprep.subr.mxu0 0.0
      %1155 = vmatpush1.msra.mxu0 %v848
      %1156 = vmatprep.subr.mxu0 0.0
      %1157 = vmatpush1.msra.mxu0 %v851
      %1158 = vmatprep.subr.mxu0 0.0
      %1159 = vmatpush1.msra.mxu0 %v854
      %1160 = vmatprep.subr.mxu0 0.0
      %1161 = vmatpush1.msra.mxu0 %v857
      %1162 = vmatprep.subr.mxu0 0.0
      %1163 = vmatpush1.msra.mxu0 %v860
      %1164 = vmatprep.subr.mxu0 0.0
      %1165 = vmatpush1.msra.mxu0 %v863
      %1166 = vmatprep.subr.mxu0 0.0
      %1167 = vmatpush1.msra.mxu0 %v866
      %1168 = vmatprep.subr.mxu0 0.0
      %1169 = vmatpush1.msra.mxu0 %v869
      %1170 = vmatprep.subr.mxu0 0.0
      %1171 = vmatpush1.msra.mxu0 %v872
      %1172 = vmatprep.subr.mxu0 0.0
      %1173 = vmatpush1.msra.mxu0 %v875
      %1174 = vmatprep.subr.mxu0 0.0
      %1175 = vmatpush1.msra.mxu0 %v878
      %1176 = vmatprep.subr.mxu0 0.0
      %1177 = vmatpush1.msra.mxu0 %v881
      %1178 = vmatprep.subr.mxu0 0.0
      %1179 = vmatpush1.msra.mxu0 %v884
      %1180 = vmatprep.subr.mxu0 0.0
      %1181 = vmatpush1.msra.mxu0 %v887
      %1182 = vmatprep.subr.mxu0 0.0
      %1183 = vmatpush1.msra.mxu0 %v890
      %1184 = vmatprep.subr.mxu0 0.0
      %1185 = vmatpush1.msra.mxu0 %v893
      %1186 = vmatprep.subr.mxu0 0.0
      %1187 = vmatpush1.msra.mxu0 %v896
      %1188 = vmatprep.subr.mxu0 0.0
      %1189 = vmatpush1.msra.mxu0 %v899
      %1190 = vmatprep.subr.mxu0 0.0
      %1191 = vmatpush1.msra.mxu0 %v902
      %1192 = vmatprep.subr.mxu0 0.0
      %1193 = vmatpush1.msra.mxu0 %v905
      %1194 = vmatprep.subr.mxu0 0.0
      %1195 = vmatpush1.msra.mxu0 %v908
      %1196 = vmatprep.subr.mxu0 0.0
      %1197 = vmatpush1.msra.mxu0 %v911
      %1198 = vmatprep.subr.mxu0 0.0
      %1199 = vmatpush1.msra.mxu0 %v914
      %1200 = vmatprep.subr.mxu0 0.0
      %1201 = vmatpush1.msra.mxu0 %v917
      %1202 = vmatprep.subr.mxu0 0.0
      %1203 = vmatpush1.msra.mxu0 %v920
      %1204 = vmatprep.subr.mxu0 0.0
      %1205 = vmatpush1.msra.mxu0 %v923
      %1206 = vmatprep.subr.mxu0 0.0
      %1207 = vmatpush1.msra.mxu0 %v926
      %1208 = vmatprep.subr.mxu0 0.0
      %1209 = vmatpush1.msra.mxu0 %v929
      %1210 = vmatprep.subr.mxu0 0.0
      %1211 = vmatpush1.msra.mxu0 %v932
      %1212 = vmatprep.subr.mxu0 0.0
      %1213 = vmatpush1.msra.mxu0 %v935
      %1214 = vmatprep.subr.mxu0 0.0
      %1215 = vmatpush1.msra.mxu0 %v938
      %1216 = vmatprep.subr.mxu0 0.0
      %1217 = vmatpush1.msra.mxu0 %v941
      %1218 = vmatprep.mubr.f32.mxu0 %v749
      %1219 = vmatmul.mubr.f32.gmra.mrb[0].mxu0 %v748
      %v1220 = vpop.f32.mrb[0].mxu0
      %v1221 = vadd.f32 %v1151, %v1220
      %v1222 = vpop.f32.mrb[0].mxu0
      %1223 = vdwg.mxu0
      %v1224 = vld [vmem:[%s3 + $0x18] sm:$0xff]
      %v1225 = vld [vmem:[%s3 + $0x20] sm:$0xff]
      %v1226 = vld [vmem:[%s3 + $0x28] sm:$0xff]
      %v1227 = vld [vmem:[%s3 + $0x48] sm:$0xff]
      %v1228 = vld [vmem:[%s3 + $0x50] sm:$0xff]
      %v1229 = vld [vmem:[%s3 + $0x58] sm:$0xff]
      %v1230 = vld [vmem:[%s3 + $0x78] sm:$0xff]
      %v1231 = vld [vmem:[%s3 + $0x80] sm:$0xff]
      %v1232 = vld [vmem:[%s3 + $0x88] sm:$0xff]
      %v1233 = vld [vmem:[%s3 + $0xa8] sm:$0xff]
      %v1234 = vld [vmem:[%s3 + $0xb0] sm:$0xff]
      %v1235 = vld [vmem:[%s3 + $0xb8] sm:$0xff]
      %v1236 = vld [vmem:[%s3 + $0xd8] sm:$0xff]
      %v1237 = vld [vmem:[%s3 + $0xe0] sm:$0xff]
      %v1238 = vld [vmem:[%s3 + $0xe8] sm:$0xff]
      %v1239 = vld [vmem:[%s3 + $0x108] sm:$0xff]
      %v1240 = vld [vmem:[%s3 + $0x110] sm:$0xff]
      %v1241 = vld [vmem:[%s3 + $0x118] sm:$0xff]
      %v1242 = vld [vmem:[%s3 + $0x138] sm:$0xff]
      %v1243 = vld [vmem:[%s3 + $0x140] sm:$0xff]
      %v1244 = vld [vmem:[%s3 + $0x148] sm:$0xff]
      %v1245 = vld [vmem:[%s3 + $0x168] sm:$0xff]
      %v1246 = vld [vmem:[%s3 + $0x170] sm:$0xff]
      %v1247 = vld [vmem:[%s3 + $0x178] sm:$0xff]
      %v1248 = vld [vmem:[%s3 + $0x198] sm:$0xff]
      %v1249 = vld [vmem:[%s3 + $0x1a0] sm:$0xff]
      %v1250 = vld [vmem:[%s3 + $0x1a8] sm:$0xff]
      %v1251 = vld [vmem:[%s3 + $0x1c8] sm:$0xff]
      %v1252 = vld [vmem:[%s3 + $0x1d0] sm:$0xff]
      %v1253 = vld [vmem:[%s3 + $0x1d8] sm:$0xff]
      %v1254 = vld [vmem:[%s3 + $0x1f8] sm:$0xff]
      %v1255 = vld [vmem:[%s3 + $0x200] sm:$0xff]
      %v1256 = vld [vmem:[%s3 + $0x208] sm:$0xff]
      %v1257 = vld [vmem:[%s3 + $0x228] sm:$0xff]
      %v1258 = vld [vmem:[%s3 + $0x230] sm:$0xff]
      %v1259 = vld [vmem:[%s3 + $0x238] sm:$0xff]
      %v1260 = vld [vmem:[%s3 + $0x258] sm:$0xff]
      %v1261 = vld [vmem:[%s3 + $0x260] sm:$0xff]
      %v1262 = vld [vmem:[%s3 + $0x268] sm:$0xff]
      %v1263 = vld [vmem:[%s3 + $0x288] sm:$0xff]
      %v1264 = vld [vmem:[%s3 + $0x290] sm:$0xff]
      %v1265 = vld [vmem:[%s3 + $0x298] sm:$0xff]
      %v1266 = vld [vmem:[%s3 + $0x2b8] sm:$0xff]
      %v1267 = vld [vmem:[%s3 + $0x2c0] sm:$0xff]
      %v1268 = vld [vmem:[%s3 + $0x2c8] sm:$0xff]
      %v1269 = vld [vmem:[%s3 + $0x2e8] sm:$0xff]
      %v1270 = vld [vmem:[%s3 + $0x2f0] sm:$0xff]
      %v1271 = vld [vmem:[%s3 + $0x2f8] sm:$0xff]
      %v1272 = vld [vmem:[%s3 + $0x318] sm:$0xff]
      %v1273 = vld [vmem:[%s3 + $0x320] sm:$0xff]
      %v1274 = vld [vmem:[%s3 + $0x328] sm:$0xff]
      %v1275 = vld [vmem:[%s3 + $0x348] sm:$0xff]
      %v1276 = vld [vmem:[%s3 + $0x350] sm:$0xff]
      %v1277 = vld [vmem:[%s3 + $0x358] sm:$0xff]
      %v1278 = vld [vmem:[%s3 + $0x378] sm:$0xff]
      %v1279 = vld [vmem:[%s3 + $0x380] sm:$0xff]
      %v1280 = vld [vmem:[%s3 + $0x388] sm:$0xff]
      %v1281 = vld [vmem:[%s3 + $0x3a8] sm:$0xff]
      %v1282 = vld [vmem:[%s3 + $0x3b0] sm:$0xff]
      %v1283 = vld [vmem:[%s3 + $0x3b8] sm:$0xff]
      %v1284 = vld [vmem:[%s3 + $0x3d8] sm:$0xff]
      %v1285 = vld [vmem:[%s3 + $0x3e0] sm:$0xff]
      %v1286 = vld [vmem:[%s3 + $0x3e8] sm:$0xff]
      %v1287 = vld [vmem:[%s3 + $0x408] sm:$0xff]
      %v1288 = vld [vmem:[%s3 + $0x410] sm:$0xff]
      %v1289 = vld [vmem:[%s3 + $0x418] sm:$0xff]
      %v1290 = vld [vmem:[%s3 + $0x438] sm:$0xff]
      %v1291 = vld [vmem:[%s3 + $0x440] sm:$0xff]
      %v1292 = vld [vmem:[%s3 + $0x448] sm:$0xff]
      %v1293 = vld [vmem:[%s3 + $0x468] sm:$0xff]
      %v1294 = vld [vmem:[%s3 + $0x470] sm:$0xff]
      %v1295 = vld [vmem:[%s3 + $0x478] sm:$0xff]
      %v1296 = vld [vmem:[%s3 + $0x498] sm:$0xff]
      %v1297 = vld [vmem:[%s3 + $0x4a0] sm:$0xff]
      %v1298 = vld [vmem:[%s3 + $0x4a8] sm:$0xff]
      %v1299 = vld [vmem:[%s3 + $0x4c8] sm:$0xff]
      %v1300 = vld [vmem:[%s3 + $0x4d0] sm:$0xff]
      %v1301 = vld [vmem:[%s3 + $0x4d8] sm:$0xff]
      %v1302 = vld [vmem:[%s3 + $0x4f8] sm:$0xff]
      %v1303 = vld [vmem:[%s3 + $0x500] sm:$0xff]
      %v1304 = vld [vmem:[%s3 + $0x508] sm:$0xff]
      %v1305 = vld [vmem:[%s3 + $0x528] sm:$0xff]
      %v1306 = vld [vmem:[%s3 + $0x530] sm:$0xff]
      %v1307 = vld [vmem:[%s3 + $0x538] sm:$0xff]
      %v1308 = vld [vmem:[%s3 + $0x558] sm:$0xff]
      %v1309 = vld [vmem:[%s3 + $0x560] sm:$0xff]
      %v1310 = vld [vmem:[%s3 + $0x568] sm:$0xff]
      %v1311 = vld [vmem:[%s3 + $0x588] sm:$0xff]
      %v1312 = vld [vmem:[%s3 + $0x590] sm:$0xff]
      %v1313 = vld [vmem:[%s3 + $0x598] sm:$0xff]
      %v1314 = vld [vmem:[%s3 + $0x5b8] sm:$0xff]
      %v1315 = vld [vmem:[%s3 + $0x5c0] sm:$0xff]
      %v1316 = vld [vmem:[%s3 + $0x5c8] sm:$0xff]
      %v1317 = vld [vmem:[%s3 + $0x5e8] sm:$0xff]
      %v1318 = vld [vmem:[%s3 + $0x5f0] sm:$0xff]
      %v1319 = vld [vmem:[%s3 + $0x5f8] sm:$0xff]
      %v1320 = vld [vmem:[%s3 + $0x618] sm:$0xff]
      %v1321 = vld [vmem:[%s3 + $0x620] sm:$0xff]
      %v1322 = vld [vmem:[%s3 + $0x628] sm:$0xff]
      %v1323 = vld [vmem:[%s3 + $0x648] sm:$0xff]
      %v1324 = vld [vmem:[%s3 + $0x650] sm:$0xff]
      %v1325 = vld [vmem:[%s3 + $0x658] sm:$0xff]
      %v1326 = vld [vmem:[%s3 + $0x678] sm:$0xff]
      %v1327 = vld [vmem:[%s3 + $0x680] sm:$0xff]
      %v1328 = vld [vmem:[%s3 + $0x688] sm:$0xff]
      %v1329 = vld [vmem:[%s3 + $0x6a8] sm:$0xff]
      %v1330 = vld [vmem:[%s3 + $0x6b0] sm:$0xff]
      %v1331 = vld [vmem:[%s3 + $0x6b8] sm:$0xff]
      %v1332 = vld [vmem:[%s3 + $0x6d8] sm:$0xff]
      %v1333 = vld [vmem:[%s3 + $0x6e0] sm:$0xff]
      %v1334 = vld [vmem:[%s3 + $0x6e8] sm:$0xff]
      %v1335 = vld [vmem:[%s3 + $0x708] sm:$0xff]
      %v1336 = vld [vmem:[%s3 + $0x710] sm:$0xff]
      %v1337 = vld [vmem:[%s3 + $0x718] sm:$0xff]
      %v1338 = vld [vmem:[%s3 + $0x738] sm:$0xff]
      %v1339 = vld [vmem:[%s3 + $0x740] sm:$0xff]
      %v1340 = vld [vmem:[%s3 + $0x748] sm:$0xff]
      %v1341 = vld [vmem:[%s3 + $0x768] sm:$0xff]
      %v1342 = vld [vmem:[%s3 + $0x770] sm:$0xff]
      %v1343 = vld [vmem:[%s3 + $0x778] sm:$0xff]
      %v1344 = vld [vmem:[%s3 + $0x798] sm:$0xff]
      %v1345 = vld [vmem:[%s3 + $0x7a0] sm:$0xff]
      %v1346 = vld [vmem:[%s3 + $0x7a8] sm:$0xff]
      %v1347 = vld [vmem:[%s3 + $0x7c8] sm:$0xff]
      %v1348 = vld [vmem:[%s3 + $0x7d0] sm:$0xff]
      %v1349 = vld [vmem:[%s3 + $0x7d8] sm:$0xff]
      %v1350 = vld [vmem:[%s3 + $0x7f8] sm:$0xff]
      %v1351 = vld [vmem:[%s3 + $0x800] sm:$0xff]
      %v1352 = vld [vmem:[%s3 + $0x808] sm:$0xff]
      %v1353 = vld [vmem:[%s3 + $0x828] sm:$0xff]
      %v1354 = vld [vmem:[%s3 + $0x830] sm:$0xff]
      %v1355 = vld [vmem:[%s3 + $0x838] sm:$0xff]
      %v1356 = vld [vmem:[%s3 + $0x858] sm:$0xff]
      %v1357 = vld [vmem:[%s3 + $0x860] sm:$0xff]
      %v1358 = vld [vmem:[%s3 + $0x868] sm:$0xff]
      %v1359 = vld [vmem:[%s3 + $0x888] sm:$0xff]
      %v1360 = vld [vmem:[%s3 + $0x890] sm:$0xff]
      %v1361 = vld [vmem:[%s3 + $0x898] sm:$0xff]
      %v1362 = vld [vmem:[%s3 + $0x8b8] sm:$0xff]
      %v1363 = vld [vmem:[%s3 + $0x8c0] sm:$0xff]
      %v1364 = vld [vmem:[%s3 + $0x8c8] sm:$0xff]
      %v1365 = vld [vmem:[%s3 + $0x8e8] sm:$0xff]
      %v1366 = vld [vmem:[%s3 + $0x8f0] sm:$0xff]
      %v1367 = vld [vmem:[%s3 + $0x8f8] sm:$0xff]
      %v1368 = vld [vmem:[%s3 + $0x918] sm:$0xff]
      %v1369 = vld [vmem:[%s3 + $0x920] sm:$0xff]
      %v1370 = vld [vmem:[%s3 + $0x928] sm:$0xff]
      %v1371 = vld [vmem:[%s3 + $0x948] sm:$0xff]
      %v1372 = vld [vmem:[%s3 + $0x950] sm:$0xff]
      %v1373 = vld [vmem:[%s3 + $0x958] sm:$0xff]
      %v1374 = vld [vmem:[%s3 + $0x978] sm:$0xff]
      %v1375 = vld [vmem:[%s3 + $0x980] sm:$0xff]
      %v1376 = vld [vmem:[%s3 + $0x988] sm:$0xff]
      %v1377 = vld [vmem:[%s3 + $0x9a8] sm:$0xff]
      %v1378 = vld [vmem:[%s3 + $0x9b0] sm:$0xff]
      %v1379 = vld [vmem:[%s3 + $0x9b8] sm:$0xff]
      %v1380 = vld [vmem:[%s3 + $0x9d8] sm:$0xff]
      %v1381 = vld [vmem:[%s3 + $0x9e0] sm:$0xff]
      %v1382 = vld [vmem:[%s3 + $0x9e8] sm:$0xff]
      %v1383 = vld [vmem:[%s3 + $0xa08] sm:$0xff]
      %v1384 = vld [vmem:[%s3 + $0xa10] sm:$0xff]
      %v1385 = vld [vmem:[%s3 + $0xa18] sm:$0xff]
      %v1386 = vld [vmem:[%s3 + $0xa38] sm:$0xff]
      %v1387 = vld [vmem:[%s3 + $0xa40] sm:$0xff]
      %v1388 = vld [vmem:[%s3 + $0xa48] sm:$0xff]
      %v1389 = vld [vmem:[%s3 + $0xa68] sm:$0xff]
      %v1390 = vld [vmem:[%s3 + $0xa70] sm:$0xff]
      %v1391 = vld [vmem:[%s3 + $0xa78] sm:$0xff]
      %v1392 = vld [vmem:[%s3 + $0xa98] sm:$0xff]
      %v1393 = vld [vmem:[%s3 + $0xaa0] sm:$0xff]
      %v1394 = vld [vmem:[%s3 + $0xaa8] sm:$0xff]
      %v1395 = vld [vmem:[%s3 + $0xac8] sm:$0xff]
      %v1396 = vld [vmem:[%s3 + $0xad0] sm:$0xff]
      %v1397 = vld [vmem:[%s3 + $0xad8] sm:$0xff]
      %v1398 = vld [vmem:[%s3 + $0xaf8] sm:$0xff]
      %v1399 = vld [vmem:[%s3 + $0xb00] sm:$0xff]
      %v1400 = vld [vmem:[%s3 + $0xb08] sm:$0xff]
      %v1401 = vld [vmem:[%s3 + $0xb28] sm:$0xff]
      %v1402 = vld [vmem:[%s3 + $0xb30] sm:$0xff]
      %v1403 = vld [vmem:[%s3 + $0xb38] sm:$0xff]
      %v1404 = vld [vmem:[%s3 + $0xb58] sm:$0xff]
      %v1405 = vld [vmem:[%s3 + $0xb60] sm:$0xff]
      %v1406 = vld [vmem:[%s3 + $0xb68] sm:$0xff]
      %v1407 = vld [vmem:[%s3 + $0xb88] sm:$0xff]
      %v1408 = vld [vmem:[%s3 + $0xb90] sm:$0xff]
      %v1409 = vld [vmem:[%s3 + $0xb98] sm:$0xff]
      %v1410 = vld [vmem:[%s3 + $0xbb8] sm:$0xff]
      %v1411 = vld [vmem:[%s3 + $0xbc0] sm:$0xff]
      %v1412 = vld [vmem:[%s3 + $0xbc8] sm:$0xff]
      %v1413 = vld [vmem:[%s3 + $0xbe8] sm:$0xff]
      %v1414 = vld [vmem:[%s3 + $0xbf0] sm:$0xff]
      %v1415 = vld [vmem:[%s3 + $0xbf8] sm:$0xff]
      %1416 = vmatprep.subr.mxu0 %v1225
      %1417 = vmatpush1.msra.mxu0 %v1224
      %1418 = vmatprep.subr.mxu0 %v1228
      %1419 = vmatpush1.msra.mxu0 %v1227
      %1420 = vmatprep.subr.mxu0 %v1231
      %1421 = vmatpush1.msra.mxu0 %v1230
      %1422 = vmatprep.subr.mxu0 %v1234
      %1423 = vmatpush1.msra.mxu0 %v1233
      %1424 = vmatprep.subr.mxu0 %v1237
      %1425 = vmatpush1.msra.mxu0 %v1236
      %1426 = vmatprep.subr.mxu0 %v1240
      %1427 = vmatpush1.msra.mxu0 %v1239
      %1428 = vmatprep.subr.mxu0 %v1243
      %1429 = vmatpush1.msra.mxu0 %v1242
      %1430 = vmatprep.subr.mxu0 %v1246
      %1431 = vmatpush1.msra.mxu0 %v1245
      %1432 = vmatprep.subr.mxu0 %v1249
      %1433 = vmatpush1.msra.mxu0 %v1248
      %1434 = vmatprep.subr.mxu0 %v1252
      %1435 = vmatpush1.msra.mxu0 %v1251
      %1436 = vmatprep.subr.mxu0 %v1255
      %1437 = vmatpush1.msra.mxu0 %v1254
      %1438 = vmatprep.subr.mxu0 %v1258
      %1439 = vmatpush1.msra.mxu0 %v1257
      %1440 = vmatprep.subr.mxu0 %v1261
      %1441 = vmatpush1.msra.mxu0 %v1260
      %1442 = vmatprep.subr.mxu0 %v1264
      %1443 = vmatpush1.msra.mxu0 %v1263
      %1444 = vmatprep.subr.mxu0 %v1267
      %1445 = vmatpush1.msra.mxu0 %v1266
      %1446 = vmatprep.subr.mxu0 %v1270
      %1447 = vmatpush1.msra.mxu0 %v1269
      %1448 = vmatprep.subr.mxu0 %v1273
      %1449 = vmatpush1.msra.mxu0 %v1272
      %1450 = vmatprep.subr.mxu0 %v1276
      %1451 = vmatpush1.msra.mxu0 %v1275
      %1452 = vmatprep.subr.mxu0 %v1279
      %1453 = vmatpush1.msra.mxu0 %v1278
      %1454 = vmatprep.subr.mxu0 %v1282
      %1455 = vmatpush1.msra.mxu0 %v1281
      %1456 = vmatprep.subr.mxu0 %v1285
      %1457 = vmatpush1.msra.mxu0 %v1284
      %1458 = vmatprep.subr.mxu0 %v1288
      %1459 = vmatpush1.msra.mxu0 %v1287
      %1460 = vmatprep.subr.mxu0 %v1291
      %1461 = vmatpush1.msra.mxu0 %v1290
      %1462 = vmatprep.subr.mxu0 %v1294
      %1463 = vmatpush1.msra.mxu0 %v1293
      %1464 = vmatprep.subr.mxu0 %v1297
      %1465 = vmatpush1.msra.mxu0 %v1296
      %1466 = vmatprep.subr.mxu0 %v1300
      %1467 = vmatpush1.msra.mxu0 %v1299
      %1468 = vmatprep.subr.mxu0 %v1303
      %1469 = vmatpush1.msra.mxu0 %v1302
      %1470 = vmatprep.subr.mxu0 %v1306
      %1471 = vmatpush1.msra.mxu0 %v1305
      %1472 = vmatprep.subr.mxu0 %v1309
      %1473 = vmatpush1.msra.mxu0 %v1308
      %1474 = vmatprep.subr.mxu0 %v1312
      %1475 = vmatpush1.msra.mxu0 %v1311
      %1476 = vmatprep.subr.mxu0 %v1315
      %1477 = vmatpush1.msra.mxu0 %v1314
      %1478 = vmatprep.subr.mxu0 %v1318
      %1479 = vmatpush1.msra.mxu0 %v1317
      %1480 = vmatprep.mubr.f32.mxu0 %v747
      %1481 = vmatmul.mubr.f32.gmra.mrb[0].mxu0 %v746
      %v1482 = vpop.f32.mrb[0].mxu0
      %v1483 = vadd.f32 0.0, %v1482
      %v1484 = vpop.f32.mrb[0].mxu0
      %v1485 = vadd.f32 0.0, %v1484
      %1486 = vdwg.mxu0
      %1487 = vmatprep.subr.mxu0 %v1321
      %1488 = vmatpush1.msra.mxu0 %v1320
      %1489 = vmatprep.subr.mxu0 %v1324
      %1490 = vmatpush1.msra.mxu0 %v1323
      %1491 = vmatprep.subr.mxu0 %v1327
      %1492 = vmatpush1.msra.mxu0 %v1326
      %1493 = vmatprep.subr.mxu0 %v1330
      %1494 = vmatpush1.msra.mxu0 %v1329
      %1495 = vmatprep.subr.mxu0 %v1333
      %1496 = vmatpush1.msra.mxu0 %v1332
      %1497 = vmatprep.subr.mxu0 %v1336
      %1498 = vmatpush1.msra.mxu0 %v1335
      %1499 = vmatprep.subr.mxu0 %v1339
      %1500 = vmatpush1.msra.mxu0 %v1338
      %1501 = vmatprep.subr.mxu0 %v1342
      %1502 = vmatpush1.msra.mxu0 %v1341
      %1503 = vmatprep.subr.mxu0 %v1345
      %1504 = vmatpush1.msra.mxu0 %v1344
      %1505 = vmatprep.subr.mxu0 %v1348
      %1506 = vmatpush1.msra.mxu0 %v1347
      %1507 = vmatprep.subr.mxu0 %v1351
      %1508 = vmatpush1.msra.mxu0 %v1350
      %1509 = vmatprep.subr.mxu0 %v1354
      %1510 = vmatpush1.msra.mxu0 %v1353
      %1511 = vmatprep.subr.mxu0 %v1357
      %1512 = vmatpush1.msra.mxu0 %v1356
      %1513 = vmatprep.subr.mxu0 %v1360
      %1514 = vmatpush1.msra.mxu0 %v1359
      %1515 = vmatprep.subr.mxu0 %v1363
      %1516 = vmatpush1.msra.mxu0 %v1362
      %1517 = vmatprep.subr.mxu0 %v1366
      %1518 = vmatpush1.msra.mxu0 %v1365
      %1519 = vmatprep.subr.mxu0 %v1369
      %1520 = vmatpush1.msra.mxu0 %v1368
      %1521 = vmatprep.subr.mxu0 %v1372
      %1522 = vmatpush1.msra.mxu0 %v1371
      %1523 = vmatprep.subr.mxu0 %v1375
      %1524 = vmatpush1.msra.mxu0 %v1374
      %1525 = vmatprep.subr.mxu0 %v1378
      %1526 = vmatpush1.msra.mxu0 %v1377
      %1527 = vmatprep.subr.mxu0 %v1381
      %1528 = vmatpush1.msra.mxu0 %v1380
      %1529 = vmatprep.subr.mxu0 %v1384
      %1530 = vmatpush1.msra.mxu0 %v1383
      %1531 = vmatprep.subr.mxu0 %v1387
      %1532 = vmatpush1.msra.mxu0 %v1386
      %1533 = vmatprep.subr.mxu0 %v1390
      %1534 = vmatpush1.msra.mxu0 %v1389
      %1535 = vmatprep.subr.mxu0 %v1393
      %1536 = vmatpush1.msra.mxu0 %v1392
      %1537 = vmatprep.subr.mxu0 %v1396
      %1538 = vmatpush1.msra.mxu0 %v1395
      %1539 = vmatprep.subr.mxu0 %v1399
      %1540 = vmatpush1.msra.mxu0 %v1398
      %1541 = vmatprep.subr.mxu0 %v1402
      %1542 = vmatpush1.msra.mxu0 %v1401
      %1543 = vmatprep.subr.mxu0 %v1405
      %1544 = vmatpush1.msra.mxu0 %v1404
      %1545 = vmatprep.subr.mxu0 %v1408
      %1546 = vmatpush1.msra.mxu0 %v1407
      %1547 = vmatprep.subr.mxu0 %v1411
      %1548 = vmatpush1.msra.mxu0 %v1410
      %1549 = vmatprep.subr.mxu0 %v1414
      %1550 = vmatpush1.msra.mxu0 %v1413
      %1551 = vmatprep.mubr.f32.mxu0 %v749
      %1552 = vmatmul.mubr.f32.gmra.mrb[0].mxu0 %v748
      %v1553 = vpop.f32.mrb[0].mxu0
      %v1554 = vadd.f32 %v1483, %v1553
      %v1555 = vpop.f32.mrb[0].mxu0
      %v1556 = vadd.f32 %v1485, %v1555
      %1557 = vdwg.mxu0
      %1558 = vmatprep.subr.mxu0 0.0
      %1559 = vmatpush1.msra.mxu0 %v1226
      %1560 = vmatprep.subr.mxu0 0.0
      %1561 = vmatpush1.msra.mxu0 %v1229
      %1562 = vmatprep.subr.mxu0 0.0
      %1563 = vmatpush1.msra.mxu0 %v1232
      %1564 = vmatprep.subr.mxu0 0.0
      %1565 = vmatpush1.msra.mxu0 %v1235
      %1566 = vmatprep.subr.mxu0 0.0
      %1567 = vmatpush1.msra.mxu0 %v1238
      %1568 = vmatprep.subr.mxu0 0.0
      %1569 = vmatpush1.msra.mxu0 %v1241
      %1570 = vmatprep.subr.mxu0 0.0
      %1571 = vmatpush1.msra.mxu0 %v1244
      %1572 = vmatprep.subr.mxu0 0.0
      %1573 = vmatpush1.msra.mxu0 %v1247
      %1574 = vmatprep.subr.mxu0 0.0
      %1575 = vmatpush1.msra.mxu0 %v1250
      %1576 = vmatprep.subr.mxu0 0.0
      %1577 = vmatpush1.msra.mxu0 %v1253
      %1578 = vmatprep.subr.mxu0 0.0
      %1579 = vmatpush1.msra.mxu0 %v1256
      %1580 = vmatprep.subr.mxu0 0.0
      %1581 = vmatpush1.msra.mxu0 %v1259
      %1582 = vmatprep.subr.mxu0 0.0
      %1583 = vmatpush1.msra.mxu0 %v1262
      %1584 = vmatprep.subr.mxu0 0.0
      %1585 = vmatpush1.msra.mxu0 %v1265
      %1586 = vmatprep.subr.mxu0 0.0
      %1587 = vmatpush1.msra.mxu0 %v1268
      %1588 = vmatprep.subr.mxu0 0.0
      %1589 = vmatpush1.msra.mxu0 %v1271
      %1590 = vmatprep.subr.mxu0 0.0
      %1591 = vmatpush1.msra.mxu0 %v1274
      %1592 = vmatprep.subr.mxu0 0.0
      %1593 = vmatpush1.msra.mxu0 %v1277
      %1594 = vmatprep.subr.mxu0 0.0
      %1595 = vmatpush1.msra.mxu0 %v1280
      %1596 = vmatprep.subr.mxu0 0.0
      %1597 = vmatpush1.msra.mxu0 %v1283
      %1598 = vmatprep.subr.mxu0 0.0
      %1599 = vmatpush1.msra.mxu0 %v1286
      %1600 = vmatprep.subr.mxu0 0.0
      %1601 = vmatpush1.msra.mxu0 %v1289
      %1602 = vmatprep.subr.mxu0 0.0
      %1603 = vmatpush1.msra.mxu0 %v1292
      %1604 = vmatprep.subr.mxu0 0.0
      %1605 = vmatpush1.msra.mxu0 %v1295
      %1606 = vmatprep.subr.mxu0 0.0
      %1607 = vmatpush1.msra.mxu0 %v1298
      %1608 = vmatprep.subr.mxu0 0.0
      %1609 = vmatpush1.msra.mxu0 %v1301
      %1610 = vmatprep.subr.mxu0 0.0
      %1611 = vmatpush1.msra.mxu0 %v1304
      %1612 = vmatprep.subr.mxu0 0.0
      %1613 = vmatpush1.msra.mxu0 %v1307
      %1614 = vmatprep.subr.mxu0 0.0
      %1615 = vmatpush1.msra.mxu0 %v1310
      %1616 = vmatprep.subr.mxu0 0.0
      %1617 = vmatpush1.msra.mxu0 %v1313
      %1618 = vmatprep.subr.mxu0 0.0
      %1619 = vmatpush1.msra.mxu0 %v1316
      %1620 = vmatprep.subr.mxu0 0.0
      %1621 = vmatpush1.msra.mxu0 %v1319
      %1622 = vmatprep.mubr.f32.mxu0 %v747
      %1623 = vmatmul.mubr.f32.gmra.mrb[0].mxu0 %v746
      %v1624 = vpop.f32.mrb[0].mxu0
      %v1625 = vadd.f32 0.0, %v1624
      %v1626 = vpop.f32.mrb[0].mxu0
      %1627 = vdwg.mxu0
      %1628 = vmatprep.subr.mxu0 0.0
      %1629 = vmatpush1.msra.mxu0 %v1322
      %1630 = vmatprep.subr.mxu0 0.0
      %1631 = vmatpush1.msra.mxu0 %v1325
      %1632 = vmatprep.subr.mxu0 0.0
      %1633 = vmatpush1.msra.mxu0 %v1328
      %1634 = vmatprep.subr.mxu0 0.0
      %1635 = vmatpush1.msra.mxu0 %v1331
      %1636 = vmatprep.subr.mxu0 0.0
      %1637 = vmatpush1.msra.mxu0 %v1334
      %1638 = vmatprep.subr.mxu0 0.0
      %1639 = vmatpush1.msra.mxu0 %v1337
      %1640 = vmatprep.subr.mxu0 0.0
      %1641 = vmatpush1.msra.mxu0 %v1340
      %1642 = vmatprep.subr.mxu0 0.0
      %1643 = vmatpush1.msra.mxu0 %v1343
      %1644 = vmatprep.subr.mxu0 0.0
      %1645 = vmatpush1.msra.mxu0 %v1346
      %1646 = vmatprep.subr.mxu0 0.0
      %1647 = vmatpush1.msra.mxu0 %v1349
      %1648 = vmatprep.subr.mxu0 0.0
      %1649 = vmatpush1.msra.mxu0 %v1352
      %1650 = vmatprep.subr.mxu0 0.0
      %1651 = vmatpush1.msra.mxu0 %v1355
      %1652 = vmatprep.subr.mxu0 0.0
      %1653 = vmatpush1.msra.mxu0 %v1358
      %1654 = vmatprep.subr.mxu0 0.0
      %1655 = vmatpush1.msra.mxu0 %v1361
      %1656 = vmatprep.subr.mxu0 0.0
      %1657 = vmatpush1.msra.mxu0 %v1364
      %1658 = vmatprep.subr.mxu0 0.0
      %1659 = vmatpush1.msra.mxu0 %v1367
      %1660 = vmatprep.subr.mxu0 0.0
      %1661 = vmatpush1.msra.mxu0 %v1370
      %1662 = vmatprep.subr.mxu0 0.0
      %1663 = vmatpush1.msra.mxu0 %v1373
      %1664 = vmatprep.subr.mxu0 0.0
      %1665 = vmatpush1.msra.mxu0 %v1376
      %1666 = vmatprep.subr.mxu0 0.0
      %1667 = vmatpush1.msra.mxu0 %v1379
      %1668 = vmatprep.subr.mxu0 0.0
      %1669 = vmatpush1.msra.mxu0 %v1382
      %1670 = vmatprep.subr.mxu0 0.0
      %1671 = vmatpush1.msra.mxu0 %v1385
      %1672 = vmatprep.subr.mxu0 0.0
      %1673 = vmatpush1.msra.mxu0 %v1388
      %1674 = vmatprep.subr.mxu0 0.0
      %1675 = vmatpush1.msra.mxu0 %v1391
      %1676 = vmatprep.subr.mxu0 0.0
      %1677 = vmatpush1.msra.mxu0 %v1394
      %1678 = vmatprep.subr.mxu0 0.0
      %1679 = vmatpush1.msra.mxu0 %v1397
      %1680 = vmatprep.subr.mxu0 0.0
      %1681 = vmatpush1.msra.mxu0 %v1400
      %1682 = vmatprep.subr.mxu0 0.0
      %1683 = vmatpush1.msra.mxu0 %v1403
      %1684 = vmatprep.subr.mxu0 0.0
      %1685 = vmatpush1.msra.mxu0 %v1406
      %1686 = vmatprep.subr.mxu0 0.0
      %1687 = vmatpush1.msra.mxu0 %v1409
      %1688 = vmatprep.subr.mxu0 0.0
      %1689 = vmatpush1.msra.mxu0 %v1412
      %1690 = vmatprep.subr.mxu0 0.0
      %1691 = vmatpush1.msra.mxu0 %v1415
      %1692 = vmatprep.mubr.f32.mxu0 %v749
      %1693 = vmatmul.mubr.f32.gmra.mrb[0].mxu0 %v748
      %v1694 = vpop.f32.mrb[0].mxu0
      %v1695 = vadd.f32 %v1625, %v1694
      %v1696 = vpop.f32.mrb[0].mxu0
      %1697 = vdwg.mxu0
      %v1698 = vmul.f32 %v1080, %v1080
      %v1699 = vmul.f32 %v1082, %v1082
      %v1700 = vmul.f32 %v1221, %v1221
      %v1701 = vmul.f32 %v1554, %v1554
      %v1702 = vmul.f32 %v1556, %v1556
      %v1703 = vmul.f32 %v1695, %v1695
      %v1704 = vadd.f32 %v1698, %v1701
      %v1705 = vadd.f32 %v1699, %v1702
      %v1706 = vadd.f32 %v1700, %v1703
      %1707 = vst [vmem:[%s257] sm:$0xff] %v1704
      %1708 = vst [vmem:[%s257 + $0x8] sm:$0xff] %v1705
      %1709 = vst [vmem:[%s257 + $0x10] sm:$0xff] %v1706
      %p1710 = scmp.lt.s32.totalorder %s17, 1
      %s1711 = scalar_select %p1710, %s17, 1
      %s1712 = smul.addr %s1711, 3
      %s1713 = smul.addr %s1712, 8
      %s1714 = scalar_lea.vmem %s4, %s1713
      %p1715 = scmp.lt.s32.totalorder %s17, 1
      %s1716 = scalar_select %p1715, %s17, 1
      %s1717 = smul.addr %s1716, 3
      %s1718 = smul.addr %s1717, 8
      %s1719 = scalar_lea.vmem %s5, %s1718
      // Predicated region
      $region37: #{model_forward.3} parent=35 // pred_check
        %p1720 = pneg %p129
      $region38: #{model_forward.3} parent=35 // pred_check_branch
        %1722 = sbr.rel (%p1720) target = $region40
      $region39: #{model_forward.3} parent=35 // pred_region
        _
      $region40: #{model_forward.3} parent=35 // pred_fallthru
        _
      // Predicated region
      $region41: #{model_forward.3} parent=35 // pred_check
        %p1723 = pneg %p155
      $region42: #{model_forward.3} parent=35 // pred_check_branch
        %1725 = sbr.rel (%p1723) target = $region44
      $region43: #{model_forward.3} parent=35 // pred_region
        _
      $region44: #{model_forward.3} parent=35 // pred_fallthru
        _
    $region36: #{model_forward.3} parent=5 // pred_fallthru
      _
    %p1726 = scmp.le.s32.totalorder 2, %s12
    // Predicated region
    $region45: #{model_forward.3} parent=5 // pred_check
      %p1727 = pneg %p1726
    $region46: #{model_forward.3} parent=5 // pred_check_branch
      %1729 = sbr.rel (%p1727) target = $region48
    $region47: #{model_forward.3} parent=5 // pred_region
      %s1730 = ssub.s32 %s12, 2
      // Predicated region
      $region49: #{model_forward.3} parent=47 // pred_check
        %p1731 = pneg %p135
      $region50: #{model_forward.3} parent=47 // pred_check_branch
        %1733 = sbr.rel (%p1731) target = $region52
      $region51: #{model_forward.3} parent=47 // pred_region
        %p1734 = scmp.lt.s32.totalorder %s18, 1
        %s1735 = scalar_select %p1734, %s18, 1
        %s1736 = smul.addr %s1735, 3
        %s1737 = smul.addr %s1736, 8
        %s1738 = scalar_lea.vmem %s4, %s1737
      $region52: #{model_forward.3} parent=47 // pred_fallthru
        _
      // Predicated region
      $region53: #{model_forward.3} parent=47 // pred_check
        %p1739 = pneg %p161
      $region54: #{model_forward.3} parent=47 // pred_check_branch
        %1741 = sbr.rel (%p1739) target = $region56
      $region55: #{model_forward.3} parent=47 // pred_region
        %p1742 = scmp.lt.s32.totalorder %s18, 1
        %s1743 = scalar_select %p1742, %s18, 1
        %s1744 = smul.addr %s1743, 3
        %s1745 = smul.addr %s1744, 8
        %s1746 = scalar_lea.vmem %s5, %s1745
      $region56: #{model_forward.3} parent=47 // pred_fallthru
        _
    $region48: #{model_forward.3} parent=5 // pred_fallthru
      _
  $region6: #{model_forward.3} parent=0 // loop_footer
    %s16 = sadd.s32 1, %s12
  $region7: #{model_forward.3} parent=0 // loop_footer_branch
    %11 = sbr.rel target = $region3
  $region8: #{model_forward.3} parent=0 // loop_exit
    _

</llo_original>
